<compile_context>
chip_gen: v5e
topology: v5e:2x2
jax: 0.10.0
libtpu: 0.0.40
codegen_flags: <defaults>
</compile_context>

<pallas_src>
import functools

import jax
import jax.numpy as jnp
from jax.experimental import pallas as pl
from jax.experimental.pallas import tpu as pltpu

LANE = 128
VMEM_LIMIT = 32 * 1024 * 1024
BN_EPS = 1e-5


def _round_up(x, m):
    return (x + m - 1) // m * m


# ---------------------------------------------------------------------------
# Kernel 1: 3x3x3 conv (pad=1) + bias + ReLU + BN partial stats.
# The *previous* layer's BN (scale s, shift t) is applied to the input planes
# with a padding mask, so no separate normalize pass is needed.
# Grid = (N, D): each step produces one dense output depth plane (H*W, Co).
# ---------------------------------------------------------------------------
def _conv3x3_kernel(xm_ref, x0_ref, xp_ref, w_ref, b_ref, s_ref, t_ref,
                    y_ref, st_ref, *, D, H, W):
    d = pl.program_id(1)
    Hp, Wp = H + 2, W + 2
    Cp = s_ref.shape[1]
    Co = b_ref.shape[1]

    hh = jax.lax.broadcasted_iota(jnp.int32, (Hp, Wp, 1), 0)
    ww = jax.lax.broadcasted_iota(jnp.int32, (Hp, Wp, 1), 1)
    hw_ok = (hh >= 1) & (hh <= H) & (ww >= 1) & (ww <= W)

    s = s_ref[...].reshape(1, 1, Cp)
    t = t_ref[...].reshape(1, 1, Cp)

    planes = []
    for kd, ref in enumerate((xm_ref, x0_ref, xp_ref)):
        x = ref[...].reshape(Hp, Wp, Cp).astype(jnp.float32)
        d_ok = (d + kd >= 1) & (d + kd <= D)
        # previous BN applied only on valid (non-padding) voxels; pads stay 0.
        planes.append(jnp.where(hw_ok & d_ok, x * s + t, 0.0))

    acc = jnp.zeros((H * W, Co), jnp.float32)
    for kd in range(3):
        for kh in range(3):
            for kw in range(3):
                patch = planes[kd][kh:kh + H, kw:kw + W, :]
                patch = patch.reshape(H * W, Cp).astype(jnp.bfloat16)
                acc = acc + jnp.dot(patch, w_ref[kd, kh, kw],
                                    preferred_element_type=jnp.float32)
    acc = jnp.maximum(acc + b_ref[...], 0.0)           # bias + fused ReLU

    y_ref[...] = acc.reshape(1, 1, H, W, Co).astype(y_ref.dtype)
    st = jnp.concatenate([jnp.sum(acc, axis=0, keepdims=True),
                          jnp.sum(acc * acc, axis=0, keepdims=True)], axis=0)
    st_ref[...] = st.reshape(1, 1, 2, Co)


def conv3x3_relu_stats(x_pad, w5, bias, s_in, t_in, *, D, H, W):
    """x_pad: (N, D+2, H+2, W+2, Cp) bf16.  Returns (y, sum, sumsq) where
    y = ReLU(conv3x3(s_in*x + t_in) + bias) with per-channel BN partial sums."""
    N, Dp, Hp, Wp, Cp = x_pad.shape
    Co = w5.shape[-1]
    kernel = functools.partial(_conv3x3_kernel, D=D, H=H, W=W)

    def xspec(kd):
        return pl.BlockSpec((1, 1, Hp, Wp, Cp),
                            lambda n, d: (n, d + kd, 0, 0, 0))

    y, st = pl.pallas_call(
        kernel,
        out_shape=(jax.ShapeDtypeStruct((N, D, H, W, Co), jnp.bfloat16),
                   jax.ShapeDtypeStruct((N, D, 2, Co), jnp.float32)),
        grid_spec=pltpu.PrefetchScalarGridSpec(
            num_scalar_prefetch=0,
            grid=(N, D),
            in_specs=[
                xspec(0), xspec(1), xspec(2),
                pl.BlockSpec((3, 3, 3, Cp, Co), lambda n, d: (0, 0, 0, 0, 0)),
                pl.BlockSpec((1, Co), lambda n, d: (0, 0)),
                pl.BlockSpec((1, Cp), lambda n, d: (0, 0)),
                pl.BlockSpec((1, Cp), lambda n, d: (0, 0)),
            ],
            out_specs=[
                pl.BlockSpec((1, 1, H, W, Co), lambda n, d: (n, d, 0, 0, 0)),
                pl.BlockSpec((1, 1, 2, Co), lambda n, d: (n, d, 0, 0)),
            ],
        ),
        compiler_params=pltpu.CompilerParams(
            dimension_semantics=("parallel", "parallel"),
            vmem_limit_bytes=VMEM_LIMIT),
    )(x_pad, x_pad, x_pad, w5, bias, s_in, t_in)
    return (y,
            jnp.sum(st[:, :, 0, :], axis=(0, 1)),
            jnp.sum(st[:, :, 1, :], axis=(0, 1)))


# ---------------------------------------------------------------------------
# Kernel 2: 1x1x1 shortcut conv (no bias) -> BN partial stats ONLY.
# The conv output itself is never written to HBM; it is recomputed (cheap MXU
# matmul) inside the final fused kernel.
# ---------------------------------------------------------------------------
def _conv1x1_stats_kernel(x_ref, w_ref, st_ref):
    hw = x_ref.shape[1]
    x = x_ref[...].reshape(hw, -1)
    acc = jnp.dot(x, w_ref[...], preferred_element_type=jnp.float32)
    st = jnp.concatenate([jnp.sum(acc, axis=0, keepdims=True),
                          jnp.sum(acc * acc, axis=0, keepdims=True)], axis=0)
    st_ref[...] = st.reshape(1, 2, -1)


def conv1x1_stats_only(x3, w):
    """x3: (N*D, H*W, Cip) bf16, w: (Cip, Cop) bf16 -> per-channel (sum, sumsq)."""
    ND, HW, Cip = x3.shape
    Cop = w.shape[-1]
    st = pl.pallas_call(
        _conv1x1_stats_kernel,
        out_shape=jax.ShapeDtypeStruct((ND, 2, Cop), jnp.float32),
        grid_spec=pltpu.PrefetchScalarGridSpec(
            num_scalar_prefetch=0,
            grid=(ND,),
            in_specs=[pl.BlockSpec((1, HW, Cip), lambda i: (i, 0, 0)),
                      pl.BlockSpec((Cip, Cop), lambda i: (0, 0))],
            out_specs=pl.BlockSpec((1, 2, Cop), lambda i: (i, 0, 0)),
        ),
        compiler_params=pltpu.CompilerParams(
            dimension_semantics=("parallel",), vmem_limit_bytes=VMEM_LIMIT),
    )(x3, w)
    return jnp.sum(st[:, 0, :], axis=0), jnp.sum(st[:, 1, :], axis=0)


# ---------------------------------------------------------------------------
# Kernel 3a: BN2(y2) + BN_s(conv1x1(x)) + add + final ReLU, one fused pass.
# ---------------------------------------------------------------------------
def _shortcut_bn_add_relu_kernel(y_ref, x_ref, w_ref, sa_ref, ta_ref,
                                 sr_ref, tr_ref, o_ref):
    hw = y_ref.shape[1]
    a = y_ref[...].reshape(hw, -1).astype(jnp.float32)
    x = x_ref[...].reshape(hw, -1)
    r = jnp.dot(x, w_ref[...], preferred_element_type=jnp.float32)
    out = a * sa_ref[...] + ta_ref[...] + r * sr_ref[...] + tr_ref[...]
    o_ref[...] = jnp.maximum(out, 0.0).reshape(o_ref.shape).astype(o_ref.dtype)


def shortcut_bn_add_relu(y3, x3, w, sa, ta, sr, tr):
    ND, HW, Cop = y3.shape
    Cip = x3.shape[-1]
    sc = pl.BlockSpec((1, Cop), lambda i: (0, 0))
    return pl.pallas_call(
        _shortcut_bn_add_relu_kernel,
        out_shape=jax.ShapeDtypeStruct((ND, HW, Cop), jnp.float32),
        grid_spec=pltpu.PrefetchScalarGridSpec(
            num_scalar_prefetch=0,
            grid=(ND,),
            in_specs=[pl.BlockSpec((1, HW, Cop), lambda i: (i, 0, 0)),
                      pl.BlockSpec((1, HW, Cip), lambda i: (i, 0, 0)),
                      pl.BlockSpec((Cip, Cop), lambda i: (0, 0)),
                      sc, sc, sc, sc],
            out_specs=pl.BlockSpec((1, HW, Cop), lambda i: (i, 0, 0)),
        ),
        compiler_params=pltpu.CompilerParams(
            dimension_semantics=("parallel",), vmem_limit_bytes=VMEM_LIMIT),
    )(y3, x3, w, sa, ta, sr, tr)


# ---------------------------------------------------------------------------
# Kernel 3b: BN2(y2) + identity residual + add + ReLU (cin == cout case).
# ---------------------------------------------------------------------------
def _bn_add_relu_kernel(y_ref, x_ref, sa_ref, ta_ref, o_ref):
    hw = y_ref.shape[1]
    a = y_ref[...].reshape(hw, -1).astype(jnp.float32)
    r = x_ref[...].reshape(hw, -1).astype(jnp.float32)
    out = a * sa_ref[...] + ta_ref[...] + r
    o_ref[...] = jnp.maximum(out, 0.0).reshape(o_ref.shape).astype(o_ref.dtype)


def bn_add_relu_identity(y3, x3, sa, ta):
    ND, HW, Cop = y3.shape
    sc = pl.BlockSpec((1, Cop), lambda i: (0, 0))
    return pl.pallas_call(
        _bn_add_relu_kernel,
        out_shape=jax.ShapeDtypeStruct((ND, HW, Cop), jnp.float32),
        grid_spec=pltpu.PrefetchScalarGridSpec(
            num_scalar_prefetch=0,
            grid=(ND,),
            in_specs=[pl.BlockSpec((1, HW, Cop), lambda i: (i, 0, 0)),
                      pl.BlockSpec((1, HW, Cop), lambda i: (i, 0, 0)),
                      sc, sc],
            out_specs=pl.BlockSpec((1, HW, Cop), lambda i: (i, 0, 0)),
        ),
        compiler_params=pltpu.CompilerParams(
            dimension_semantics=("parallel",), vmem_limit_bytes=VMEM_LIMIT),
    )(y3, x3, sa, ta)


# ---------------------------------------------------------------------------
# Host-side glue (layout packing, BN scale/shift from batch stats)
# ---------------------------------------------------------------------------
def _bn_scale_shift(sums, sumsq, count, gamma, beta, eps=BN_EPS):
    mean = sums / count
    var = jnp.maximum(sumsq / count - mean * mean, 0.0)   # biased var (torch train)
    s = gamma * jax.lax.rsqrt(var + eps)
    return (s.reshape(1, -1).astype(jnp.float32),
            (beta - mean * s).reshape(1, -1).astype(jnp.float32))


def _pack_x_ncdhw(x, Cp):
    N, C, D, H, W = x.shape
    x = jnp.transpose(x, (0, 2, 3, 4, 1))
    x = jnp.pad(x, ((0, 0),) * 4 + ((0, Cp - C),))
    return x.astype(jnp.bfloat16)


def _pad_spatial(x):
    return jnp.pad(x, ((0, 0), (1, 1), (1, 1), (1, 1), (0, 0)))


def _pack_w3(w, Cip, Cop):                         # (Co,Ci,3,3,3) -> (3,3,3,Cip,Cop)
    Co, Ci = w.shape[0], w.shape[1]
    w = jnp.transpose(w, (2, 3, 4, 1, 0))
    w = jnp.pad(w, ((0, 0),) * 3 + ((0, Cip - Ci), (0, Cop - Co)))
    return w.astype(jnp.bfloat16)


def _pack_w1(w, Cip, Cop):                         # (Co,Ci,1,1,1) -> (Cip,Cop)
    Co, Ci = w.shape[0], w.shape[1]
    w = jnp.transpose(w.reshape(Co, Ci), (1, 0))
    w = jnp.pad(w, ((0, Cip - Ci), (0, Cop - Co)))
    return w.astype(jnp.bfloat16)


def _pad_vec(v, Cp, value=0.0):
    return jnp.pad(v, (0, Cp - v.shape[0]),
                   constant_values=value).astype(jnp.float32)


def residual_block_forward(packed, x_ncdhw, *, cin, cout):
    """ResidualBlock(cin, cout, block=DualConv(cin, cout)).forward — NCDHW in/out."""
    N, _, D, H, W = x_ncdhw.shape
    Cip, Cop = _round_up(cin, LANE), _round_up(cout, LANE)
    count = float(N * D * H * W)

    xpk = _pack_x_ncdhw(x_ncdhw, Cip)                       # (N,D,H,W,Cip) bf16
    one_i = jnp.ones((1, Cip), jnp.float32)
    zero_i = jnp.zeros((1, Cip), jnp.float32)

    # ---- block: Conv -> ReLU -> BN -> Conv -> ReLU -> BN --------------------
    y1, s1_sum, s1_sq = conv3x3_relu_stats(
        _pad_spatial(xpk), packed["w1"], packed["b1"], one_i, zero_i,
        D=D, H=H, W=W)
    s1, t1 = _bn_scale_shift(s1_sum, s1_sq, count, packed["g1"], packed["be1"])

    y2, s2_sum, s2_sq = conv3x3_relu_stats(                 # BN1 fused into load
        _pad_spatial(y1), packed["w2"], packed["b2"], s1, t1,
        D=D, H=H, W=W)
    s2, t2 = _bn_scale_shift(s2_sum, s2_sq, count, packed["g2"], packed["be2"])

    # ---- residual / shortcut + BN2 + add + ReLU ------------------------------
    ND, HW = N * D, H * W
    x3 = xpk.reshape(ND, HW, Cip)                           # free reshapes
    y3 = y2.reshape(ND, HW, Cop)

    if cin != cout:
        ss_sum, ss_sq = conv1x1_stats_only(x3, packed["ws"])
        sr, tr = _bn_scale_shift(ss_sum, ss_sq, count,
                                 packed["gs"], packed["bes"])
        out3 = shortcut_bn_add_relu(y3, x3, packed["ws"], s2, t2, sr, tr)
    else:
        out3 = bn_add_relu_identity(y3, x3, s2, t2)

    out = out3.reshape(N, D, H, W, Cop)[..., :cout]
    return jnp.transpose(out, (0, 4, 1, 2, 3))


# ---------------------------------------------------------------------------
# Parameters (torch-default init) + pure-JAX f32 reference
# ---------------------------------------------------------------------------
def init_params(key, cin, cout):
    ks = jax.random.split(key, 6)

    def u(k, shape, fan_in):
        bound = 1.0 / (fan_in ** 0.5)
        return jax.random.uniform(k, shape, jnp.float32, -bound, bound)

    p = dict(
        w1=u(ks[0], (cout, cin, 3, 3, 3), cin * 27),
        b1=u(ks[1], (cout,), cin * 27),
        w2=u(ks[2], (cout, cout, 3, 3, 3), cout * 27),
        b2=u(ks[3], (cout,), cout * 27),
        g1=jnp.ones((cout,), jnp.float32), be1=jnp.zeros((cout,), jnp.float32),
        g2=jnp.ones((cout,), jnp.float32), be2=jnp.zeros((cout,), jnp.float32),
    )
    if cin != cout:
        p["ws"] = u(ks[4], (cout, cin, 1, 1, 1), cin)       # shortcut, bias=False
        p["gs"] = jnp.ones((cout,), jnp.float32)
        p["bes"] = jnp.zeros((cout,), jnp.float32)
    return p


def pack_params(p, cin, cout):
    Cip, Cop = _round_up(cin, LANE), _round_up(cout, LANE)
    packed = dict(
        w1=_pack_w3(p["w1"], Cip, Cop), b1=_pad_vec(p["b1"], Cop).reshape(1, Cop),
        w2=_pack_w3(p["w2"], Cop, Cop), b2=_pad_vec(p["b2"], Cop).reshape(1, Cop),
        g1=_pad_vec(p["g1"], Cop, 1.0), be1=_pad_vec(p["be1"], Cop),
        g2=_pad_vec(p["g2"], Cop, 1.0), be2=_pad_vec(p["be2"], Cop),
    )
    if "ws" in p:
        packed["ws"] = _pack_w1(p["ws"], Cip, Cop)
        packed["gs"] = _pad_vec(p["gs"], Cop, 1.0)
        packed["bes"] = _pad_vec(p["bes"], Cop)
    return packed


def reference_forward(p, x, cin, cout, eps=BN_EPS):
    dn = ("NCDHW", "OIDHW", "NCDHW")

    def conv(x, w, pad):
        return jax.lax.conv_general_dilated(
            x, w, (1, 1, 1), ((pad, pad),) * 3, dimension_numbers=dn,
            precision=jax.lax.Precision.HIGHEST)

    def bn(x, g, b):
        mean = jnp.mean(x, axis=(0, 2, 3, 4), keepdims=True)
        var = jnp.mean(jnp.square(x - mean), axis=(0, 2, 3, 4), keepdims=True)
        xn = (x - mean) * jax.lax.rsqrt(var + eps)
        return xn * g.reshape(1, -1, 1, 1, 1) + b.reshape(1, -1, 1, 1, 1)

    h = jnp.maximum(conv(x, p["w1"], 1) + p["b1"].reshape(1, -1, 1, 1, 1), 0.0)
    h = bn(h, p["g1"], p["be1"])
    h = jnp.maximum(conv(h, p["w2"], 1) + p["b2"].reshape(1, -1, 1, 1, 1), 0.0)
    h = bn(h, p["g2"], p["be2"])
    r = bn(conv(x, p["ws"], 0), p["gs"], p["bes"]) if cin != cout else x
    return jnp.maximum(h + r, 0.0)


# ---------------------------------------------------------------------------
if __name__ == "__main__":
    N, CIN, COUT, D, H, W = 2, 4, 8, 8, 8, 8

    root = jax.random.PRNGKey(0)
    kp, kx = jax.random.split(root)
    params = init_params(kp, CIN, COUT)
    packed = pack_params(params, CIN, COUT)
    x = jax.random.normal(kx, (N, CIN, D, H, W), jnp.float32)

    fwd = jax.jit(functools.partial(residual_block_forward, cin=CIN, cout=COUT))
    out = jax.block_until_ready(fwd(packed, x))

    assert out.shape == (N, COUT, D, H, W), out.shape
    assert bool(jnp.all(jnp.isfinite(out)))

    # sanity check against a pure-JAX f32 reference (loose tol: bf16 MXU path)
    ref = jax.jit(functools.partial(reference_forward, cin=CIN, cout=COUT))(params, x)
    err = float(jnp.max(jnp.abs(out - ref)))
    assert err < 0.5, f"max abs error vs f32 reference: {err}"

    print("KERNEL_OK")
</pallas_src>

<mosaic_0001>
module attributes {stable_mosaic.version = 11 : i64} {
  func.func @_conv3x3_kernel(%arg0: i32, %arg1: i32, %arg2: memref<1x1x10x10x128xbf16, #tpu.memory_space<vmem>>, %arg3: memref<1x1x10x10x128xbf16, #tpu.memory_space<vmem>>, %arg4: memref<1x1x10x10x128xbf16, #tpu.memory_space<vmem>>, %arg5: memref<3x3x3x128x128xbf16, #tpu.memory_space<vmem>>, %arg6: memref<1x128xf32, #tpu.memory_space<vmem>>, %arg7: memref<1x128xf32, #tpu.memory_space<vmem>>, %arg8: memref<1x128xf32, #tpu.memory_space<vmem>>, %arg9: memref<1x1x8x8x128xbf16, #tpu.memory_space<vmem>>, %arg10: memref<1x1x2x128xf32, #tpu.memory_space<vmem>>) attributes {dimension_semantics = [#tpu.dimension_semantics<parallel>, #tpu.dimension_semantics<parallel>], iteration_bounds = array<i64: 2, 8>, scalar_prefetch = 0 : i64, scratch_operands = 0 : i64, tpu.core_type = #tpu.core_type<tc>, window_params = [{transform_indices = @transform_0, window_bounds = array<i64: 1, 1, 10, 10, 128>}, {transform_indices = @transform_1, window_bounds = array<i64: 1, 1, 10, 10, 128>}, {transform_indices = @transform_2, window_bounds = array<i64: 1, 1, 10, 10, 128>}, {pipeline_mode = #tpu.pipeline_mode<synchronous>, transform_indices = @transform_3, window_bounds = array<i64: 3, 3, 3, 128, 128>}, {pipeline_mode = #tpu.pipeline_mode<synchronous>, transform_indices = @transform_4, window_bounds = array<i64: 1, 128>}, {pipeline_mode = #tpu.pipeline_mode<synchronous>, transform_indices = @transform_5, window_bounds = array<i64: 1, 128>}, {pipeline_mode = #tpu.pipeline_mode<synchronous>, transform_indices = @transform_6, window_bounds = array<i64: 1, 128>}, {transform_indices = @transform_7, window_bounds = array<i64: 1, 1, 8, 8, 128>}, {transform_indices = @transform_8, window_bounds = array<i64: 1, 1, 2, 128>}]} {
    %0 = tpu.iota {dimensions = array<i32: 0>} : vector<10x10x1xi32>
    %1 = tpu.iota {dimensions = array<i32: 1>} : vector<10x10x1xi32>
    %c1_i32 = arith.constant 1 : i32
    %2 = vector.broadcast %c1_i32 : i32 to vector<10x10x1xi32>
    %3 = arith.cmpi sge, %0, %2 : vector<10x10x1xi32>
    %c8_i32 = arith.constant 8 : i32
    %4 = vector.broadcast %c8_i32 : i32 to vector<10x10x1xi32>
    %5 = arith.cmpi sle, %0, %4 : vector<10x10x1xi32>
    %6 = arith.andi %3, %5 : vector<10x10x1xi1>
    %c1_i32_0 = arith.constant 1 : i32
    %7 = vector.broadcast %c1_i32_0 : i32 to vector<10x10x1xi32>
    %8 = arith.cmpi sge, %1, %7 : vector<10x10x1xi32>
    %9 = arith.andi %6, %8 : vector<10x10x1xi1>
    %c8_i32_1 = arith.constant 8 : i32
    %10 = vector.broadcast %c8_i32_1 : i32 to vector<10x10x1xi32>
    %11 = arith.cmpi sle, %1, %10 : vector<10x10x1xi32>
    %12 = arith.andi %9, %11 : vector<10x10x1xi1>
    %c0 = arith.constant 0 : index
    %c0_2 = arith.constant 0 : index
    %13 = vector.load %arg7[%c0, %c0_2] : memref<1x128xf32, #tpu.memory_space<vmem>>, vector<1x128xf32>
    %14 = vector.shape_cast %13 : vector<1x128xf32> to vector<1x1x128xf32>
    %c0_3 = arith.constant 0 : index
    %c0_4 = arith.constant 0 : index
    %15 = vector.load %arg8[%c0_3, %c0_4] : memref<1x128xf32, #tpu.memory_space<vmem>>, vector<1x128xf32>
    %16 = vector.shape_cast %15 : vector<1x128xf32> to vector<1x1x128xf32>
    %c0_5 = arith.constant 0 : index
    %c0_6 = arith.constant 0 : index
    %c0_7 = arith.constant 0 : index
    %c0_8 = arith.constant 0 : index
    %c0_9 = arith.constant 0 : index
    %17 = vector.load %arg2[%c0_5, %c0_6, %c0_7, %c0_8, %c0_9] : memref<1x1x10x10x128xbf16, #tpu.memory_space<vmem>>, vector<1x1x10x10x128xbf16>
    %18 = vector.shape_cast %17 : vector<1x1x10x10x128xbf16> to vector<10x10x128xbf16>
    %19 = arith.extf %18 : vector<10x10x128xbf16> to vector<10x10x128xf32>
    %c0_i32 = arith.constant 0 : i32
    %20 = arith.addi %arg1, %c0_i32 : i32
    %c1_i32_10 = arith.constant 1 : i32
    %21 = arith.cmpi sge, %20, %c1_i32_10 : i32
    %c0_i32_11 = arith.constant 0 : i32
    %22 = arith.addi %arg1, %c0_i32_11 : i32
    %c8_i32_12 = arith.constant 8 : i32
    %23 = arith.cmpi sle, %22, %c8_i32_12 : i32
    %24 = arith.andi %21, %23 : i1
    %25 = vector.broadcast %24 : i1 to vector<10x10x1xi1>
    %26 = arith.andi %12, %25 : vector<10x10x1xi1>
    %27 = vector.broadcast %14 : vector<1x1x128xf32> to vector<10x10x128xf32>
    %28 = arith.mulf %19, %27 : vector<10x10x128xf32>
    %29 = vector.broadcast %16 : vector<1x1x128xf32> to vector<10x10x128xf32>
    %30 = arith.addf %28, %29 : vector<10x10x128xf32>
    %cst = arith.constant 0.000000e+00 : f32
    %31 = vector.shape_cast %26 : vector<10x10x1xi1> to vector<10x10x1xi1>
    %32 = vector.broadcast %31 : vector<10x10x1xi1> to vector<10x10x128xi1>
    %33 = vector.broadcast %cst : f32 to vector<10x10x128xf32>
    %34 = arith.select %32, %30, %33 : vector<10x10x128xi1>, vector<10x10x128xf32>
    %c0_13 = arith.constant 0 : index
    %c0_14 = arith.constant 0 : index
    %c0_15 = arith.constant 0 : index
    %c0_16 = arith.constant 0 : index
    %c0_17 = arith.constant 0 : index
    %35 = vector.load %arg3[%c0_13, %c0_14, %c0_15, %c0_16, %c0_17] : memref<1x1x10x10x128xbf16, #tpu.memory_space<vmem>>, vector<1x1x10x10x128xbf16>
    %36 = vector.shape_cast %35 : vector<1x1x10x10x128xbf16> to vector<10x10x128xbf16>
    %37 = arith.extf %36 : vector<10x10x128xbf16> to vector<10x10x128xf32>
    %c1_i32_18 = arith.constant 1 : i32
    %38 = arith.addi %arg1, %c1_i32_18 : i32
    %c1_i32_19 = arith.constant 1 : i32
    %39 = arith.cmpi sge, %38, %c1_i32_19 : i32
    %c1_i32_20 = arith.constant 1 : i32
    %40 = arith.addi %arg1, %c1_i32_20 : i32
    %c8_i32_21 = arith.constant 8 : i32
    %41 = arith.cmpi sle, %40, %c8_i32_21 : i32
    %42 = arith.andi %39, %41 : i1
    %43 = vector.broadcast %42 : i1 to vector<10x10x1xi1>
    %44 = arith.andi %12, %43 : vector<10x10x1xi1>
    %45 = vector.broadcast %14 : vector<1x1x128xf32> to vector<10x10x128xf32>
    %46 = arith.mulf %37, %45 : vector<10x10x128xf32>
    %47 = vector.broadcast %16 : vector<1x1x128xf32> to vector<10x10x128xf32>
    %48 = arith.addf %46, %47 : vector<10x10x128xf32>
    %cst_22 = arith.constant 0.000000e+00 : f32
    %49 = vector.shape_cast %44 : vector<10x10x1xi1> to vector<10x10x1xi1>
    %50 = vector.broadcast %49 : vector<10x10x1xi1> to vector<10x10x128xi1>
    %51 = vector.broadcast %cst_22 : f32 to vector<10x10x128xf32>
    %52 = arith.select %50, %48, %51 : vector<10x10x128xi1>, vector<10x10x128xf32>
    %c0_23 = arith.constant 0 : index
    %c0_24 = arith.constant 0 : index
    %c0_25 = arith.constant 0 : index
    %c0_26 = arith.constant 0 : index
    %c0_27 = arith.constant 0 : index
    %53 = vector.load %arg4[%c0_23, %c0_24, %c0_25, %c0_26, %c0_27] : memref<1x1x10x10x128xbf16, #tpu.memory_space<vmem>>, vector<1x1x10x10x128xbf16>
    %54 = vector.shape_cast %53 : vector<1x1x10x10x128xbf16> to vector<10x10x128xbf16>
    %55 = arith.extf %54 : vector<10x10x128xbf16> to vector<10x10x128xf32>
    %c2_i32 = arith.constant 2 : i32
    %56 = arith.addi %arg1, %c2_i32 : i32
    %c1_i32_28 = arith.constant 1 : i32
    %57 = arith.cmpi sge, %56, %c1_i32_28 : i32
    %c2_i32_29 = arith.constant 2 : i32
    %58 = arith.addi %arg1, %c2_i32_29 : i32
    %c8_i32_30 = arith.constant 8 : i32
    %59 = arith.cmpi sle, %58, %c8_i32_30 : i32
    %60 = arith.andi %57, %59 : i1
    %61 = vector.broadcast %60 : i1 to vector<10x10x1xi1>
    %62 = arith.andi %12, %61 : vector<10x10x1xi1>
    %63 = vector.broadcast %14 : vector<1x1x128xf32> to vector<10x10x128xf32>
    %64 = arith.mulf %55, %63 : vector<10x10x128xf32>
    %65 = vector.broadcast %16 : vector<1x1x128xf32> to vector<10x10x128xf32>
    %66 = arith.addf %64, %65 : vector<10x10x128xf32>
    %cst_31 = arith.constant 0.000000e+00 : f32
    %67 = vector.shape_cast %62 : vector<10x10x1xi1> to vector<10x10x1xi1>
    %68 = vector.broadcast %67 : vector<10x10x1xi1> to vector<10x10x128xi1>
    %69 = vector.broadcast %cst_31 : f32 to vector<10x10x128xf32>
    %70 = arith.select %68, %66, %69 : vector<10x10x128xi1>, vector<10x10x128xf32>
    %cst_32 = arith.constant 0.000000e+00 : f32
    %71 = vector.broadcast %cst_32 : f32 to vector<64x128xf32>
    %72 = vector.extract_strided_slice %34 {offsets = [0, 0, 0], sizes = [8, 8, 128], strides = [1, 1, 1]} : vector<10x10x128xf32> to vector<8x8x128xf32>
    %73 = vector.shape_cast %72 : vector<8x8x128xf32> to vector<64x128xf32>
    %74 = arith.truncf %73 : vector<64x128xf32> to vector<64x128xbf16>
    %c0_33 = arith.constant 0 : index
    %c0_34 = arith.constant 0 : index
    %c0_35 = arith.constant 0 : index
    %c0_36 = arith.constant 0 : index
    %c0_37 = arith.constant 0 : index
    %75 = vector.load %arg5[%c0_33, %c0_34, %c0_35, %c0_36, %c0_37] : memref<3x3x3x128x128xbf16, #tpu.memory_space<vmem>>, vector<1x1x1x128x128xbf16>
    %76 = vector.shape_cast %75 : vector<1x1x1x128x128xbf16> to vector<128x128xbf16>
    %cst_38 = arith.constant dense<0.000000e+00> : vector<64x128xf32>
    %77 = tpu.matmul %74, %76, %cst_38 {dimension_numbers = #tpu.dot_dimension_numbers<[1], [0], [0], [1], [0, 0, 1, 1], [], []>} : vector<64x128xbf16>, vector<128x128xbf16>, vector<64x128xf32> -> vector<64x128xf32>
    %78 = arith.addf %71, %77 : vector<64x128xf32>
    %79 = vector.extract_strided_slice %34 {offsets = [0, 1, 0], sizes = [8, 8, 128], strides = [1, 1, 1]} : vector<10x10x128xf32> to vector<8x8x128xf32>
    %80 = vector.shape_cast %79 : vector<8x8x128xf32> to vector<64x128xf32>
    %81 = arith.truncf %80 : vector<64x128xf32> to vector<64x128xbf16>
    %c0_39 = arith.constant 0 : index
    %c0_40 = arith.constant 0 : index
    %c1 = arith.constant 1 : index
    %c0_41 = arith.constant 0 : index
    %c0_42 = arith.constant 0 : index
    %82 = vector.load %arg5[%c0_39, %c0_40, %c1, %c0_41, %c0_42] : memref<3x3x3x128x128xbf16, #tpu.memory_space<vmem>>, vector<1x1x1x128x128xbf16>
    %83 = vector.shape_cast %82 : vector<1x1x1x128x128xbf16> to vector<128x128xbf16>
    %cst_43 = arith.constant dense<0.000000e+00> : vector<64x128xf32>
    %84 = tpu.matmul %81, %83, %cst_43 {dimension_numbers = #tpu.dot_dimension_numbers<[1], [0], [0], [1], [0, 0, 1, 1], [], []>} : vector<64x128xbf16>, vector<128x128xbf16>, vector<64x128xf32> -> vector<64x128xf32>
    %85 = arith.addf %78, %84 : vector<64x128xf32>
    %86 = vector.extract_strided_slice %34 {offsets = [0, 2, 0], sizes = [8, 8, 128], strides = [1, 1, 1]} : vector<10x10x128xf32> to vector<8x8x128xf32>
    %87 = vector.shape_cast %86 : vector<8x8x128xf32> to vector<64x128xf32>
    %88 = arith.truncf %87 : vector<64x128xf32> to vector<64x128xbf16>
    %c0_44 = arith.constant 0 : index
    %c0_45 = arith.constant 0 : index
    %c2 = arith.constant 2 : index
    %c0_46 = arith.constant 0 : index
    %c0_47 = arith.constant 0 : index
    %89 = vector.load %arg5[%c0_44, %c0_45, %c2, %c0_46, %c0_47] : memref<3x3x3x128x128xbf16, #tpu.memory_space<vmem>>, vector<1x1x1x128x128xbf16>
    %90 = vector.shape_cast %89 : vector<1x1x1x128x128xbf16> to vector<128x128xbf16>
    %cst_48 = arith.constant dense<0.000000e+00> : vector<64x128xf32>
    %91 = tpu.matmul %88, %90, %cst_48 {dimension_numbers = #tpu.dot_dimension_numbers<[1], [0], [0], [1], [0, 0, 1, 1], [], []>} : vector<64x128xbf16>, vector<128x128xbf16>, vector<64x128xf32> -> vector<64x128xf32>
    %92 = arith.addf %85, %91 : vector<64x128xf32>
    %93 = vector.extract_strided_slice %34 {offsets = [1, 0, 0], sizes = [8, 8, 128], strides = [1, 1, 1]} : vector<10x10x128xf32> to vector<8x8x128xf32>
    %94 = vector.shape_cast %93 : vector<8x8x128xf32> to vector<64x128xf32>
    %95 = arith.truncf %94 : vector<64x128xf32> to vector<64x128xbf16>
    %c0_49 = arith.constant 0 : index
    %c1_50 = arith.constant 1 : index
    %c0_51 = arith.constant 0 : index
    %c0_52 = arith.constant 0 : index
    %c0_53 = arith.constant 0 : index
    %96 = vector.load %arg5[%c0_49, %c1_50, %c0_51, %c0_52, %c0_53] : memref<3x3x3x128x128xbf16, #tpu.memory_space<vmem>>, vector<1x1x1x128x128xbf16>
    %97 = vector.shape_cast %96 : vector<1x1x1x128x128xbf16> to vector<128x128xbf16>
    %cst_54 = arith.constant dense<0.000000e+00> : vector<64x128xf32>
    %98 = tpu.matmul %95, %97, %cst_54 {dimension_numbers = #tpu.dot_dimension_numbers<[1], [0], [0], [1], [0, 0, 1, 1], [], []>} : vector<64x128xbf16>, vector<128x128xbf16>, vector<64x128xf32> -> vector<64x128xf32>
    %99 = arith.addf %92, %98 : vector<64x128xf32>
    %100 = vector.extract_strided_slice %34 {offsets = [1, 1, 0], sizes = [8, 8, 128], strides = [1, 1, 1]} : vector<10x10x128xf32> to vector<8x8x128xf32>
    %101 = vector.shape_cast %100 : vector<8x8x128xf32> to vector<64x128xf32>
    %102 = arith.truncf %101 : vector<64x128xf32> to vector<64x128xbf16>
    %c0_55 = arith.constant 0 : index
    %c1_56 = arith.constant 1 : index
    %c1_57 = arith.constant 1 : index
    %c0_58 = arith.constant 0 : index
    %c0_59 = arith.constant 0 : index
    %103 = vector.load %arg5[%c0_55, %c1_56, %c1_57, %c0_58, %c0_59] : memref<3x3x3x128x128xbf16, #tpu.memory_space<vmem>>, vector<1x1x1x128x128xbf16>
    %104 = vector.shape_cast %103 : vector<1x1x1x128x128xbf16> to vector<128x128xbf16>
    %cst_60 = arith.constant dense<0.000000e+00> : vector<64x128xf32>
    %105 = tpu.matmul %102, %104, %cst_60 {dimension_numbers = #tpu.dot_dimension_numbers<[1], [0], [0], [1], [0, 0, 1, 1], [], []>} : vector<64x128xbf16>, vector<128x128xbf16>, vector<64x128xf32> -> vector<64x128xf32>
    %106 = arith.addf %99, %105 : vector<64x128xf32>
    %107 = vector.extract_strided_slice %34 {offsets = [1, 2, 0], sizes = [8, 8, 128], strides = [1, 1, 1]} : vector<10x10x128xf32> to vector<8x8x128xf32>
    %108 = vector.shape_cast %107 : vector<8x8x128xf32> to vector<64x128xf32>
    %109 = arith.truncf %108 : vector<64x128xf32> to vector<64x128xbf16>
    %c0_61 = arith.constant 0 : index
    %c1_62 = arith.constant 1 : index
    %c2_63 = arith.constant 2 : index
    %c0_64 = arith.constant 0 : index
    %c0_65 = arith.constant 0 : index
    %110 = vector.load %arg5[%c0_61, %c1_62, %c2_63, %c0_64, %c0_65] : memref<3x3x3x128x128xbf16, #tpu.memory_space<vmem>>, vector<1x1x1x128x128xbf16>
    %111 = vector.shape_cast %110 : vector<1x1x1x128x128xbf16> to vector<128x128xbf16>
    %cst_66 = arith.constant dense<0.000000e+00> : vector<64x128xf32>
    %112 = tpu.matmul %109, %111, %cst_66 {dimension_numbers = #tpu.dot_dimension_numbers<[1], [0], [0], [1], [0, 0, 1, 1], [], []>} : vector<64x128xbf16>, vector<128x128xbf16>, vector<64x128xf32> -> vector<64x128xf32>
    %113 = arith.addf %106, %112 : vector<64x128xf32>
    %114 = vector.extract_strided_slice %34 {offsets = [2, 0, 0], sizes = [8, 8, 128], strides = [1, 1, 1]} : vector<10x10x128xf32> to vector<8x8x128xf32>
    %115 = vector.shape_cast %114 : vector<8x8x128xf32> to vector<64x128xf32>
    %116 = arith.truncf %115 : vector<64x128xf32> to vector<64x128xbf16>
    %c0_67 = arith.constant 0 : index
    %c2_68 = arith.constant 2 : index
    %c0_69 = arith.constant 0 : index
    %c0_70 = arith.constant 0 : index
    %c0_71 = arith.constant 0 : index
    %117 = vector.load %arg5[%c0_67, %c2_68, %c0_69, %c0_70, %c0_71] : memref<3x3x3x128x128xbf16, #tpu.memory_space<vmem>>, vector<1x1x1x128x128xbf16>
    %118 = vector.shape_cast %117 : vector<1x1x1x128x128xbf16> to vector<128x128xbf16>
    %cst_72 = arith.constant dense<0.000000e+00> : vector<64x128xf32>
    %119 = tpu.matmul %116, %118, %cst_72 {dimension_numbers = #tpu.dot_dimension_numbers<[1], [0], [0], [1], [0, 0, 1, 1], [], []>} : vector<64x128xbf16>, vector<128x128xbf16>, vector<64x128xf32> -> vector<64x128xf32>
    %120 = arith.addf %113, %119 : vector<64x128xf32>
    %121 = vector.extract_strided_slice %34 {offsets = [2, 1, 0], sizes = [8, 8, 128], strides = [1, 1, 1]} : vector<10x10x128xf32> to vector<8x8x128xf32>
    %122 = vector.shape_cast %121 : vector<8x8x128xf32> to vector<64x128xf32>
    %123 = arith.truncf %122 : vector<64x128xf32> to vector<64x128xbf16>
    %c0_73 = arith.constant 0 : index
    %c2_74 = arith.constant 2 : index
    %c1_75 = arith.constant 1 : index
    %c0_76 = arith.constant 0 : index
    %c0_77 = arith.constant 0 : index
    %124 = vector.load %arg5[%c0_73, %c2_74, %c1_75, %c0_76, %c0_77] : memref<3x3x3x128x128xbf16, #tpu.memory_space<vmem>>, vector<1x1x1x128x128xbf16>
    %125 = vector.shape_cast %124 : vector<1x1x1x128x128xbf16> to vector<128x128xbf16>
    %cst_78 = arith.constant dense<0.000000e+00> : vector<64x128xf32>
    %126 = tpu.matmul %123, %125, %cst_78 {dimension_numbers = #tpu.dot_dimension_numbers<[1], [0], [0], [1], [0, 0, 1, 1], [], []>} : vector<64x128xbf16>, vector<128x128xbf16>, vector<64x128xf32> -> vector<64x128xf32>
    %127 = arith.addf %120, %126 : vector<64x128xf32>
    %128 = vector.extract_strided_slice %34 {offsets = [2, 2, 0], sizes = [8, 8, 128], strides = [1, 1, 1]} : vector<10x10x128xf32> to vector<8x8x128xf32>
    %129 = vector.shape_cast %128 : vector<8x8x128xf32> to vector<64x128xf32>
    %130 = arith.truncf %129 : vector<64x128xf32> to vector<64x128xbf16>
    %c0_79 = arith.constant 0 : index
    %c2_80 = arith.constant 2 : index
    %c2_81 = arith.constant 2 : index
    %c0_82 = arith.constant 0 : index
    %c0_83 = arith.constant 0 : index
    %131 = vector.load %arg5[%c0_79, %c2_80, %c2_81, %c0_82, %c0_83] : memref<3x3x3x128x128xbf16, #tpu.memory_space<vmem>>, vector<1x1x1x128x128xbf16>
    %132 = vector.shape_cast %131 : vector<1x1x1x128x128xbf16> to vector<128x128xbf16>
    %cst_84 = arith.constant dense<0.000000e+00> : vector<64x128xf32>
    %133 = tpu.matmul %130, %132, %cst_84 {dimension_numbers = #tpu.dot_dimension_numbers<[1], [0], [0], [1], [0, 0, 1, 1], [], []>} : vector<64x128xbf16>, vector<128x128xbf16>, vector<64x128xf32> -> vector<64x128xf32>
    %134 = arith.addf %127, %133 : vector<64x128xf32>
    %135 = vector.extract_strided_slice %52 {offsets = [0, 0, 0], sizes = [8, 8, 128], strides = [1, 1, 1]} : vector<10x10x128xf32> to vector<8x8x128xf32>
    %136 = vector.shape_cast %135 : vector<8x8x128xf32> to vector<64x128xf32>
    %137 = arith.truncf %136 : vector<64x128xf32> to vector<64x128xbf16>
    %c1_85 = arith.constant 1 : index
    %c0_86 = arith.constant 0 : index
    %c0_87 = arith.constant 0 : index
    %c0_88 = arith.constant 0 : index
    %c0_89 = arith.constant 0 : index
    %138 = vector.load %arg5[%c1_85, %c0_86, %c0_87, %c0_88, %c0_89] : memref<3x3x3x128x128xbf16, #tpu.memory_space<vmem>>, vector<1x1x1x128x128xbf16>
    %139 = vector.shape_cast %138 : vector<1x1x1x128x128xbf16> to vector<128x128xbf16>
    %cst_90 = arith.constant dense<0.000000e+00> : vector<64x128xf32>
    %140 = tpu.matmul %137, %139, %cst_90 {dimension_numbers = #tpu.dot_dimension_numbers<[1], [0], [0], [1], [0, 0, 1, 1], [], []>} : vector<64x128xbf16>, vector<128x128xbf16>, vector<64x128xf32> -> vector<64x128xf32>
    %141 = arith.addf %134, %140 : vector<64x128xf32>
    %142 = vector.extract_strided_slice %52 {offsets = [0, 1, 0], sizes = [8, 8, 128], strides = [1, 1, 1]} : vector<10x10x128xf32> to vector<8x8x128xf32>
    %143 = vector.shape_cast %142 : vector<8x8x128xf32> to vector<64x128xf32>
    %144 = arith.truncf %143 : vector<64x128xf32> to vector<64x128xbf16>
    %c1_91 = arith.constant 1 : index
    %c0_92 = arith.constant 0 : index
    %c1_93 = arith.constant 1 : index
    %c0_94 = arith.constant 0 : index
    %c0_95 = arith.constant 0 : index
    %145 = vector.load %arg5[%c1_91, %c0_92, %c1_93, %c0_94, %c0_95] : memref<3x3x3x128x128xbf16, #tpu.memory_space<vmem>>, vector<1x1x1x128x128xbf16>
    %146 = vector.shape_cast %145 : vector<1x1x1x128x128xbf16> to vector<128x128xbf16>
    %cst_96 = arith.constant dense<0.000000e+00> : vector<64x128xf32>
    %147 = tpu.matmul %144, %146, %cst_96 {dimension_numbers = #tpu.dot_dimension_numbers<[1], [0], [0], [1], [0, 0, 1, 1], [], []>} : vector<64x128xbf16>, vector<128x128xbf16>, vector<64x128xf32> -> vector<64x128xf32>
    %148 = arith.addf %141, %147 : vector<64x128xf32>
    %149 = vector.extract_strided_slice %52 {offsets = [0, 2, 0], sizes = [8, 8, 128], strides = [1, 1, 1]} : vector<10x10x128xf32> to vector<8x8x128xf32>
    %150 = vector.shape_cast %149 : vector<8x8x128xf32> to vector<64x128xf32>
    %151 = arith.truncf %150 : vector<64x128xf32> to vector<64x128xbf16>
    %c1_97 = arith.constant 1 : index
    %c0_98 = arith.constant 0 : index
    %c2_99 = arith.constant 2 : index
    %c0_100 = arith.constant 0 : index
    %c0_101 = arith.constant 0 : index
    %152 = vector.load %arg5[%c1_97, %c0_98, %c2_99, %c0_100, %c0_101] : memref<3x3x3x128x128xbf16, #tpu.memory_space<vmem>>, vector<1x1x1x128x128xbf16>
    %153 = vector.shape_cast %152 : vector<1x1x1x128x128xbf16> to vector<128x128xbf16>
    %cst_102 = arith.constant dense<0.000000e+00> : vector<64x128xf32>
    %154 = tpu.matmul %151, %153, %cst_102 {dimension_numbers = #tpu.dot_dimension_numbers<[1], [0], [0], [1], [0, 0, 1, 1], [], []>} : vector<64x128xbf16>, vector<128x128xbf16>, vector<64x128xf32> -> vector<64x128xf32>
    %155 = arith.addf %148, %154 : vector<64x128xf32>
    %156 = vector.extract_strided_slice %52 {offsets = [1, 0, 0], sizes = [8, 8, 128], strides = [1, 1, 1]} : vector<10x10x128xf32> to vector<8x8x128xf32>
    %157 = vector.shape_cast %156 : vector<8x8x128xf32> to vector<64x128xf32>
    %158 = arith.truncf %157 : vector<64x128xf32> to vector<64x128xbf16>
    %c1_103 = arith.constant 1 : index
    %c1_104 = arith.constant 1 : index
    %c0_105 = arith.constant 0 : index
    %c0_106 = arith.constant 0 : index
    %c0_107 = arith.constant 0 : index
    %159 = vector.load %arg5[%c1_103, %c1_104, %c0_105, %c0_106, %c0_107] : memref<3x3x3x128x128xbf16, #tpu.memory_space<vmem>>, vector<1x1x1x128x128xbf16>
    %160 = vector.shape_cast %159 : vector<1x1x1x128x128xbf16> to vector<128x128xbf16>
    %cst_108 = arith.constant dense<0.000000e+00> : vector<64x128xf32>
    %161 = tpu.matmul %158, %160, %cst_108 {dimension_numbers = #tpu.dot_dimension_numbers<[1], [0], [0], [1], [0, 0, 1, 1], [], []>} : vector<64x128xbf16>, vector<128x128xbf16>, vector<64x128xf32> -> vector<64x128xf32>
    %162 = arith.addf %155, %161 : vector<64x128xf32>
    %163 = vector.extract_strided_slice %52 {offsets = [1, 1, 0], sizes = [8, 8, 128], strides = [1, 1, 1]} : vector<10x10x128xf32> to vector<8x8x128xf32>
    %164 = vector.shape_cast %163 : vector<8x8x128xf32> to vector<64x128xf32>
    %165 = arith.truncf %164 : vector<64x128xf32> to vector<64x128xbf16>
    %c1_109 = arith.constant 1 : index
    %c1_110 = arith.constant 1 : index
    %c1_111 = arith.constant 1 : index
    %c0_112 = arith.constant 0 : index
    %c0_113 = arith.constant 0 : index
    %166 = vector.load %arg5[%c1_109, %c1_110, %c1_111, %c0_112, %c0_113] : memref<3x3x3x128x128xbf16, #tpu.memory_space<vmem>>, vector<1x1x1x128x128xbf16>
    %167 = vector.shape_cast %166 : vector<1x1x1x128x128xbf16> to vector<128x128xbf16>
    %cst_114 = arith.constant dense<0.000000e+00> : vector<64x128xf32>
    %168 = tpu.matmul %165, %167, %cst_114 {dimension_numbers = #tpu.dot_dimension_numbers<[1], [0], [0], [1], [0, 0, 1, 1], [], []>} : vector<64x128xbf16>, vector<128x128xbf16>, vector<64x128xf32> -> vector<64x128xf32>
    %169 = arith.addf %162, %168 : vector<64x128xf32>
    %170 = vector.extract_strided_slice %52 {offsets = [1, 2, 0], sizes = [8, 8, 128], strides = [1, 1, 1]} : vector<10x10x128xf32> to vector<8x8x128xf32>
    %171 = vector.shape_cast %170 : vector<8x8x128xf32> to vector<64x128xf32>
    %172 = arith.truncf %171 : vector<64x128xf32> to vector<64x128xbf16>
    %c1_115 = arith.constant 1 : index
    %c1_116 = arith.constant 1 : index
    %c2_117 = arith.constant 2 : index
    %c0_118 = arith.constant 0 : index
    %c0_119 = arith.constant 0 : index
    %173 = vector.load %arg5[%c1_115, %c1_116, %c2_117, %c0_118, %c0_119] : memref<3x3x3x128x128xbf16, #tpu.memory_space<vmem>>, vector<1x1x1x128x128xbf16>
    %174 = vector.shape_cast %173 : vector<1x1x1x128x128xbf16> to vector<128x128xbf16>
    %cst_120 = arith.constant dense<0.000000e+00> : vector<64x128xf32>
    %175 = tpu.matmul %172, %174, %cst_120 {dimension_numbers = #tpu.dot_dimension_numbers<[1], [0], [0], [1], [0, 0, 1, 1], [], []>} : vector<64x128xbf16>, vector<128x128xbf16>, vector<64x128xf32> -> vector<64x128xf32>
    %176 = arith.addf %169, %175 : vector<64x128xf32>
    %177 = vector.extract_strided_slice %52 {offsets = [2, 0, 0], sizes = [8, 8, 128], strides = [1, 1, 1]} : vector<10x10x128xf32> to vector<8x8x128xf32>
    %178 = vector.shape_cast %177 : vector<8x8x128xf32> to vector<64x128xf32>
    %179 = arith.truncf %178 : vector<64x128xf32> to vector<64x128xbf16>
    %c1_121 = arith.constant 1 : index
    %c2_122 = arith.constant 2 : index
    %c0_123 = arith.constant 0 : index
    %c0_124 = arith.constant 0 : index
    %c0_125 = arith.constant 0 : index
    %180 = vector.load %arg5[%c1_121, %c2_122, %c0_123, %c0_124, %c0_125] : memref<3x3x3x128x128xbf16, #tpu.memory_space<vmem>>, vector<1x1x1x128x128xbf16>
    %181 = vector.shape_cast %180 : vector<1x1x1x128x128xbf16> to vector<128x128xbf16>
    %cst_126 = arith.constant dense<0.000000e+00> : vector<64x128xf32>
    %182 = tpu.matmul %179, %181, %cst_126 {dimension_numbers = #tpu.dot_dimension_numbers<[1], [0], [0], [1], [0, 0, 1, 1], [], []>} : vector<64x128xbf16>, vector<128x128xbf16>, vector<64x128xf32> -> vector<64x128xf32>
    %183 = arith.addf %176, %182 : vector<64x128xf32>
    %184 = vector.extract_strided_slice %52 {offsets = [2, 1, 0], sizes = [8, 8, 128], strides = [1, 1, 1]} : vector<10x10x128xf32> to vector<8x8x128xf32>
    %185 = vector.shape_cast %184 : vector<8x8x128xf32> to vector<64x128xf32>
    %186 = arith.truncf %185 : vector<64x128xf32> to vector<64x128xbf16>
    %c1_127 = arith.constant 1 : index
    %c2_128 = arith.constant 2 : index
    %c1_129 = arith.constant 1 : index
    %c0_130 = arith.constant 0 : index
    %c0_131 = arith.constant 0 : index
    %187 = vector.load %arg5[%c1_127, %c2_128, %c1_129, %c0_130, %c0_131] : memref<3x3x3x128x128xbf16, #tpu.memory_space<vmem>>, vector<1x1x1x128x128xbf16>
    %188 = vector.shape_cast %187 : vector<1x1x1x128x128xbf16> to vector<128x128xbf16>
    %cst_132 = arith.constant dense<0.000000e+00> : vector<64x128xf32>
    %189 = tpu.matmul %186, %188, %cst_132 {dimension_numbers = #tpu.dot_dimension_numbers<[1], [0], [0], [1], [0, 0, 1, 1], [], []>} : vector<64x128xbf16>, vector<128x128xbf16>, vector<64x128xf32> -> vector<64x128xf32>
    %190 = arith.addf %183, %189 : vector<64x128xf32>
    %191 = vector.extract_strided_slice %52 {offsets = [2, 2, 0], sizes = [8, 8, 128], strides = [1, 1, 1]} : vector<10x10x128xf32> to vector<8x8x128xf32>
    %192 = vector.shape_cast %191 : vector<8x8x128xf32> to vector<64x128xf32>
    %193 = arith.truncf %192 : vector<64x128xf32> to vector<64x128xbf16>
    %c1_133 = arith.constant 1 : index
    %c2_134 = arith.constant 2 : index
    %c2_135 = arith.constant 2 : index
    %c0_136 = arith.constant 0 : index
    %c0_137 = arith.constant 0 : index
    %194 = vector.load %arg5[%c1_133, %c2_134, %c2_135, %c0_136, %c0_137] : memref<3x3x3x128x128xbf16, #tpu.memory_space<vmem>>, vector<1x1x1x128x128xbf16>
    %195 = vector.shape_cast %194 : vector<1x1x1x128x128xbf16> to vector<128x128xbf16>
    %cst_138 = arith.constant dense<0.000000e+00> : vector<64x128xf32>
    %196 = tpu.matmul %193, %195, %cst_138 {dimension_numbers = #tpu.dot_dimension_numbers<[1], [0], [0], [1], [0, 0, 1, 1], [], []>} : vector<64x128xbf16>, vector<128x128xbf16>, vector<64x128xf32> -> vector<64x128xf32>
    %197 = arith.addf %190, %196 : vector<64x128xf32>
    %198 = vector.extract_strided_slice %70 {offsets = [0, 0, 0], sizes = [8, 8, 128], strides = [1, 1, 1]} : vector<10x10x128xf32> to vector<8x8x128xf32>
    %199 = vector.shape_cast %198 : vector<8x8x128xf32> to vector<64x128xf32>
    %200 = arith.truncf %199 : vector<64x128xf32> to vector<64x128xbf16>
    %c2_139 = arith.constant 2 : index
    %c0_140 = arith.constant 0 : index
    %c0_141 = arith.constant 0 : index
    %c0_142 = arith.constant 0 : index
    %c0_143 = arith.constant 0 : index
    %201 = vector.load %arg5[%c2_139, %c0_140, %c0_141, %c0_142, %c0_143] : memref<3x3x3x128x128xbf16, #tpu.memory_space<vmem>>, vector<1x1x1x128x128xbf16>
    %202 = vector.shape_cast %201 : vector<1x1x1x128x128xbf16> to vector<128x128xbf16>
    %cst_144 = arith.constant dense<0.000000e+00> : vector<64x128xf32>
    %203 = tpu.matmul %200, %202, %cst_144 {dimension_numbers = #tpu.dot_dimension_numbers<[1], [0], [0], [1], [0, 0, 1, 1], [], []>} : vector<64x128xbf16>, vector<128x128xbf16>, vector<64x128xf32> -> vector<64x128xf32>
    %204 = arith.addf %197, %203 : vector<64x128xf32>
    %205 = vector.extract_strided_slice %70 {offsets = [0, 1, 0], sizes = [8, 8, 128], strides = [1, 1, 1]} : vector<10x10x128xf32> to vector<8x8x128xf32>
    %206 = vector.shape_cast %205 : vector<8x8x128xf32> to vector<64x128xf32>
    %207 = arith.truncf %206 : vector<64x128xf32> to vector<64x128xbf16>
    %c2_145 = arith.constant 2 : index
    %c0_146 = arith.constant 0 : index
    %c1_147 = arith.constant 1 : index
    %c0_148 = arith.constant 0 : index
    %c0_149 = arith.constant 0 : index
    %208 = vector.load %arg5[%c2_145, %c0_146, %c1_147, %c0_148, %c0_149] : memref<3x3x3x128x128xbf16, #tpu.memory_space<vmem>>, vector<1x1x1x128x128xbf16>
    %209 = vector.shape_cast %208 : vector<1x1x1x128x128xbf16> to vector<128x128xbf16>
    %cst_150 = arith.constant dense<0.000000e+00> : vector<64x128xf32>
    %210 = tpu.matmul %207, %209, %cst_150 {dimension_numbers = #tpu.dot_dimension_numbers<[1], [0], [0], [1], [0, 0, 1, 1], [], []>} : vector<64x128xbf16>, vector<128x128xbf16>, vector<64x128xf32> -> vector<64x128xf32>
    %211 = arith.addf %204, %210 : vector<64x128xf32>
    %212 = vector.extract_strided_slice %70 {offsets = [0, 2, 0], sizes = [8, 8, 128], strides = [1, 1, 1]} : vector<10x10x128xf32> to vector<8x8x128xf32>
    %213 = vector.shape_cast %212 : vector<8x8x128xf32> to vector<64x128xf32>
    %214 = arith.truncf %213 : vector<64x128xf32> to vector<64x128xbf16>
    %c2_151 = arith.constant 2 : index
    %c0_152 = arith.constant 0 : index
    %c2_153 = arith.constant 2 : index
    %c0_154 = arith.constant 0 : index
    %c0_155 = arith.constant 0 : index
    %215 = vector.load %arg5[%c2_151, %c0_152, %c2_153, %c0_154, %c0_155] : memref<3x3x3x128x128xbf16, #tpu.memory_space<vmem>>, vector<1x1x1x128x128xbf16>
    %216 = vector.shape_cast %215 : vector<1x1x1x128x128xbf16> to vector<128x128xbf16>
    %cst_156 = arith.constant dense<0.000000e+00> : vector<64x128xf32>
    %217 = tpu.matmul %214, %216, %cst_156 {dimension_numbers = #tpu.dot_dimension_numbers<[1], [0], [0], [1], [0, 0, 1, 1], [], []>} : vector<64x128xbf16>, vector<128x128xbf16>, vector<64x128xf32> -> vector<64x128xf32>
    %218 = arith.addf %211, %217 : vector<64x128xf32>
    %219 = vector.extract_strided_slice %70 {offsets = [1, 0, 0], sizes = [8, 8, 128], strides = [1, 1, 1]} : vector<10x10x128xf32> to vector<8x8x128xf32>
    %220 = vector.shape_cast %219 : vector<8x8x128xf32> to vector<64x128xf32>
    %221 = arith.truncf %220 : vector<64x128xf32> to vector<64x128xbf16>
    %c2_157 = arith.constant 2 : index
    %c1_158 = arith.constant 1 : index
    %c0_159 = arith.constant 0 : index
    %c0_160 = arith.constant 0 : index
    %c0_161 = arith.constant 0 : index
    %222 = vector.load %arg5[%c2_157, %c1_158, %c0_159, %c0_160, %c0_161] : memref<3x3x3x128x128xbf16, #tpu.memory_space<vmem>>, vector<1x1x1x128x128xbf16>
    %223 = vector.shape_cast %222 : vector<1x1x1x128x128xbf16> to vector<128x128xbf16>
    %cst_162 = arith.constant dense<0.000000e+00> : vector<64x128xf32>
    %224 = tpu.matmul %221, %223, %cst_162 {dimension_numbers = #tpu.dot_dimension_numbers<[1], [0], [0], [1], [0, 0, 1, 1], [], []>} : vector<64x128xbf16>, vector<128x128xbf16>, vector<64x128xf32> -> vector<64x128xf32>
    %225 = arith.addf %218, %224 : vector<64x128xf32>
    %226 = vector.extract_strided_slice %70 {offsets = [1, 1, 0], sizes = [8, 8, 128], strides = [1, 1, 1]} : vector<10x10x128xf32> to vector<8x8x128xf32>
    %227 = vector.shape_cast %226 : vector<8x8x128xf32> to vector<64x128xf32>
    %228 = arith.truncf %227 : vector<64x128xf32> to vector<64x128xbf16>
    %c2_163 = arith.constant 2 : index
    %c1_164 = arith.constant 1 : index
    %c1_165 = arith.constant 1 : index
    %c0_166 = arith.constant 0 : index
    %c0_167 = arith.constant 0 : index
    %229 = vector.load %arg5[%c2_163, %c1_164, %c1_165, %c0_166, %c0_167] : memref<3x3x3x128x128xbf16, #tpu.memory_space<vmem>>, vector<1x1x1x128x128xbf16>
    %230 = vector.shape_cast %229 : vector<1x1x1x128x128xbf16> to vector<128x128xbf16>
    %cst_168 = arith.constant dense<0.000000e+00> : vector<64x128xf32>
    %231 = tpu.matmul %228, %230, %cst_168 {dimension_numbers = #tpu.dot_dimension_numbers<[1], [0], [0], [1], [0, 0, 1, 1], [], []>} : vector<64x128xbf16>, vector<128x128xbf16>, vector<64x128xf32> -> vector<64x128xf32>
    %232 = arith.addf %225, %231 : vector<64x128xf32>
    %233 = vector.extract_strided_slice %70 {offsets = [1, 2, 0], sizes = [8, 8, 128], strides = [1, 1, 1]} : vector<10x10x128xf32> to vector<8x8x128xf32>
    %234 = vector.shape_cast %233 : vector<8x8x128xf32> to vector<64x128xf32>
    %235 = arith.truncf %234 : vector<64x128xf32> to vector<64x128xbf16>
    %c2_169 = arith.constant 2 : index
    %c1_170 = arith.constant 1 : index
    %c2_171 = arith.constant 2 : index
    %c0_172 = arith.constant 0 : index
    %c0_173 = arith.constant 0 : index
    %236 = vector.load %arg5[%c2_169, %c1_170, %c2_171, %c0_172, %c0_173] : memref<3x3x3x128x128xbf16, #tpu.memory_space<vmem>>, vector<1x1x1x128x128xbf16>
    %237 = vector.shape_cast %236 : vector<1x1x1x128x128xbf16> to vector<128x128xbf16>
    %cst_174 = arith.constant dense<0.000000e+00> : vector<64x128xf32>
    %238 = tpu.matmul %235, %237, %cst_174 {dimension_numbers = #tpu.dot_dimension_numbers<[1], [0], [0], [1], [0, 0, 1, 1], [], []>} : vector<64x128xbf16>, vector<128x128xbf16>, vector<64x128xf32> -> vector<64x128xf32>
    %239 = arith.addf %232, %238 : vector<64x128xf32>
    %240 = vector.extract_strided_slice %70 {offsets = [2, 0, 0], sizes = [8, 8, 128], strides = [1, 1, 1]} : vector<10x10x128xf32> to vector<8x8x128xf32>
    %241 = vector.shape_cast %240 : vector<8x8x128xf32> to vector<64x128xf32>
    %242 = arith.truncf %241 : vector<64x128xf32> to vector<64x128xbf16>
    %c2_175 = arith.constant 2 : index
    %c2_176 = arith.constant 2 : index
    %c0_177 = arith.constant 0 : index
    %c0_178 = arith.constant 0 : index
    %c0_179 = arith.constant 0 : index
    %243 = vector.load %arg5[%c2_175, %c2_176, %c0_177, %c0_178, %c0_179] : memref<3x3x3x128x128xbf16, #tpu.memory_space<vmem>>, vector<1x1x1x128x128xbf16>
    %244 = vector.shape_cast %243 : vector<1x1x1x128x128xbf16> to vector<128x128xbf16>
    %cst_180 = arith.constant dense<0.000000e+00> : vector<64x128xf32>
    %245 = tpu.matmul %242, %244, %cst_180 {dimension_numbers = #tpu.dot_dimension_numbers<[1], [0], [0], [1], [0, 0, 1, 1], [], []>} : vector<64x128xbf16>, vector<128x128xbf16>, vector<64x128xf32> -> vector<64x128xf32>
    %246 = arith.addf %239, %245 : vector<64x128xf32>
    %247 = vector.extract_strided_slice %70 {offsets = [2, 1, 0], sizes = [8, 8, 128], strides = [1, 1, 1]} : vector<10x10x128xf32> to vector<8x8x128xf32>
    %248 = vector.shape_cast %247 : vector<8x8x128xf32> to vector<64x128xf32>
    %249 = arith.truncf %248 : vector<64x128xf32> to vector<64x128xbf16>
    %c2_181 = arith.constant 2 : index
    %c2_182 = arith.constant 2 : index
    %c1_183 = arith.constant 1 : index
    %c0_184 = arith.constant 0 : index
    %c0_185 = arith.constant 0 : index
    %250 = vector.load %arg5[%c2_181, %c2_182, %c1_183, %c0_184, %c0_185] : memref<3x3x3x128x128xbf16, #tpu.memory_space<vmem>>, vector<1x1x1x128x128xbf16>
    %251 = vector.shape_cast %250 : vector<1x1x1x128x128xbf16> to vector<128x128xbf16>
    %cst_186 = arith.constant dense<0.000000e+00> : vector<64x128xf32>
    %252 = tpu.matmul %249, %251, %cst_186 {dimension_numbers = #tpu.dot_dimension_numbers<[1], [0], [0], [1], [0, 0, 1, 1], [], []>} : vector<64x128xbf16>, vector<128x128xbf16>, vector<64x128xf32> -> vector<64x128xf32>
    %253 = arith.addf %246, %252 : vector<64x128xf32>
    %254 = vector.extract_strided_slice %70 {offsets = [2, 2, 0], sizes = [8, 8, 128], strides = [1, 1, 1]} : vector<10x10x128xf32> to vector<8x8x128xf32>
    %255 = vector.shape_cast %254 : vector<8x8x128xf32> to vector<64x128xf32>
    %256 = arith.truncf %255 : vector<64x128xf32> to vector<64x128xbf16>
    %c2_187 = arith.constant 2 : index
    %c2_188 = arith.constant 2 : index
    %c2_189 = arith.constant 2 : index
    %c0_190 = arith.constant 0 : index
    %c0_191 = arith.constant 0 : index
    %257 = vector.load %arg5[%c2_187, %c2_188, %c2_189, %c0_190, %c0_191] : memref<3x3x3x128x128xbf16, #tpu.memory_space<vmem>>, vector<1x1x1x128x128xbf16>
    %258 = vector.shape_cast %257 : vector<1x1x1x128x128xbf16> to vector<128x128xbf16>
    %cst_192 = arith.constant dense<0.000000e+00> : vector<64x128xf32>
    %259 = tpu.matmul %256, %258, %cst_192 {dimension_numbers = #tpu.dot_dimension_numbers<[1], [0], [0], [1], [0, 0, 1, 1], [], []>} : vector<64x128xbf16>, vector<128x128xbf16>, vector<64x128xf32> -> vector<64x128xf32>
    %260 = arith.addf %253, %259 : vector<64x128xf32>
    %c0_193 = arith.constant 0 : index
    %c0_194 = arith.constant 0 : index
    %261 = vector.load %arg6[%c0_193, %c0_194] : memref<1x128xf32, #tpu.memory_space<vmem>>, vector<1x128xf32>
    %262 = vector.broadcast %261 : vector<1x128xf32> to vector<64x128xf32>
    %263 = arith.addf %260, %262 : vector<64x128xf32>
    %cst_195 = arith.constant 0.000000e+00 : f32
    %264 = vector.broadcast %cst_195 : f32 to vector<64x128xf32>
    %265 = arith.maximumf %263, %264 : vector<64x128xf32>
    %266 = vector.shape_cast %265 : vector<64x128xf32> to vector<1x1x8x8x128xf32>
    %267 = arith.truncf %266 : vector<1x1x8x8x128xf32> to vector<1x1x8x8x128xbf16>
    %c0_196 = arith.constant 0 : index
    %c0_197 = arith.constant 0 : index
    %c0_198 = arith.constant 0 : index
    %c0_199 = arith.constant 0 : index
    %c0_200 = arith.constant 0 : index
    %268 = vector.load %arg9[%c0_196, %c0_197, %c0_198, %c0_199, %c0_200] : memref<1x1x8x8x128xbf16, #tpu.memory_space<vmem>>, vector<1x1x8x8x128xbf16>
    tpu.vector_store %arg9[%c0_196, %c0_197, %c0_198, %c0_199, %c0_200], %267 {strides = array<i32>} : memref<1x1x8x8x128xbf16, #tpu.memory_space<vmem>>, vector<1x1x8x8x128xbf16>,
    %cst_201 = arith.constant dense<0.000000e+00> : vector<128xf32>
    %269 = vector.multi_reduction <add>, %265, %cst_201 [0] : vector<64x128xf32> to vector<128xf32>
    %270 = vector.shape_cast %269 : vector<128xf32> to vector<1x128xf32>
    %271 = arith.mulf %265, %265 : vector<64x128xf32>
    %cst_202 = arith.constant dense<0.000000e+00> : vector<128xf32>
    %272 = vector.multi_reduction <add>, %271, %cst_202 [0] : vector<64x128xf32> to vector<128xf32>
    %273 = vector.shape_cast %272 : vector<128xf32> to vector<1x128xf32>
    %274 = tpu.concatenate %270, %273 in 0 : vector<1x128xf32>, vector<1x128xf32> -> vector<2x128xf32>
    %275 = vector.shape_cast %274 : vector<2x128xf32> to vector<1x1x2x128xf32>
    %c0_203 = arith.constant 0 : index
    %c0_204 = arith.constant 0 : index
    %c0_205 = arith.constant 0 : index
    %c0_206 = arith.constant 0 : index
    %276 = vector.load %arg10[%c0_203, %c0_204, %c0_205, %c0_206] : memref<1x1x2x128xf32, #tpu.memory_space<vmem>>, vector<1x1x2x128xf32>
    tpu.vector_store %arg10[%c0_203, %c0_204, %c0_205, %c0_206], %275 {strides = array<i32>} : memref<1x1x2x128xf32, #tpu.memory_space<vmem>>, vector<1x1x2x128xf32>,
    return
  }
  func.func @transform_0(%arg0: i32, %arg1: i32) -> (i32, i32, i32, i32, i32) {
    %c0_i32 = arith.constant 0 : i32
    %0 = arith.addi %arg1, %c0_i32 : i32
    %c0_i32_0 = arith.constant 0 : i32
    %c0_i32_1 = arith.constant 0 : i32
    %c0_i32_2 = arith.constant 0 : i32
    %c0_i32_3 = arith.constant 0 : i32
    return %arg0, %0, %c0_i32_0, %c0_i32_1, %c0_i32_2 : i32, i32, i32, i32, i32
  }
  func.func @transform_1(%arg0: i32, %arg1: i32) -> (i32, i32, i32, i32, i32) {
    %c1_i32 = arith.constant 1 : i32
    %0 = arith.addi %arg1, %c1_i32 : i32
    %c0_i32 = arith.constant 0 : i32
    %c0_i32_0 = arith.constant 0 : i32
    %c0_i32_1 = arith.constant 0 : i32
    %c0_i32_2 = arith.constant 0 : i32
    return %arg0, %0, %c0_i32, %c0_i32_0, %c0_i32_1 : i32, i32, i32, i32, i32
  }
  func.func @transform_2(%arg0: i32, %arg1: i32) -> (i32, i32, i32, i32, i32) {
    %c2_i32 = arith.constant 2 : i32
    %0 = arith.addi %arg1, %c2_i32 : i32
    %c0_i32 = arith.constant 0 : i32
    %c0_i32_0 = arith.constant 0 : i32
    %c0_i32_1 = arith.constant 0 : i32
    %c0_i32_2 = arith.constant 0 : i32
    return %arg0, %0, %c0_i32, %c0_i32_0, %c0_i32_1 : i32, i32, i32, i32, i32
  }
  func.func @transform_3(%arg0: i32, %arg1: i32) -> (i32, i32, i32, i32, i32) {
    %c0_i32 = arith.constant 0 : i32
    %c0_i32_0 = arith.constant 0 : i32
    %c0_i32_1 = arith.constant 0 : i32
    %c0_i32_2 = arith.constant 0 : i32
    %c0_i32_3 = arith.constant 0 : i32
    %c0_i32_4 = arith.constant 0 : i32
    return %c0_i32, %c0_i32_0, %c0_i32_1, %c0_i32_2, %c0_i32_3 : i32, i32, i32, i32, i32
  }
  func.func @transform_4(%arg0: i32, %arg1: i32) -> (i32, i32) {
    %c0_i32 = arith.constant 0 : i32
    %c0_i32_0 = arith.constant 0 : i32
    %c0_i32_1 = arith.constant 0 : i32
    return %c0_i32, %c0_i32_0 : i32, i32
  }
  func.func @transform_5(%arg0: i32, %arg1: i32) -> (i32, i32) {
    %c0_i32 = arith.constant 0 : i32
    %c0_i32_0 = arith.constant 0 : i32
    %c0_i32_1 = arith.constant 0 : i32
    return %c0_i32, %c0_i32_0 : i32, i32
  }
  func.func @transform_6(%arg0: i32, %arg1: i32) -> (i32, i32) {
    %c0_i32 = arith.constant 0 : i32
    %c0_i32_0 = arith.constant 0 : i32
    %c0_i32_1 = arith.constant 0 : i32
    return %c0_i32, %c0_i32_0 : i32, i32
  }
  func.func @transform_7(%arg0: i32, %arg1: i32) -> (i32, i32, i32, i32, i32) {
    %c0_i32 = arith.constant 0 : i32
    %c0_i32_0 = arith.constant 0 : i32
    %c0_i32_1 = arith.constant 0 : i32
    %c0_i32_2 = arith.constant 0 : i32
    return %arg0, %arg1, %c0_i32, %c0_i32_0, %c0_i32_1 : i32, i32, i32, i32, i32
  }
  func.func @transform_8(%arg0: i32, %arg1: i32) -> (i32, i32, i32, i32) {
    %c0_i32 = arith.constant 0 : i32
    %c0_i32_0 = arith.constant 0 : i32
    %c0_i32_1 = arith.constant 0 : i32
    return %arg0, %arg1, %c0_i32, %c0_i32_0 : i32, i32, i32, i32
  }
}

module attributes {stable_mosaic.version = 11 : i64} {
  func.func @_conv1x1_stats_kernel(%arg0: i32, %arg1: memref<1x64x128xbf16, #tpu.memory_space<vmem>>, %arg2: memref<128x128xbf16, #tpu.memory_space<vmem>>, %arg3: memref<1x2x128xf32, #tpu.memory_space<vmem>>) attributes {dimension_semantics = [#tpu.dimension_semantics<parallel>], iteration_bounds = array<i64: 16>, scalar_prefetch = 0 : i64, scratch_operands = 0 : i64, tpu.core_type = #tpu.core_type<tc>, window_params = [{transform_indices = @transform_0, window_bounds = array<i64: 1, 64, 128>}, {pipeline_mode = #tpu.pipeline_mode<synchronous>, transform_indices = @transform_1, window_bounds = array<i64: 128, 128>}, {transform_indices = @transform_2, window_bounds = array<i64: 1, 2, 128>}]} {
    %c0 = arith.constant 0 : index
    %c0_0 = arith.constant 0 : index
    %c0_1 = arith.constant 0 : index
    %0 = vector.load %arg1[%c0, %c0_0, %c0_1] : memref<1x64x128xbf16, #tpu.memory_space<vmem>>, vector<1x64x128xbf16>
    %1 = vector.shape_cast %0 : vector<1x64x128xbf16> to vector<64x128xbf16>
    %c0_2 = arith.constant 0 : index
    %c0_3 = arith.constant 0 : index
    %2 = vector.load %arg2[%c0_2, %c0_3] : memref<128x128xbf16, #tpu.memory_space<vmem>>, vector<128x128xbf16>
    %cst = arith.constant dense<0.000000e+00> : vector<64x128xf32>
    %3 = tpu.matmul %1, %2, %cst {dimension_numbers = #tpu.dot_dimension_numbers<[1], [0], [0], [1], [0, 0, 1, 1], [], []>} : vector<64x128xbf16>, vector<128x128xbf16>, vector<64x128xf32> -> vector<64x128xf32>
    %cst_4 = arith.constant dense<0.000000e+00> : vector<128xf32>
    %4 = vector.multi_reduction <add>, %3, %cst_4 [0] : vector<64x128xf32> to vector<128xf32>
    %5 = vector.shape_cast %4 : vector<128xf32> to vector<1x128xf32>
    %6 = arith.mulf %3, %3 : vector<64x128xf32>
    %cst_5 = arith.constant dense<0.000000e+00> : vector<128xf32>
    %7 = vector.multi_reduction <add>, %6, %cst_5 [0] : vector<64x128xf32> to vector<128xf32>
    %8 = vector.shape_cast %7 : vector<128xf32> to vector<1x128xf32>
    %9 = tpu.concatenate %5, %8 in 0 : vector<1x128xf32>, vector<1x128xf32> -> vector<2x128xf32>
    %10 = vector.shape_cast %9 : vector<2x128xf32> to vector<1x2x128xf32>
    %c0_6 = arith.constant 0 : index
    %c0_7 = arith.constant 0 : index
    %c0_8 = arith.constant 0 : index
    %11 = vector.load %arg3[%c0_6, %c0_7, %c0_8] : memref<1x2x128xf32, #tpu.memory_space<vmem>>, vector<1x2x128xf32>
    tpu.vector_store %arg3[%c0_6, %c0_7, %c0_8], %10 {strides = array<i32>} : memref<1x2x128xf32, #tpu.memory_space<vmem>>, vector<1x2x128xf32>,
    return
  }
  func.func @transform_0(%arg0: i32) -> (i32, i32, i32) {
    %c0_i32 = arith.constant 0 : i32
    %c0_i32_0 = arith.constant 0 : i32
    %c0_i32_1 = arith.constant 0 : i32
    return %arg0, %c0_i32, %c0_i32_0 : i32, i32, i32
  }
  func.func @transform_1(%arg0: i32) -> (i32, i32) {
    %c0_i32 = arith.constant 0 : i32
    %c0_i32_0 = arith.constant 0 : i32
    %c0_i32_1 = arith.constant 0 : i32
    return %c0_i32, %c0_i32_0 : i32, i32
  }
  func.func @transform_2(%arg0: i32) -> (i32, i32, i32) {
    %c0_i32 = arith.constant 0 : i32
    %c0_i32_0 = arith.constant 0 : i32
    %c0_i32_1 = arith.constant 0 : i32
    return %arg0, %c0_i32, %c0_i32_0 : i32, i32, i32
  }
}

module attributes {stable_mosaic.version = 11 : i64} {
  func.func @_shortcut_bn_add_relu_kernel(%arg0: i32, %arg1: memref<1x64x128xbf16, #tpu.memory_space<vmem>>, %arg2: memref<1x64x128xbf16, #tpu.memory_space<vmem>>, %arg3: memref<128x128xbf16, #tpu.memory_space<vmem>>, %arg4: memref<1x128xf32, #tpu.memory_space<vmem>>, %arg5: memref<1x128xf32, #tpu.memory_space<vmem>>, %arg6: memref<1x128xf32, #tpu.memory_space<vmem>>, %arg7: memref<1x128xf32, #tpu.memory_space<vmem>>, %arg8: memref<1x64x128xf32, #tpu.memory_space<vmem>>) attributes {dimension_semantics = [#tpu.dimension_semantics<parallel>], iteration_bounds = array<i64: 16>, scalar_prefetch = 0 : i64, scratch_operands = 0 : i64, tpu.core_type = #tpu.core_type<tc>, window_params = [{transform_indices = @transform_0, window_bounds = array<i64: 1, 64, 128>}, {transform_indices = @transform_1, window_bounds = array<i64: 1, 64, 128>}, {pipeline_mode = #tpu.pipeline_mode<synchronous>, transform_indices = @transform_2, window_bounds = array<i64: 128, 128>}, {pipeline_mode = #tpu.pipeline_mode<synchronous>, transform_indices = @transform_3, window_bounds = array<i64: 1, 128>}, {pipeline_mode = #tpu.pipeline_mode<synchronous>, transform_indices = @transform_4, window_bounds = array<i64: 1, 128>}, {pipeline_mode = #tpu.pipeline_mode<synchronous>, transform_indices = @transform_5, window_bounds = array<i64: 1, 128>}, {pipeline_mode = #tpu.pipeline_mode<synchronous>, transform_indices = @transform_6, window_bounds = array<i64: 1, 128>}, {transform_indices = @transform_7, window_bounds = array<i64: 1, 64, 128>}]} {
    %c0 = arith.constant 0 : index
    %c0_0 = arith.constant 0 : index
    %c0_1 = arith.constant 0 : index
    %0 = vector.load %arg1[%c0, %c0_0, %c0_1] : memref<1x64x128xbf16, #tpu.memory_space<vmem>>, vector<1x64x128xbf16>
    %1 = vector.shape_cast %0 : vector<1x64x128xbf16> to vector<64x128xbf16>
    %2 = arith.extf %1 : vector<64x128xbf16> to vector<64x128xf32>
    %c0_2 = arith.constant 0 : index
    %c0_3 = arith.constant 0 : index
    %c0_4 = arith.constant 0 : index
    %3 = vector.load %arg2[%c0_2, %c0_3, %c0_4] : memref<1x64x128xbf16, #tpu.memory_space<vmem>>, vector<1x64x128xbf16>
    %4 = vector.shape_cast %3 : vector<1x64x128xbf16> to vector<64x128xbf16>
    %c0_5 = arith.constant 0 : index
    %c0_6 = arith.constant 0 : index
    %5 = vector.load %arg3[%c0_5, %c0_6] : memref<128x128xbf16, #tpu.memory_space<vmem>>, vector<128x128xbf16>
    %cst = arith.constant dense<0.000000e+00> : vector<64x128xf32>
    %6 = tpu.matmul %4, %5, %cst {dimension_numbers = #tpu.dot_dimension_numbers<[1], [0], [0], [1], [0, 0, 1, 1], [], []>} : vector<64x128xbf16>, vector<128x128xbf16>, vector<64x128xf32> -> vector<64x128xf32>
    %c0_7 = arith.constant 0 : index
    %c0_8 = arith.constant 0 : index
    %7 = vector.load %arg4[%c0_7, %c0_8] : memref<1x128xf32, #tpu.memory_space<vmem>>, vector<1x128xf32>
    %8 = vector.broadcast %7 : vector<1x128xf32> to vector<64x128xf32>
    %9 = arith.mulf %2, %8 : vector<64x128xf32>
    %c0_9 = arith.constant 0 : index
    %c0_10 = arith.constant 0 : index
    %10 = vector.load %arg5[%c0_9, %c0_10] : memref<1x128xf32, #tpu.memory_space<vmem>>, vector<1x128xf32>
    %11 = vector.broadcast %10 : vector<1x128xf32> to vector<64x128xf32>
    %12 = arith.addf %9, %11 : vector<64x128xf32>
    %c0_11 = arith.constant 0 : index
    %c0_12 = arith.constant 0 : index
    %13 = vector.load %arg6[%c0_11, %c0_12] : memref<1x128xf32, #tpu.memory_space<vmem>>, vector<1x128xf32>
    %14 = vector.broadcast %13 : vector<1x128xf32> to vector<64x128xf32>
    %15 = arith.mulf %6, %14 : vector<64x128xf32>
    %16 = arith.addf %12, %15 : vector<64x128xf32>
    %c0_13 = arith.constant 0 : index
    %c0_14 = arith.constant 0 : index
    %17 = vector.load %arg7[%c0_13, %c0_14] : memref<1x128xf32, #tpu.memory_space<vmem>>, vector<1x128xf32>
    %18 = vector.broadcast %17 : vector<1x128xf32> to vector<64x128xf32>
    %19 = arith.addf %16, %18 : vector<64x128xf32>
    %cst_15 = arith.constant 0.000000e+00 : f32
    %20 = vector.broadcast %cst_15 : f32 to vector<64x128xf32>
    %21 = arith.maximumf %19, %20 : vector<64x128xf32>
    %22 = vector.shape_cast %21 : vector<64x128xf32> to vector<1x64x128xf32>
    %c0_16 = arith.constant 0 : index
    %c0_17 = arith.constant 0 : index
    %c0_18 = arith.constant 0 : index
    %23 = vector.load %arg8[%c0_16, %c0_17, %c0_18] : memref<1x64x128xf32, #tpu.memory_space<vmem>>, vector<1x64x128xf32>
    tpu.vector_store %arg8[%c0_16, %c0_17, %c0_18], %22 {strides = array<i32>} : memref<1x64x128xf32, #tpu.memory_space<vmem>>, vector<1x64x128xf32>,
    return
  }
  func.func @transform_0(%arg0: i32) -> (i32, i32, i32) {
    %c0_i32 = arith.constant 0 : i32
    %c0_i32_0 = arith.constant 0 : i32
    %c0_i32_1 = arith.constant 0 : i32
    return %arg0, %c0_i32, %c0_i32_0 : i32, i32, i32
  }
  func.func @transform_1(%arg0: i32) -> (i32, i32, i32) {
    %c0_i32 = arith.constant 0 : i32
    %c0_i32_0 = arith.constant 0 : i32
    %c0_i32_1 = arith.constant 0 : i32
    return %arg0, %c0_i32, %c0_i32_0 : i32, i32, i32
  }
  func.func @transform_2(%arg0: i32) -> (i32, i32) {
    %c0_i32 = arith.constant 0 : i32
    %c0_i32_0 = arith.constant 0 : i32
    %c0_i32_1 = arith.constant 0 : i32
    return %c0_i32, %c0_i32_0 : i32, i32
  }
  func.func @transform_3(%arg0: i32) -> (i32, i32) {
    %c0_i32 = arith.constant 0 : i32
    %c0_i32_0 = arith.constant 0 : i32
    %c0_i32_1 = arith.constant 0 : i32
    return %c0_i32, %c0_i32_0 : i32, i32
  }
  func.func @transform_4(%arg0: i32) -> (i32, i32) {
    %c0_i32 = arith.constant 0 : i32
    %c0_i32_0 = arith.constant 0 : i32
    %c0_i32_1 = arith.constant 0 : i32
    return %c0_i32, %c0_i32_0 : i32, i32
  }
  func.func @transform_5(%arg0: i32) -> (i32, i32) {
    %c0_i32 = arith.constant 0 : i32
    %c0_i32_0 = arith.constant 0 : i32
    %c0_i32_1 = arith.constant 0 : i32
    return %c0_i32, %c0_i32_0 : i32, i32
  }
  func.func @transform_6(%arg0: i32) -> (i32, i32) {
    %c0_i32 = arith.constant 0 : i32
    %c0_i32_0 = arith.constant 0 : i32
    %c0_i32_1 = arith.constant 0 : i32
    return %c0_i32, %c0_i32_0 : i32, i32
  }
  func.func @transform_7(%arg0: i32) -> (i32, i32, i32) {
    %c0_i32 = arith.constant 0 : i32
    %c0_i32_0 = arith.constant 0 : i32
    %c0_i32_1 = arith.constant 0 : i32
    return %arg0, %c0_i32, %c0_i32_0 : i32, i32, i32
  }
}

</mosaic_0001>

<llo_original>
// kernel: residual_block_forward.6
$region0: #{residual_block_forward.6}
  #allocation0 [shape = 'u32[]', space=smem, size = 0x4, offset = 0x4, fixed_abs, tag = 'smem constant byte address 0x4 - core index']
  #allocation1 [shape = 'u32[72,128]{1,0:T(1,128)}', space=vmem, size = 0x9000, scoped, tag = 'internal scratch']
  %s0 = inlined_call_operand.vmem [shape: bf16[16,64,128], index: 0, kind: input, shape index: {}]
  %s1 = inlined_call_operand.vmem [shape: bf16[128,128], index: 1, kind: input, shape index: {}]
  %s2 = inlined_call_operand.vmem [shape: f32[16,2,128], index: 2, kind: output, shape index: {}]
  %s3 = sld [smem:[#allocation0]]
  $region41: #{residual_block_forward.6} parent=0
    _
  %s5 = ssub.s32 1, %s3
  %s6 = scalar_select 0, %s5, %s3
  loop: start=0, step=1, limit=18
  $region2: #{residual_block_forward.6} parent=0 // loop_pre_header
    _
  $region3: #{residual_block_forward.6} parent=0 // loop_header
    %s8 = sphi 0, %s12
    %p9 = scmp.ge.s32.totalorder %s8, 18
    %s18 = sphi 0, %s20
    %s21 = sphi 0, %s18
    %s22 = sphi 0, %s21
    %s38 = sphi 0, %s22
    %s42 = sphi 0, %s42
    %s44 = sphi 0, %s42
    %s45 = sphi 0, %s44
    %s59 = sphi 0, %s45
    %s65 = sphi 0, %s67
    %s68 = sphi 0, %s65
    %s69 = sphi 0, %s68
    %s85 = sphi 0, %s69
  $region4: #{residual_block_forward.6} parent=0 // loop_header_branch
    %11 = sbr.rel (%p9) target = $region8
  $region5: #{residual_block_forward.6} parent=0 // loop_body
    %s13 = ssub.s32 %s8, 1
    %s14 = ssub.s32 %s8, 2
    %s15 = sadd.s32 %s8, 1
    %s16 = ssub.s32 %s8, %s15
    %p17 = scmp.eq.s32.totalorder %s16, 0
    %s19 = sadd.s32 %s18, 1
    %s20 = scalar_select %p17, %s18, %s19
    %p23 = pneg %p17
    %p24 = scmp.eq.s32.totalorder %s8, 15
    %p25 = por %p23, %p24
    %p26 = scmp.ne.s32.totalorder %s18, %s21
    %p27 = scmp.eq.s32.totalorder %s8, 0
    %p28 = por %p26, %p27
    %p29 = scmp.ne.s32.totalorder %s18, %s21
    %p30 = scmp.eq.s32.totalorder %s13, 15
    %p31 = por %p29, %p30
    %p32 = scmp.ne.s32.totalorder %s21, %s22
    %p33 = scmp.eq.s32.totalorder %s13, 0
    %p34 = por %p32, %p33
    %p35 = scmp.ne.s32.totalorder %s21, %s22
    %p36 = scmp.eq.s32.totalorder %s14, 15
    %p37 = por %p35, %p36
    %p39 = scmp.ne.s32.totalorder %s22, %s38
    %p40 = scmp.eq.s32.totalorder %s14, 0
    %p41 = por %p39, %p40
    %s43 = sadd.s32 %s42, 1
    %p46 = scmp.eq.s32.totalorder %s8, 15
    %p47 = scmp.ne.s32.totalorder %s42, %s44
    %p48 = scmp.eq.s32.totalorder %s8, 0
    %p49 = por %p47, %p48
    %p50 = scmp.ne.s32.totalorder %s42, %s44
    %p51 = scmp.eq.s32.totalorder %s13, 15
    %p52 = por %p50, %p51
    %p53 = scmp.ne.s32.totalorder %s44, %s45
    %p54 = scmp.eq.s32.totalorder %s13, 0
    %p55 = por %p53, %p54
    %p56 = scmp.ne.s32.totalorder %s44, %s45
    %p57 = scmp.eq.s32.totalorder %s14, 15
    %p58 = por %p56, %p57
    %p60 = scmp.ne.s32.totalorder %s45, %s59
    %p61 = scmp.eq.s32.totalorder %s14, 0
    %p62 = por %p60, %p61
    %s63 = ssub.s32 %s8, %s15
    %p64 = scmp.eq.s32.totalorder %s63, 0
    %s66 = sadd.s32 %s65, 1
    %s67 = scalar_select %p64, %s65, %s66
    %p70 = pneg %p64
    %p71 = scmp.eq.s32.totalorder %s8, 15
    %p72 = por %p70, %p71
    %p73 = scmp.ne.s32.totalorder %s65, %s68
    %p74 = scmp.eq.s32.totalorder %s8, 0
    %p75 = por %p73, %p74
    %p76 = scmp.ne.s32.totalorder %s65, %s68
    %p77 = scmp.eq.s32.totalorder %s13, 15
    %p78 = por %p76, %p77
    %p79 = scmp.ne.s32.totalorder %s68, %s69
    %p80 = scmp.eq.s32.totalorder %s13, 0
    %p81 = por %p79, %p80
    %p82 = scmp.ne.s32.totalorder %s68, %s69
    %p83 = scmp.eq.s32.totalorder %s14, 15
    %p84 = por %p82, %p83
    %p86 = scmp.ne.s32.totalorder %s69, %s85
    %p87 = scmp.eq.s32.totalorder %s14, 0
    %p88 = por %p86, %p87
    %p89 = scmp.le.s32.totalorder 1, %s8
    %p90 = scmp.lt.s32.totalorder %s8, 17
    %p91 = pnand %p89, %p90
    %p92 = pneg %p91
    // Predicated region
    $region9: #{residual_block_forward.6} parent=5 // pred_check
      _
    $region10: #{residual_block_forward.6} parent=5 // pred_check_branch
      %94 = sbr.rel (%p91) target = $region12
    $region11: #{residual_block_forward.6} parent=5 // pred_region
      %s95 = ssub.s32 %s8, 1
      // Predicated region
      $region13: #{residual_block_forward.6} parent=11 // pred_check
        %p96 = pneg %p55
      $region14: #{residual_block_forward.6} parent=11 // pred_check_branch
        %98 = sbr.rel (%p96) target = $region16
      $region15: #{residual_block_forward.6} parent=11 // pred_region
        _
      $region16: #{residual_block_forward.6} parent=11 // pred_fallthru
        _
    $region12: #{residual_block_forward.6} parent=5 // pred_fallthru
      _
    %p99 = scmp.lt.s32.totalorder %s8, 16
    // Predicated region
    $region17: #{residual_block_forward.6} parent=5 // pred_check
      %p100 = pneg %p99
    $region18: #{residual_block_forward.6} parent=5 // pred_check_branch
      %102 = sbr.rel (%p100) target = $region20
    $region19: #{residual_block_forward.6} parent=5 // pred_region
      // Predicated region
      $region21: #{residual_block_forward.6} parent=19 // pred_check
        %p103 = pneg %p28
      $region22: #{residual_block_forward.6} parent=19 // pred_check_branch
        %105 = sbr.rel (%p103) target = $region24
      $region23: #{residual_block_forward.6} parent=19 // pred_region
        %p106 = scmp.lt.s32.totalorder %s8, 15
        %s107 = scalar_select %p106, %s8, 15
        %s108 = smul.addr %s107, 8
        %s109 = smul.addr %s108, 4
        %s110 = scalar_lea.vmem %s0, %s109
      $region24: #{residual_block_forward.6} parent=19 // pred_fallthru
        _
    $region20: #{residual_block_forward.6} parent=5 // pred_fallthru
      _
    %p111 = scmp.le.s32.totalorder 1, %s8
    %p112 = scmp.lt.s32.totalorder %s8, 17
    %p113 = pnand %p111, %p112
    %p114 = pneg %p113
    // Predicated region
    $region25: #{residual_block_forward.6} parent=5 // pred_check
      _
    $region26: #{residual_block_forward.6} parent=5 // pred_check_branch
      %116 = sbr.rel (%p113) target = $region28
    $region27: #{residual_block_forward.6} parent=5 // pred_region
      %s117 = ssub.s32 %s8, 1
      %p118 = scmp.lt.s32.totalorder %s13, 15
      %s119 = scalar_select %p118, %s13, 15
      %s120 = smul.addr %s119, 8
      %s121 = smul.addr %s120, 4
      %s122 = scalar_lea.vmem %s0, %s121
      %p123 = pneg %p34
      %p124 = pneg %p31
      %p125 = pneg %p55
      %p126 = pneg %p52
      %p127 = pneg %p81
      %p128 = pneg %p78
      %p129 = scmp.lt.s32.totalorder %s13, 15
      %s130 = scalar_select %p129, %s13, 15
      %s131 = smul.addr %s130, 2
      %s132 = scalar_lea.vmem %s2, %s131
      %p133 = scmp.lt.s32.totalorder %s13, 15
      %s134 = scalar_select %p133, %s13, 15
      %s135 = smul.addr %s134, 8
      %s136 = smul.addr %s135, 4
      %s137 = scalar_lea.vmem %s0, %s136
      %p138 = scmp.lt.s32.totalorder %s13, 15
      %s139 = scalar_select %p138, %s13, 15
      %s140 = smul.addr %s139, 2
      %s141 = scalar_lea.vmem %s2, %s140
      %v142 = vld [vmem:[%s137] sm:$0xf]
      %v143 = vld [vmem:[%s137 + $0x4] sm:$0xf]
      %v144 = vld [vmem:[%s137 + $0x8] sm:$0xf]
      %v145 = vld [vmem:[%s137 + $0xc] sm:$0xf]
      %v146 = vld [vmem:[%s137 + $0x10] sm:$0xf]
      %v147 = vld [vmem:[%s137 + $0x14] sm:$0xf]
      %v148 = vld [vmem:[%s137 + $0x18] sm:$0xf]
      %v149 = vld [vmem:[%s137 + $0x1c] sm:$0xf]
      %v150 = vld [vmem:[%s1] sm:$0xf]
      %v151 = vld [vmem:[%s1 + $0x4] sm:$0xf]
      %v152 = vld [vmem:[%s1 + $0x8] sm:$0xf]
      %v153 = vld [vmem:[%s1 + $0xc] sm:$0xf]
      %v154 = vld [vmem:[%s1 + $0x10] sm:$0xf]
      %v155 = vld [vmem:[%s1 + $0x14] sm:$0xf]
      %v156 = vld [vmem:[%s1 + $0x18] sm:$0xf]
      %v157 = vld [vmem:[%s1 + $0x1c] sm:$0xf]
      %v158 = vld [vmem:[%s1 + $0x20] sm:$0xf]
      %v159 = vld [vmem:[%s1 + $0x24] sm:$0xf]
      %v160 = vld [vmem:[%s1 + $0x28] sm:$0xf]
      %v161 = vld [vmem:[%s1 + $0x2c] sm:$0xf]
      %v162 = vld [vmem:[%s1 + $0x30] sm:$0xf]
      %v163 = vld [vmem:[%s1 + $0x34] sm:$0xf]
      %v164 = vld [vmem:[%s1 + $0x38] sm:$0xf]
      %v165 = vld [vmem:[%s1 + $0x3c] sm:$0xf]
      %v174 = vunpack.c.l.b16 %v142
      %v175 = vunpack.c.l.b16 %v143
      %v176 = vunpack.c.l.b16 %v144
      %v177 = vunpack.c.l.b16 %v145
      %v178 = vunpack.c.l.b16 %v146
      %v179 = vunpack.c.l.b16 %v147
      %v180 = vunpack.c.l.b16 %v148
      %v181 = vunpack.c.l.b16 %v149
      %v182 = vpack.c.b16 %v175, %v174
      %v183 = vpack.c.b16 %v177, %v176
      %v184 = vpack.c.b16 %v179, %v178
      %v185 = vpack.c.b16 %v181, %v180
      %v206 = vunpack.c.l.b16 %v150
      %v207 = vunpack.c.l.b16 %v151
      %v208 = vunpack.c.l.b16 %v152
      %v209 = vunpack.c.l.b16 %v153
      %v210 = vunpack.c.l.b16 %v154
      %v211 = vunpack.c.l.b16 %v155
      %v212 = vunpack.c.l.b16 %v156
      %v213 = vunpack.c.l.b16 %v157
      %v214 = vunpack.c.l.b16 %v158
      %v215 = vunpack.c.l.b16 %v159
      %v216 = vunpack.c.l.b16 %v160
      %v217 = vunpack.c.l.b16 %v161
      %v218 = vunpack.c.l.b16 %v162
      %v219 = vunpack.c.l.b16 %v163
      %v220 = vunpack.c.l.b16 %v164
      %v221 = vunpack.c.l.b16 %v165
      %v222 = vpack.c.b16 %v207, %v206
      %v223 = vpack.c.b16 %v209, %v208
      %v224 = vpack.c.b16 %v211, %v210
      %v225 = vpack.c.b16 %v213, %v212
      %v226 = vpack.c.b16 %v215, %v214
      %v227 = vpack.c.b16 %v217, %v216
      %v228 = vpack.c.b16 %v219, %v218
      %v229 = vpack.c.b16 %v221, %v220
      %238 = vmatpush.bf16.msra.mxu0 %v229
      %239 = vmatpush.bf16.msra.mxu0 %v228
      %240 = vmatpush.bf16.msra.mxu0 %v227
      %241 = vmatpush.bf16.msra.mxu0 %v226
      %242 = vmatpush.bf16.msra.mxu0 %v225
      %243 = vmatpush.bf16.msra.mxu0 %v224
      %244 = vmatpush.bf16.msra.mxu0 %v223
      %245 = vmatpush.bf16.msra.mxu0 %v222
      %246 = vmatmul.bf16.gmra.mxu0 %v182
      %v247 = vpop.f32.mrf.mxu0
      %v248 = vadd.f32 0.0, %v247
      %v249 = vpop.f32.mrf.mxu0
      %v250 = vadd.f32 0.0, %v249
      %251 = vmatmul.bf16.gmra.mxu0 %v183
      %v252 = vpop.f32.mrf.mxu0
      %v253 = vadd.f32 0.0, %v252
      %v254 = vpop.f32.mrf.mxu0
      %v255 = vadd.f32 0.0, %v254
      %256 = vmatmul.bf16.gmra.mxu0 %v184
      %v257 = vpop.f32.mrf.mxu0
      %v258 = vadd.f32 0.0, %v257
      %v259 = vpop.f32.mrf.mxu0
      %v260 = vadd.f32 0.0, %v259
      %261 = vmatmul.bf16.gmra.mxu0 %v185
      %v262 = vpop.f32.mrf.mxu0
      %v263 = vadd.f32 0.0, %v262
      %v264 = vpop.f32.mrf.mxu0
      %v265 = vadd.f32 0.0, %v264
      %266 = vdwg.mxu0
      %v267 = vadd.f32 %v248, %v250
      %v268 = vadd.f32 %v267, %v253
      %v269 = vadd.f32 %v268, %v255
      %v270 = vadd.f32 %v269, %v258
      %v271 = vadd.f32 %v270, %v260
      %v272 = vadd.f32 %v271, %v263
      %v273 = vadd.f32 %v272, %v265
      %v274 = vrot.slane %v273, 4
      %v275 = vadd.f32 %v273, %v274
      %v276 = vrot.slane %v275, 2
      %v277 = vadd.f32 %v275, %v276
      %v278 = vrot.slane %v277, 1
      %v279 = vadd.f32 %v277, %v278
      %v280 = vmul.f32 %v248, %v248
      %v281 = vmul.f32 %v250, %v250
      %v282 = vmul.f32 %v253, %v253
      %v283 = vmul.f32 %v255, %v255
      %v284 = vmul.f32 %v258, %v258
      %v285 = vmul.f32 %v260, %v260
      %v286 = vmul.f32 %v263, %v263
      %v287 = vmul.f32 %v265, %v265
      %v288 = vadd.f32 %v280, %v281
      %v289 = vadd.f32 %v288, %v282
      %v290 = vadd.f32 %v289, %v283
      %v291 = vadd.f32 %v290, %v284
      %v292 = vadd.f32 %v291, %v285
      %v293 = vadd.f32 %v292, %v286
      %v294 = vadd.f32 %v293, %v287
      %v295 = vrot.slane %v294, 4
      %v296 = vadd.f32 %v294, %v295
      %v297 = vrot.slane %v296, 2
      %v298 = vadd.f32 %v296, %v297
      %v299 = vrot.slane %v298, 1
      %v300 = vadd.f32 %v298, %v299
      %vm301 = vcmask 1040384
      %v302 = vsel %vm301, %v279, %v300
      %303 = vst [vmem:[%s141] sm:$0x3] %v302
      %p304 = scmp.lt.s32.totalorder %s13, 15
      %s305 = scalar_select %p304, %s13, 15
      %s306 = smul.addr %s305, 2
      %s307 = scalar_lea.vmem %s2, %s306
      // Predicated region
      $region29: #{residual_block_forward.6} parent=27 // pred_check
        %p308 = pneg %p78
      $region30: #{residual_block_forward.6} parent=27 // pred_check_branch
        %310 = sbr.rel (%p308) target = $region32
      $region31: #{residual_block_forward.6} parent=27 // pred_region
        _
      $region32: #{residual_block_forward.6} parent=27 // pred_fallthru
        _
    $region28: #{residual_block_forward.6} parent=5 // pred_fallthru
      _
    %p311 = scmp.le.s32.totalorder 2, %s8
    // Predicated region
    $region33: #{residual_block_forward.6} parent=5 // pred_check
      %p312 = pneg %p311
    $region34: #{residual_block_forward.6} parent=5 // pred_check_branch
      %314 = sbr.rel (%p312) target = $region36
    $region35: #{residual_block_forward.6} parent=5 // pred_region
      %s315 = ssub.s32 %s8, 2
      // Predicated region
      $region37: #{residual_block_forward.6} parent=35 // pred_check
        %p316 = pneg %p84
      $region38: #{residual_block_forward.6} parent=35 // pred_check_branch
        %318 = sbr.rel (%p316) target = $region40
      $region39: #{residual_block_forward.6} parent=35 // pred_region
        %p319 = scmp.lt.s32.totalorder %s14, 15
        %s320 = scalar_select %p319, %s14, 15
        %s321 = smul.addr %s320, 2
        %s322 = scalar_lea.vmem %s2, %s321
      $region40: #{residual_block_forward.6} parent=35 // pred_fallthru
        _
    $region36: #{residual_block_forward.6} parent=5 // pred_fallthru
      _
  $region6: #{residual_block_forward.6} parent=0 // loop_footer
    %s12 = sadd.s32 1, %s8
  $region7: #{residual_block_forward.6} parent=0 // loop_footer_branch
    %7 = sbr.rel target = $region3
  $region8: #{residual_block_forward.6} parent=0 // loop_exit
    _

// kernel: residual_block_forward.7
$region0: #{residual_block_forward.7}
  #allocation0 [shape = 'u32[]', space=smem, size = 0x4, offset = 0x4, fixed_abs, tag = 'smem constant byte address 0x4 - core index']
  #allocation1 [shape = 'u32[72,128]{1,0:T(1,128)}', space=vmem, size = 0x9000, scoped, tag = 'internal scratch']
  %s0 = inlined_call_operand.vmem [shape: bf16[16,64,128], index: 0, kind: input, shape index: {}]
  %s1 = inlined_call_operand.vmem [shape: bf16[16,64,128], index: 1, kind: input, shape index: {}]
  %s2 = inlined_call_operand.vmem [shape: bf16[128,128], index: 2, kind: input, shape index: {}]
  %s3 = inlined_call_operand.vmem [shape: f32[1,128], index: 3, kind: input, shape index: {}]
  %s4 = inlined_call_operand.vmem [shape: f32[1,128], index: 4, kind: input, shape index: {}]
  %s5 = inlined_call_operand.vmem [shape: f32[1,128], index: 5, kind: input, shape index: {}]
  %s6 = inlined_call_operand.vmem [shape: f32[1,128], index: 6, kind: input, shape index: {}]
  %s7 = inlined_call_operand.vmem [shape: f32[16,64,128], index: 7, kind: output, shape index: {}]
  %s8 = sld [smem:[#allocation0]]
  $region61: #{residual_block_forward.7} parent=0
    _
  %s10 = ssub.s32 1, %s8
  %s11 = scalar_select 0, %s10, %s8
  loop: start=0, step=1, limit=18
  $region2: #{residual_block_forward.7} parent=0 // loop_pre_header
    _
  $region3: #{residual_block_forward.7} parent=0 // loop_header
    %s13 = sphi 0, %s17
    %p14 = scmp.ge.s32.totalorder %s13, 18
    %s23 = sphi 0, %s25
    %s26 = sphi 0, %s23
    %s27 = sphi 0, %s26
    %s43 = sphi 0, %s27
    %s49 = sphi 0, %s51
    %s52 = sphi 0, %s49
    %s53 = sphi 0, %s52
    %s69 = sphi 0, %s53
    %s73 = sphi 0, %s73
    %s75 = sphi 0, %s73
    %s76 = sphi 0, %s75
    %s90 = sphi 0, %s76
    %s94 = sphi 0, %s94
    %s96 = sphi 0, %s94
    %s97 = sphi 0, %s96
    %s111 = sphi 0, %s97
    %s115 = sphi 0, %s115
    %s117 = sphi 0, %s115
    %s118 = sphi 0, %s117
    %s132 = sphi 0, %s118
    %s136 = sphi 0, %s136
    %s138 = sphi 0, %s136
    %s139 = sphi 0, %s138
    %s153 = sphi 0, %s139
    %s157 = sphi 0, %s157
    %s159 = sphi 0, %s157
    %s160 = sphi 0, %s159
    %s174 = sphi 0, %s160
    %s180 = sphi 0, %s182
    %s183 = sphi 0, %s180
    %s184 = sphi 0, %s183
    %s200 = sphi 0, %s184
  $region4: #{residual_block_forward.7} parent=0 // loop_header_branch
    %16 = sbr.rel (%p14) target = $region8
  $region5: #{residual_block_forward.7} parent=0 // loop_body
    %s18 = ssub.s32 %s13, 1
    %s19 = ssub.s32 %s13, 2
    %s20 = sadd.s32 %s13, 1
    %s21 = ssub.s32 %s13, %s20
    %p22 = scmp.eq.s32.totalorder %s21, 0
    %s24 = sadd.s32 %s23, 1
    %s25 = scalar_select %p22, %s23, %s24
    %p28 = pneg %p22
    %p29 = scmp.eq.s32.totalorder %s13, 15
    %p30 = por %p28, %p29
    %p31 = scmp.ne.s32.totalorder %s23, %s26
    %p32 = scmp.eq.s32.totalorder %s13, 0
    %p33 = por %p31, %p32
    %p34 = scmp.ne.s32.totalorder %s23, %s26
    %p35 = scmp.eq.s32.totalorder %s18, 15
    %p36 = por %p34, %p35
    %p37 = scmp.ne.s32.totalorder %s26, %s27
    %p38 = scmp.eq.s32.totalorder %s18, 0
    %p39 = por %p37, %p38
    %p40 = scmp.ne.s32.totalorder %s26, %s27
    %p41 = scmp.eq.s32.totalorder %s19, 15
    %p42 = por %p40, %p41
    %p44 = scmp.ne.s32.totalorder %s27, %s43
    %p45 = scmp.eq.s32.totalorder %s19, 0
    %p46 = por %p44, %p45
    %s47 = ssub.s32 %s13, %s20
    %p48 = scmp.eq.s32.totalorder %s47, 0
    %s50 = sadd.s32 %s49, 1
    %s51 = scalar_select %p48, %s49, %s50
    %p54 = pneg %p48
    %p55 = scmp.eq.s32.totalorder %s13, 15
    %p56 = por %p54, %p55
    %p57 = scmp.ne.s32.totalorder %s49, %s52
    %p58 = scmp.eq.s32.totalorder %s13, 0
    %p59 = por %p57, %p58
    %p60 = scmp.ne.s32.totalorder %s49, %s52
    %p61 = scmp.eq.s32.totalorder %s18, 15
    %p62 = por %p60, %p61
    %p63 = scmp.ne.s32.totalorder %s52, %s53
    %p64 = scmp.eq.s32.totalorder %s18, 0
    %p65 = por %p63, %p64
    %p66 = scmp.ne.s32.totalorder %s52, %s53
    %p67 = scmp.eq.s32.totalorder %s19, 15
    %p68 = por %p66, %p67
    %p70 = scmp.ne.s32.totalorder %s53, %s69
    %p71 = scmp.eq.s32.totalorder %s19, 0
    %p72 = por %p70, %p71
    %s74 = sadd.s32 %s73, 1
    %p77 = scmp.eq.s32.totalorder %s13, 15
    %p78 = scmp.ne.s32.totalorder %s73, %s75
    %p79 = scmp.eq.s32.totalorder %s13, 0
    %p80 = por %p78, %p79
    %p81 = scmp.ne.s32.totalorder %s73, %s75
    %p82 = scmp.eq.s32.totalorder %s18, 15
    %p83 = por %p81, %p82
    %p84 = scmp.ne.s32.totalorder %s75, %s76
    %p85 = scmp.eq.s32.totalorder %s18, 0
    %p86 = por %p84, %p85
    %p87 = scmp.ne.s32.totalorder %s75, %s76
    %p88 = scmp.eq.s32.totalorder %s19, 15
    %p89 = por %p87, %p88
    %p91 = scmp.ne.s32.totalorder %s76, %s90
    %p92 = scmp.eq.s32.totalorder %s19, 0
    %p93 = por %p91, %p92
    %s95 = sadd.s32 %s94, 1
    %p98 = scmp.eq.s32.totalorder %s13, 15
    %p99 = scmp.ne.s32.totalorder %s94, %s96
    %p100 = scmp.eq.s32.totalorder %s13, 0
    %p101 = por %p99, %p100
    %p102 = scmp.ne.s32.totalorder %s94, %s96
    %p103 = scmp.eq.s32.totalorder %s18, 15
    %p104 = por %p102, %p103
    %p105 = scmp.ne.s32.totalorder %s96, %s97
    %p106 = scmp.eq.s32.totalorder %s18, 0
    %p107 = por %p105, %p106
    %p108 = scmp.ne.s32.totalorder %s96, %s97
    %p109 = scmp.eq.s32.totalorder %s19, 15
    %p110 = por %p108, %p109
    %p112 = scmp.ne.s32.totalorder %s97, %s111
    %p113 = scmp.eq.s32.totalorder %s19, 0
    %p114 = por %p112, %p113
    %s116 = sadd.s32 %s115, 1
    %p119 = scmp.eq.s32.totalorder %s13, 15
    %p120 = scmp.ne.s32.totalorder %s115, %s117
    %p121 = scmp.eq.s32.totalorder %s13, 0
    %p122 = por %p120, %p121
    %p123 = scmp.ne.s32.totalorder %s115, %s117
    %p124 = scmp.eq.s32.totalorder %s18, 15
    %p125 = por %p123, %p124
    %p126 = scmp.ne.s32.totalorder %s117, %s118
    %p127 = scmp.eq.s32.totalorder %s18, 0
    %p128 = por %p126, %p127
    %p129 = scmp.ne.s32.totalorder %s117, %s118
    %p130 = scmp.eq.s32.totalorder %s19, 15
    %p131 = por %p129, %p130
    %p133 = scmp.ne.s32.totalorder %s118, %s132
    %p134 = scmp.eq.s32.totalorder %s19, 0
    %p135 = por %p133, %p134
    %s137 = sadd.s32 %s136, 1
    %p140 = scmp.eq.s32.totalorder %s13, 15
    %p141 = scmp.ne.s32.totalorder %s136, %s138
    %p142 = scmp.eq.s32.totalorder %s13, 0
    %p143 = por %p141, %p142
    %p144 = scmp.ne.s32.totalorder %s136, %s138
    %p145 = scmp.eq.s32.totalorder %s18, 15
    %p146 = por %p144, %p145
    %p147 = scmp.ne.s32.totalorder %s138, %s139
    %p148 = scmp.eq.s32.totalorder %s18, 0
    %p149 = por %p147, %p148
    %p150 = scmp.ne.s32.totalorder %s138, %s139
    %p151 = scmp.eq.s32.totalorder %s19, 15
    %p152 = por %p150, %p151
    %p154 = scmp.ne.s32.totalorder %s139, %s153
    %p155 = scmp.eq.s32.totalorder %s19, 0
    %p156 = por %p154, %p155
    %s158 = sadd.s32 %s157, 1
    %p161 = scmp.eq.s32.totalorder %s13, 15
    %p162 = scmp.ne.s32.totalorder %s157, %s159
    %p163 = scmp.eq.s32.totalorder %s13, 0
    %p164 = por %p162, %p163
    %p165 = scmp.ne.s32.totalorder %s157, %s159
    %p166 = scmp.eq.s32.totalorder %s18, 15
    %p167 = por %p165, %p166
    %p168 = scmp.ne.s32.totalorder %s159, %s160
    %p169 = scmp.eq.s32.totalorder %s18, 0
    %p170 = por %p168, %p169
    %p171 = scmp.ne.s32.totalorder %s159, %s160
    %p172 = scmp.eq.s32.totalorder %s19, 15
    %p173 = por %p171, %p172
    %p175 = scmp.ne.s32.totalorder %s160, %s174
    %p176 = scmp.eq.s32.totalorder %s19, 0
    %p177 = por %p175, %p176
    %s178 = ssub.s32 %s13, %s20
    %p179 = scmp.eq.s32.totalorder %s178, 0
    %s181 = sadd.s32 %s180, 1
    %s182 = scalar_select %p179, %s180, %s181
    %p185 = pneg %p179
    %p186 = scmp.eq.s32.totalorder %s13, 15
    %p187 = por %p185, %p186
    %p188 = scmp.ne.s32.totalorder %s180, %s183
    %p189 = scmp.eq.s32.totalorder %s13, 0
    %p190 = por %p188, %p189
    %p191 = scmp.ne.s32.totalorder %s180, %s183
    %p192 = scmp.eq.s32.totalorder %s18, 15
    %p193 = por %p191, %p192
    %p194 = scmp.ne.s32.totalorder %s183, %s184
    %p195 = scmp.eq.s32.totalorder %s18, 0
    %p196 = por %p194, %p195
    %p197 = scmp.ne.s32.totalorder %s183, %s184
    %p198 = scmp.eq.s32.totalorder %s19, 15
    %p199 = por %p197, %p198
    %p201 = scmp.ne.s32.totalorder %s184, %s200
    %p202 = scmp.eq.s32.totalorder %s19, 0
    %p203 = por %p201, %p202
    %p204 = scmp.le.s32.totalorder 1, %s13
    %p205 = scmp.lt.s32.totalorder %s13, 17
    %p206 = pnand %p204, %p205
    %p207 = pneg %p206
    // Predicated region
    $region9: #{residual_block_forward.7} parent=5 // pred_check
      _
    $region10: #{residual_block_forward.7} parent=5 // pred_check_branch
      %209 = sbr.rel (%p206) target = $region12
    $region11: #{residual_block_forward.7} parent=5 // pred_region
      %s210 = ssub.s32 %s13, 1
      // Predicated region
      $region13: #{residual_block_forward.7} parent=11 // pred_check
        %p211 = pneg %p86
      $region14: #{residual_block_forward.7} parent=11 // pred_check_branch
        %213 = sbr.rel (%p211) target = $region16
      $region15: #{residual_block_forward.7} parent=11 // pred_region
        _
      $region16: #{residual_block_forward.7} parent=11 // pred_fallthru
        _
      // Predicated region
      $region17: #{residual_block_forward.7} parent=11 // pred_check
        %p214 = pneg %p107
      $region18: #{residual_block_forward.7} parent=11 // pred_check_branch
        %216 = sbr.rel (%p214) target = $region20
      $region19: #{residual_block_forward.7} parent=11 // pred_region
        _
      $region20: #{residual_block_forward.7} parent=11 // pred_fallthru
        _
      // Predicated region
      $region21: #{residual_block_forward.7} parent=11 // pred_check
        %p217 = pneg %p128
      $region22: #{residual_block_forward.7} parent=11 // pred_check_branch
        %219 = sbr.rel (%p217) target = $region24
      $region23: #{residual_block_forward.7} parent=11 // pred_region
        _
      $region24: #{residual_block_forward.7} parent=11 // pred_fallthru
        _
      // Predicated region
      $region25: #{residual_block_forward.7} parent=11 // pred_check
        %p220 = pneg %p149
      $region26: #{residual_block_forward.7} parent=11 // pred_check_branch
        %222 = sbr.rel (%p220) target = $region28
      $region27: #{residual_block_forward.7} parent=11 // pred_region
        _
      $region28: #{residual_block_forward.7} parent=11 // pred_fallthru
        _
      // Predicated region
      $region29: #{residual_block_forward.7} parent=11 // pred_check
        %p223 = pneg %p170
      $region30: #{residual_block_forward.7} parent=11 // pred_check_branch
        %225 = sbr.rel (%p223) target = $region32
      $region31: #{residual_block_forward.7} parent=11 // pred_region
        _
      $region32: #{residual_block_forward.7} parent=11 // pred_fallthru
        _
    $region12: #{residual_block_forward.7} parent=5 // pred_fallthru
      _
    %p226 = scmp.lt.s32.totalorder %s13, 16
    // Predicated region
    $region33: #{residual_block_forward.7} parent=5 // pred_check
      %p227 = pneg %p226
    $region34: #{residual_block_forward.7} parent=5 // pred_check_branch
      %229 = sbr.rel (%p227) target = $region36
    $region35: #{residual_block_forward.7} parent=5 // pred_region
      // Predicated region
      $region37: #{residual_block_forward.7} parent=35 // pred_check
        %p230 = pneg %p33
      $region38: #{residual_block_forward.7} parent=35 // pred_check_branch
        %232 = sbr.rel (%p230) target = $region40
      $region39: #{residual_block_forward.7} parent=35 // pred_region
        %p233 = scmp.lt.s32.totalorder %s13, 15
        %s234 = scalar_select %p233, %s13, 15
        %s235 = smul.addr %s234, 8
        %s236 = smul.addr %s235, 4
        %s237 = scalar_lea.vmem %s0, %s236
      $region40: #{residual_block_forward.7} parent=35 // pred_fallthru
        _
      // Predicated region
      $region41: #{residual_block_forward.7} parent=35 // pred_check
        %p238 = pneg %p59
      $region42: #{residual_block_forward.7} parent=35 // pred_check_branch
        %240 = sbr.rel (%p238) target = $region44
      $region43: #{residual_block_forward.7} parent=35 // pred_region
        %p241 = scmp.lt.s32.totalorder %s13, 15
        %s242 = scalar_select %p241, %s13, 15
        %s243 = smul.addr %s242, 8
        %s244 = smul.addr %s243, 4
        %s245 = scalar_lea.vmem %s1, %s244
      $region44: #{residual_block_forward.7} parent=35 // pred_fallthru
        _
    $region36: #{residual_block_forward.7} parent=5 // pred_fallthru
      _
    %p246 = scmp.le.s32.totalorder 1, %s13
    %p247 = scmp.lt.s32.totalorder %s13, 17
    %p248 = pnand %p246, %p247
    %p249 = pneg %p248
    // Predicated region
    $region45: #{residual_block_forward.7} parent=5 // pred_check
      _
    $region46: #{residual_block_forward.7} parent=5 // pred_check_branch
      %251 = sbr.rel (%p248) target = $region48
    $region47: #{residual_block_forward.7} parent=5 // pred_region
      %s252 = ssub.s32 %s13, 1
      %p253 = scmp.lt.s32.totalorder %s18, 15
      %s254 = scalar_select %p253, %s18, 15
      %s255 = smul.addr %s254, 8
      %s256 = smul.addr %s255, 4
      %s257 = scalar_lea.vmem %s0, %s256
      %p258 = pneg %p39
      %p259 = pneg %p36
      %p260 = scmp.lt.s32.totalorder %s18, 15
      %s261 = scalar_select %p260, %s18, 15
      %s262 = smul.addr %s261, 8
      %s263 = smul.addr %s262, 4
      %s264 = scalar_lea.vmem %s1, %s263
      %p265 = pneg %p65
      %p266 = pneg %p62
      %p267 = pneg %p86
      %p268 = pneg %p83
      %p269 = pneg %p107
      %p270 = pneg %p104
      %p271 = pneg %p128
      %p272 = pneg %p125
      %p273 = pneg %p149
      %p274 = pneg %p146
      %p275 = pneg %p170
      %p276 = pneg %p167
      %p277 = pneg %p196
      %p278 = pneg %p193
      %p279 = scmp.lt.s32.totalorder %s18, 15
      %s280 = scalar_select %p279, %s18, 15
      %s281 = smul.addr %s280, 8
      %s282 = smul.addr %s281, 8
      %s283 = scalar_lea.vmem %s7, %s282
      %p284 = scmp.lt.s32.totalorder %s18, 15
      %s285 = scalar_select %p284, %s18, 15
      %s286 = smul.addr %s285, 8
      %s287 = smul.addr %s286, 4
      %s288 = scalar_lea.vmem %s0, %s287
      %p289 = scmp.lt.s32.totalorder %s18, 15
      %s290 = scalar_select %p289, %s18, 15
      %s291 = smul.addr %s290, 8
      %s292 = smul.addr %s291, 4
      %s293 = scalar_lea.vmem %s1, %s292
      %p294 = scmp.lt.s32.totalorder %s18, 15
      %s295 = scalar_select %p294, %s18, 15
      %s296 = smul.addr %s295, 8
      %s297 = smul.addr %s296, 8
      %s298 = scalar_lea.vmem %s7, %s297
      %v299 = vld [vmem:[%s288] sm:$0xf]
      %v300 = vld [vmem:[%s288 + $0x4] sm:$0xf]
      %v301 = vld [vmem:[%s288 + $0x8] sm:$0xf]
      %v302 = vld [vmem:[%s288 + $0xc] sm:$0xf]
      %v303 = vld [vmem:[%s288 + $0x10] sm:$0xf]
      %v304 = vld [vmem:[%s288 + $0x14] sm:$0xf]
      %v305 = vld [vmem:[%s288 + $0x18] sm:$0xf]
      %v306 = vld [vmem:[%s288 + $0x1c] sm:$0xf]
      %v307 = vunpack.c.l.bf16 %v299
      %v308 = vunpack.c.l.bf16 %v300
      %v309 = vunpack.c.l.bf16 %v301
      %v310 = vunpack.c.l.bf16 %v302
      %v311 = vunpack.c.l.bf16 %v303
      %v312 = vunpack.c.l.bf16 %v304
      %v313 = vunpack.c.l.bf16 %v305
      %v314 = vunpack.c.l.bf16 %v306
      %v315 = vld [vmem:[%s293] sm:$0xf]
      %v316 = vld [vmem:[%s293 + $0x4] sm:$0xf]
      %v317 = vld [vmem:[%s293 + $0x8] sm:$0xf]
      %v318 = vld [vmem:[%s293 + $0xc] sm:$0xf]
      %v319 = vld [vmem:[%s293 + $0x10] sm:$0xf]
      %v320 = vld [vmem:[%s293 + $0x14] sm:$0xf]
      %v321 = vld [vmem:[%s293 + $0x18] sm:$0xf]
      %v322 = vld [vmem:[%s293 + $0x1c] sm:$0xf]
      %v323 = vld [vmem:[%s2] sm:$0xf]
      %v324 = vld [vmem:[%s2 + $0x4] sm:$0xf]
      %v325 = vld [vmem:[%s2 + $0x8] sm:$0xf]
      %v326 = vld [vmem:[%s2 + $0xc] sm:$0xf]
      %v327 = vld [vmem:[%s2 + $0x10] sm:$0xf]
      %v328 = vld [vmem:[%s2 + $0x14] sm:$0xf]
      %v329 = vld [vmem:[%s2 + $0x18] sm:$0xf]
      %v330 = vld [vmem:[%s2 + $0x1c] sm:$0xf]
      %v331 = vld [vmem:[%s2 + $0x20] sm:$0xf]
      %v332 = vld [vmem:[%s2 + $0x24] sm:$0xf]
      %v333 = vld [vmem:[%s2 + $0x28] sm:$0xf]
      %v334 = vld [vmem:[%s2 + $0x2c] sm:$0xf]
      %v335 = vld [vmem:[%s2 + $0x30] sm:$0xf]
      %v336 = vld [vmem:[%s2 + $0x34] sm:$0xf]
      %v337 = vld [vmem:[%s2 + $0x38] sm:$0xf]
      %v338 = vld [vmem:[%s2 + $0x3c] sm:$0xf]
      %v347 = vunpack.c.l.b16 %v315
      %v348 = vunpack.c.l.b16 %v316
      %v349 = vunpack.c.l.b16 %v317
      %v350 = vunpack.c.l.b16 %v318
      %v351 = vunpack.c.l.b16 %v319
      %v352 = vunpack.c.l.b16 %v320
      %v353 = vunpack.c.l.b16 %v321
      %v354 = vunpack.c.l.b16 %v322
      %v355 = vpack.c.b16 %v348, %v347
      %v356 = vpack.c.b16 %v350, %v349
      %v357 = vpack.c.b16 %v352, %v351
      %v358 = vpack.c.b16 %v354, %v353
      %v379 = vunpack.c.l.b16 %v323
      %v380 = vunpack.c.l.b16 %v324
      %v381 = vunpack.c.l.b16 %v325
      %v382 = vunpack.c.l.b16 %v326
      %v383 = vunpack.c.l.b16 %v327
      %v384 = vunpack.c.l.b16 %v328
      %v385 = vunpack.c.l.b16 %v329
      %v386 = vunpack.c.l.b16 %v330
      %v387 = vunpack.c.l.b16 %v331
      %v388 = vunpack.c.l.b16 %v332
      %v389 = vunpack.c.l.b16 %v333
      %v390 = vunpack.c.l.b16 %v334
      %v391 = vunpack.c.l.b16 %v335
      %v392 = vunpack.c.l.b16 %v336
      %v393 = vunpack.c.l.b16 %v337
      %v394 = vunpack.c.l.b16 %v338
      %v395 = vpack.c.b16 %v380, %v379
      %v396 = vpack.c.b16 %v382, %v381
      %v397 = vpack.c.b16 %v384, %v383
      %v398 = vpack.c.b16 %v386, %v385
      %v399 = vpack.c.b16 %v388, %v387
      %v400 = vpack.c.b16 %v390, %v389
      %v401 = vpack.c.b16 %v392, %v391
      %v402 = vpack.c.b16 %v394, %v393
      %411 = vmatpush.bf16.msra.mxu0 %v402
      %412 = vmatpush.bf16.msra.mxu0 %v401
      %413 = vmatpush.bf16.msra.mxu0 %v400
      %414 = vmatpush.bf16.msra.mxu0 %v399
      %415 = vmatpush.bf16.msra.mxu0 %v398
      %416 = vmatpush.bf16.msra.mxu0 %v397
      %417 = vmatpush.bf16.msra.mxu0 %v396
      %418 = vmatpush.bf16.msra.mxu0 %v395
      %419 = vmatmul.bf16.gmra.mxu0 %v355
      %v420 = vpop.f32.mrf.mxu0
      %v421 = vadd.f32 0.0, %v420
      %v422 = vpop.f32.mrf.mxu0
      %v423 = vadd.f32 0.0, %v422
      %424 = vmatmul.bf16.gmra.mxu0 %v356
      %v425 = vpop.f32.mrf.mxu0
      %v426 = vadd.f32 0.0, %v425
      %v427 = vpop.f32.mrf.mxu0
      %v428 = vadd.f32 0.0, %v427
      %429 = vmatmul.bf16.gmra.mxu0 %v357
      %v430 = vpop.f32.mrf.mxu0
      %v431 = vadd.f32 0.0, %v430
      %v432 = vpop.f32.mrf.mxu0
      %v433 = vadd.f32 0.0, %v432
      %434 = vmatmul.bf16.gmra.mxu0 %v358
      %v435 = vpop.f32.mrf.mxu0
      %v436 = vadd.f32 0.0, %v435
      %v437 = vpop.f32.mrf.mxu0
      %v438 = vadd.f32 0.0, %v437
      %439 = vdwg.mxu0
      %v440 = vld [vmem:[%s3] sm:$0x1]
      %v442 = vperm.slane %v440, 0
      %v444 = vmul.f32 %v307, %v442
      %v445 = vmul.f32 %v308, %v442
      %v446 = vmul.f32 %v309, %v442
      %v447 = vmul.f32 %v310, %v442
      %v448 = vmul.f32 %v311, %v442
      %v449 = vmul.f32 %v312, %v442
      %v450 = vmul.f32 %v313, %v442
      %v451 = vmul.f32 %v314, %v442
      %v452 = vld [vmem:[%s4] sm:$0x1]
      %v454 = vperm.slane %v452, 0
      %v456 = vadd.f32 %v444, %v454
      %v457 = vadd.f32 %v445, %v454
      %v458 = vadd.f32 %v446, %v454
      %v459 = vadd.f32 %v447, %v454
      %v460 = vadd.f32 %v448, %v454
      %v461 = vadd.f32 %v449, %v454
      %v462 = vadd.f32 %v450, %v454
      %v463 = vadd.f32 %v451, %v454
      %v464 = vld [vmem:[%s5] sm:$0x1]
      %v466 = vperm.slane %v464, 0
      %v468 = vmul.f32 %v421, %v466
      %v469 = vmul.f32 %v423, %v466
      %v470 = vmul.f32 %v426, %v466
      %v471 = vmul.f32 %v428, %v466
      %v472 = vmul.f32 %v431, %v466
      %v473 = vmul.f32 %v433, %v466
      %v474 = vmul.f32 %v436, %v466
      %v475 = vmul.f32 %v438, %v466
      %v476 = vadd.f32 %v456, %v468
      %v477 = vadd.f32 %v457, %v469
      %v478 = vadd.f32 %v458, %v470
      %v479 = vadd.f32 %v459, %v471
      %v480 = vadd.f32 %v460, %v472
      %v481 = vadd.f32 %v461, %v473
      %v482 = vadd.f32 %v462, %v474
      %v483 = vadd.f32 %v463, %v475
      %v484 = vld [vmem:[%s6] sm:$0x1]
      %v486 = vperm.slane %v484, 0
      %v488 = vadd.f32 %v476, %v486
      %v489 = vadd.f32 %v477, %v486
      %v490 = vadd.f32 %v478, %v486
      %v491 = vadd.f32 %v479, %v486
      %v492 = vadd.f32 %v480, %v486
      %v493 = vadd.f32 %v481, %v486
      %v494 = vadd.f32 %v482, %v486
      %v495 = vadd.f32 %v483, %v486
      %v496 = vmax.f32 %v488, 0.0
      %v497 = vmax.f32 %v489, 0.0
      %v498 = vmax.f32 %v490, 0.0
      %v499 = vmax.f32 %v491, 0.0
      %v500 = vmax.f32 %v492, 0.0
      %v501 = vmax.f32 %v493, 0.0
      %v502 = vmax.f32 %v494, 0.0
      %v503 = vmax.f32 %v495, 0.0
      %504 = vst [vmem:[%s298] sm:$0xff] %v496
      %505 = vst [vmem:[%s298 + $0x8] sm:$0xff] %v497
      %506 = vst [vmem:[%s298 + $0x10] sm:$0xff] %v498
      %507 = vst [vmem:[%s298 + $0x18] sm:$0xff] %v499
      %508 = vst [vmem:[%s298 + $0x20] sm:$0xff] %v500
      %509 = vst [vmem:[%s298 + $0x28] sm:$0xff] %v501
      %510 = vst [vmem:[%s298 + $0x30] sm:$0xff] %v502
      %511 = vst [vmem:[%s298 + $0x38] sm:$0xff] %v503
      %p512 = scmp.lt.s32.totalorder %s18, 15
      %s513 = scalar_select %p512, %s18, 15
      %s514 = smul.addr %s513, 8
      %s515 = smul.addr %s514, 8
      %s516 = scalar_lea.vmem %s7, %s515
      // Predicated region
      $region49: #{residual_block_forward.7} parent=47 // pred_check
        %p517 = pneg %p193
      $region50: #{residual_block_forward.7} parent=47 // pred_check_branch
        %519 = sbr.rel (%p517) target = $region52
      $region51: #{residual_block_forward.7} parent=47 // pred_region
        _
      $region52: #{residual_block_forward.7} parent=47 // pred_fallthru
        _
    $region48: #{residual_block_forward.7} parent=5 // pred_fallthru
      _
    %p520 = scmp.le.s32.totalorder 2, %s13
    // Predicated region
    $region53: #{residual_block_forward.7} parent=5 // pred_check
      %p521 = pneg %p520
    $region54: #{residual_block_forward.7} parent=5 // pred_check_branch
      %523 = sbr.rel (%p521) target = $region56
    $region55: #{residual_block_forward.7} parent=5 // pred_region
      %s524 = ssub.s32 %s13, 2
      // Predicated region
      $region57: #{residual_block_forward.7} parent=55 // pred_check
        %p525 = pneg %p199
      $region58: #{residual_block_forward.7} parent=55 // pred_check_branch
        %527 = sbr.rel (%p525) target = $region60
      $region59: #{residual_block_forward.7} parent=55 // pred_region
        %p528 = scmp.lt.s32.totalorder %s19, 15
        %s529 = scalar_select %p528, %s19, 15
        %s530 = smul.addr %s529, 8
        %s531 = smul.addr %s530, 8
        %s532 = scalar_lea.vmem %s7, %s531
      $region60: #{residual_block_forward.7} parent=55 // pred_fallthru
        _
    $region56: #{residual_block_forward.7} parent=5 // pred_fallthru
      _
  $region6: #{residual_block_forward.7} parent=0 // loop_footer
    %s17 = sadd.s32 1, %s13
  $region7: #{residual_block_forward.7} parent=0 // loop_footer_branch
    %12 = sbr.rel target = $region3
  $region8: #{residual_block_forward.7} parent=0 // loop_exit
    _

// kernel: residual_block_forward.4
$region0: #{residual_block_forward.4}
  #allocation0 [shape = 'u32[]', space=smem, size = 0x4, offset = 0x4, fixed_abs, tag = 'smem constant byte address 0x4 - core index']
  #allocation1 [shape = 'u32[72,128]{1,0:T(1,128)}', space=vmem, size = 0x9000, scoped, tag = 'internal scratch']
  %s0 = inlined_call_operand.vmem [shape: bf16[2,10,10,10,128], index: 0, kind: input, shape index: {}, may-alias: {0,1,2}]
  %s1 = inlined_call_operand.vmem [shape: bf16[2,10,10,10,128], index: 1, kind: input, shape index: {}, may-alias: {0,1,2}]
  %s2 = inlined_call_operand.vmem [shape: bf16[2,10,10,10,128], index: 2, kind: input, shape index: {}, may-alias: {0,1,2}]
  %s3 = inlined_call_operand.vmem [shape: bf16[3,3,3,128,128], index: 3, kind: input, shape index: {}]
  %s4 = inlined_call_operand.vmem [shape: f32[1,128], index: 4, kind: input, shape index: {}]
  %s5 = inlined_call_operand.vmem [shape: f32[1,128], index: 5, kind: input, shape index: {}]
  %s6 = inlined_call_operand.vmem [shape: f32[1,128], index: 6, kind: input, shape index: {}]
  %s7 = inlined_call_operand.vmem [shape: bf16[2,8,8,8,128], index: 7, kind: output, shape index: {0}]
  %s8 = inlined_call_operand.vmem [shape: f32[2,8,2,128], index: 8, kind: output, shape index: {1}]
  %9 = xla_tuple %s7, %s8
  %s10 = sld [smem:[#allocation0]]
  $region69: #{residual_block_forward.4} parent=0
    _
  %s12 = ssub.s32 1, %s10
  %s13 = scalar_select 0, %s12, %s10
  loop: start=0, step=1, limit=18
  $region2: #{residual_block_forward.4} parent=0 // loop_pre_header
    _
  $region3: #{residual_block_forward.4} parent=0 // loop_header
    %s15 = sphi 0, %s19
    %p16 = scmp.ge.s32.totalorder %s15, 18
    %s22 = sphi 0, %s34
    %s23 = sphi 0, %s30
    %s24 = sphi 0, %s22
    %s25 = sphi 0, %s23
    %s26 = sphi 0, %s24
    %s27 = sphi 0, %s25
    %s39 = sphi 0, %s41
    %s42 = sphi 0, %s39
    %s43 = sphi 0, %s42
    %s59 = sphi 0, %s43
    %s69 = sphi 0, %s71
    %s72 = sphi 0, %s69
    %s73 = sphi 0, %s72
    %s89 = sphi 0, %s73
    %s99 = sphi 0, %s101
    %s102 = sphi 0, %s99
    %s103 = sphi 0, %s102
    %s119 = sphi 0, %s103
    %s123 = sphi 0, %s123
    %s125 = sphi 0, %s123
    %s126 = sphi 0, %s125
    %s140 = sphi 0, %s126
    %s144 = sphi 0, %s144
    %s146 = sphi 0, %s144
    %s147 = sphi 0, %s146
    %s161 = sphi 0, %s147
    %s165 = sphi 0, %s165
    %s167 = sphi 0, %s165
    %s168 = sphi 0, %s167
    %s182 = sphi 0, %s168
    %s186 = sphi 0, %s186
    %s188 = sphi 0, %s186
    %s189 = sphi 0, %s188
    %s203 = sphi 0, %s189
    %s211 = sphi 0, %s213
    %s214 = sphi 0, %s211
    %s215 = sphi 0, %s214
    %s231 = sphi 0, %s215
    %s239 = sphi 0, %s241
    %s242 = sphi 0, %s239
    %s243 = sphi 0, %s242
    %s259 = sphi 0, %s243
  $region4: #{residual_block_forward.4} parent=0 // loop_header_branch
    %18 = sbr.rel (%p16) target = $region8
  $region5: #{residual_block_forward.4} parent=0 // loop_body
    %s20 = ssub.s32 %s15, 1
    %s21 = ssub.s32 %s15, 2
    %s28 = sadd.s32 1, %s23
    %p29 = scmp.ge.s32.totalorder %s28, 8
    %s30 = scalar_select %p29, 0, %s28
    %s31 = sadd.s32 1, %s22
    %s32 = scalar_select %p29, %s31, %s22
    %p33 = scmp.ge.s32.totalorder %s32, 2
    %s34 = scalar_select %p33, 0, %s32
    %s35 = ssub.s32 %s22, %s34
    %s36 = ssub.s32 %s23, %s30
    %s37 = sor.u32 %s35, %s36
    %p38 = scmp.eq.s32.totalorder %s37, 0
    %s40 = sadd.s32 %s39, 1
    %s41 = scalar_select %p38, %s39, %s40
    %p44 = pneg %p38
    %p45 = scmp.eq.s32.totalorder %s15, 15
    %p46 = por %p44, %p45
    %p47 = scmp.ne.s32.totalorder %s39, %s42
    %p48 = scmp.eq.s32.totalorder %s15, 0
    %p49 = por %p47, %p48
    %p50 = scmp.ne.s32.totalorder %s39, %s42
    %p51 = scmp.eq.s32.totalorder %s20, 15
    %p52 = por %p50, %p51
    %p53 = scmp.ne.s32.totalorder %s42, %s43
    %p54 = scmp.eq.s32.totalorder %s20, 0
    %p55 = por %p53, %p54
    %p56 = scmp.ne.s32.totalorder %s42, %s43
    %p57 = scmp.eq.s32.totalorder %s21, 15
    %p58 = por %p56, %p57
    %p60 = scmp.ne.s32.totalorder %s43, %s59
    %p61 = scmp.eq.s32.totalorder %s21, 0
    %p62 = por %p60, %p61
    %s63 = sadd.s32 %s23, 1
    %s64 = sadd.s32 %s30, 1
    %s65 = ssub.s32 %s22, %s34
    %s66 = ssub.s32 %s63, %s64
    %s67 = sor.u32 %s65, %s66
    %p68 = scmp.eq.s32.totalorder %s67, 0
    %s70 = sadd.s32 %s69, 1
    %s71 = scalar_select %p68, %s69, %s70
    %p74 = pneg %p68
    %p75 = scmp.eq.s32.totalorder %s15, 15
    %p76 = por %p74, %p75
    %p77 = scmp.ne.s32.totalorder %s69, %s72
    %p78 = scmp.eq.s32.totalorder %s15, 0
    %p79 = por %p77, %p78
    %p80 = scmp.ne.s32.totalorder %s69, %s72
    %p81 = scmp.eq.s32.totalorder %s20, 15
    %p82 = por %p80, %p81
    %p83 = scmp.ne.s32.totalorder %s72, %s73
    %p84 = scmp.eq.s32.totalorder %s20, 0
    %p85 = por %p83, %p84
    %p86 = scmp.ne.s32.totalorder %s72, %s73
    %p87 = scmp.eq.s32.totalorder %s21, 15
    %p88 = por %p86, %p87
    %p90 = scmp.ne.s32.totalorder %s73, %s89
    %p91 = scmp.eq.s32.totalorder %s21, 0
    %p92 = por %p90, %p91
    %s93 = sadd.s32 %s23, 2
    %s94 = sadd.s32 %s30, 2
    %s95 = ssub.s32 %s22, %s34
    %s96 = ssub.s32 %s93, %s94
    %s97 = sor.u32 %s95, %s96
    %p98 = scmp.eq.s32.totalorder %s97, 0
    %s100 = sadd.s32 %s99, 1
    %s101 = scalar_select %p98, %s99, %s100
    %p104 = pneg %p98
    %p105 = scmp.eq.s32.totalorder %s15, 15
    %p106 = por %p104, %p105
    %p107 = scmp.ne.s32.totalorder %s99, %s102
    %p108 = scmp.eq.s32.totalorder %s15, 0
    %p109 = por %p107, %p108
    %p110 = scmp.ne.s32.totalorder %s99, %s102
    %p111 = scmp.eq.s32.totalorder %s20, 15
    %p112 = por %p110, %p111
    %p113 = scmp.ne.s32.totalorder %s102, %s103
    %p114 = scmp.eq.s32.totalorder %s20, 0
    %p115 = por %p113, %p114
    %p116 = scmp.ne.s32.totalorder %s102, %s103
    %p117 = scmp.eq.s32.totalorder %s21, 15
    %p118 = por %p116, %p117
    %p120 = scmp.ne.s32.totalorder %s103, %s119
    %p121 = scmp.eq.s32.totalorder %s21, 0
    %p122 = por %p120, %p121
    %s124 = sadd.s32 %s123, 1
    %p127 = scmp.eq.s32.totalorder %s15, 15
    %p128 = scmp.ne.s32.totalorder %s123, %s125
    %p129 = scmp.eq.s32.totalorder %s15, 0
    %p130 = por %p128, %p129
    %p131 = scmp.ne.s32.totalorder %s123, %s125
    %p132 = scmp.eq.s32.totalorder %s20, 15
    %p133 = por %p131, %p132
    %p134 = scmp.ne.s32.totalorder %s125, %s126
    %p135 = scmp.eq.s32.totalorder %s20, 0
    %p136 = por %p134, %p135
    %p137 = scmp.ne.s32.totalorder %s125, %s126
    %p138 = scmp.eq.s32.totalorder %s21, 15
    %p139 = por %p137, %p138
    %p141 = scmp.ne.s32.totalorder %s126, %s140
    %p142 = scmp.eq.s32.totalorder %s21, 0
    %p143 = por %p141, %p142
    %s145 = sadd.s32 %s144, 1
    %p148 = scmp.eq.s32.totalorder %s15, 15
    %p149 = scmp.ne.s32.totalorder %s144, %s146
    %p150 = scmp.eq.s32.totalorder %s15, 0
    %p151 = por %p149, %p150
    %p152 = scmp.ne.s32.totalorder %s144, %s146
    %p153 = scmp.eq.s32.totalorder %s20, 15
    %p154 = por %p152, %p153
    %p155 = scmp.ne.s32.totalorder %s146, %s147
    %p156 = scmp.eq.s32.totalorder %s20, 0
    %p157 = por %p155, %p156
    %p158 = scmp.ne.s32.totalorder %s146, %s147
    %p159 = scmp.eq.s32.totalorder %s21, 15
    %p160 = por %p158, %p159
    %p162 = scmp.ne.s32.totalorder %s147, %s161
    %p163 = scmp.eq.s32.totalorder %s21, 0
    %p164 = por %p162, %p163
    %s166 = sadd.s32 %s165, 1
    %p169 = scmp.eq.s32.totalorder %s15, 15
    %p170 = scmp.ne.s32.totalorder %s165, %s167
    %p171 = scmp.eq.s32.totalorder %s15, 0
    %p172 = por %p170, %p171
    %p173 = scmp.ne.s32.totalorder %s165, %s167
    %p174 = scmp.eq.s32.totalorder %s20, 15
    %p175 = por %p173, %p174
    %p176 = scmp.ne.s32.totalorder %s167, %s168
    %p177 = scmp.eq.s32.totalorder %s20, 0
    %p178 = por %p176, %p177
    %p179 = scmp.ne.s32.totalorder %s167, %s168
    %p180 = scmp.eq.s32.totalorder %s21, 15
    %p181 = por %p179, %p180
    %p183 = scmp.ne.s32.totalorder %s168, %s182
    %p184 = scmp.eq.s32.totalorder %s21, 0
    %p185 = por %p183, %p184
    %s187 = sadd.s32 %s186, 1
    %p190 = scmp.eq.s32.totalorder %s15, 15
    %p191 = scmp.ne.s32.totalorder %s186, %s188
    %p192 = scmp.eq.s32.totalorder %s15, 0
    %p193 = por %p191, %p192
    %p194 = scmp.ne.s32.totalorder %s186, %s188
    %p195 = scmp.eq.s32.totalorder %s20, 15
    %p196 = por %p194, %p195
    %p197 = scmp.ne.s32.totalorder %s188, %s189
    %p198 = scmp.eq.s32.totalorder %s20, 0
    %p199 = por %p197, %p198
    %p200 = scmp.ne.s32.totalorder %s188, %s189
    %p201 = scmp.eq.s32.totalorder %s21, 15
    %p202 = por %p200, %p201
    %p204 = scmp.ne.s32.totalorder %s189, %s203
    %p205 = scmp.eq.s32.totalorder %s21, 0
    %p206 = por %p204, %p205
    %s207 = ssub.s32 %s22, %s34
    %s208 = ssub.s32 %s23, %s30
    %s209 = sor.u32 %s207, %s208
    %p210 = scmp.eq.s32.totalorder %s209, 0
    %s212 = sadd.s32 %s211, 1
    %s213 = scalar_select %p210, %s211, %s212
    %p216 = pneg %p210
    %p217 = scmp.eq.s32.totalorder %s15, 15
    %p218 = por %p216, %p217
    %p219 = scmp.ne.s32.totalorder %s211, %s214
    %p220 = scmp.eq.s32.totalorder %s15, 0
    %p221 = por %p219, %p220
    %p222 = scmp.ne.s32.totalorder %s211, %s214
    %p223 = scmp.eq.s32.totalorder %s20, 15
    %p224 = por %p222, %p223
    %p225 = scmp.ne.s32.totalorder %s214, %s215
    %p226 = scmp.eq.s32.totalorder %s20, 0
    %p227 = por %p225, %p226
    %p228 = scmp.ne.s32.totalorder %s214, %s215
    %p229 = scmp.eq.s32.totalorder %s21, 15
    %p230 = por %p228, %p229
    %p232 = scmp.ne.s32.totalorder %s215, %s231
    %p233 = scmp.eq.s32.totalorder %s21, 0
    %p234 = por %p232, %p233
    %s235 = ssub.s32 %s22, %s34
    %s236 = ssub.s32 %s23, %s30
    %s237 = sor.u32 %s235, %s236
    %p238 = scmp.eq.s32.totalorder %s237, 0
    %s240 = sadd.s32 %s239, 1
    %s241 = scalar_select %p238, %s239, %s240
    %p244 = pneg %p238
    %p245 = scmp.eq.s32.totalorder %s15, 15
    %p246 = por %p244, %p245
    %p247 = scmp.ne.s32.totalorder %s239, %s242
    %p248 = scmp.eq.s32.totalorder %s15, 0
    %p249 = por %p247, %p248
    %p250 = scmp.ne.s32.totalorder %s239, %s242
    %p251 = scmp.eq.s32.totalorder %s20, 15
    %p252 = por %p250, %p251
    %p253 = scmp.ne.s32.totalorder %s242, %s243
    %p254 = scmp.eq.s32.totalorder %s20, 0
    %p255 = por %p253, %p254
    %p256 = scmp.ne.s32.totalorder %s242, %s243
    %p257 = scmp.eq.s32.totalorder %s21, 15
    %p258 = por %p256, %p257
    %p260 = scmp.ne.s32.totalorder %s243, %s259
    %p261 = scmp.eq.s32.totalorder %s21, 0
    %p262 = por %p260, %p261
    %p263 = scmp.le.s32.totalorder 1, %s15
    %p264 = scmp.lt.s32.totalorder %s15, 17
    %p265 = pnand %p263, %p264
    %p266 = pneg %p265
    // Predicated region
    $region9: #{residual_block_forward.4} parent=5 // pred_check
      _
    $region10: #{residual_block_forward.4} parent=5 // pred_check_branch
      %268 = sbr.rel (%p265) target = $region12
    $region11: #{residual_block_forward.4} parent=5 // pred_region
      %s269 = ssub.s32 %s15, 1
      // Predicated region
      $region13: #{residual_block_forward.4} parent=11 // pred_check
        %p270 = pneg %p136
      $region14: #{residual_block_forward.4} parent=11 // pred_check_branch
        %272 = sbr.rel (%p270) target = $region16
      $region15: #{residual_block_forward.4} parent=11 // pred_region
        _
      $region16: #{residual_block_forward.4} parent=11 // pred_fallthru
        _
      // Predicated region
      $region17: #{residual_block_forward.4} parent=11 // pred_check
        %p273 = pneg %p157
      $region18: #{residual_block_forward.4} parent=11 // pred_check_branch
        %275 = sbr.rel (%p273) target = $region20
      $region19: #{residual_block_forward.4} parent=11 // pred_region
        _
      $region20: #{residual_block_forward.4} parent=11 // pred_fallthru
        _
      // Predicated region
      $region21: #{residual_block_forward.4} parent=11 // pred_check
        %p276 = pneg %p178
      $region22: #{residual_block_forward.4} parent=11 // pred_check_branch
        %278 = sbr.rel (%p276) target = $region24
      $region23: #{residual_block_forward.4} parent=11 // pred_region
        _
      $region24: #{residual_block_forward.4} parent=11 // pred_fallthru
        _
      // Predicated region
      $region25: #{residual_block_forward.4} parent=11 // pred_check
        %p279 = pneg %p199
      $region26: #{residual_block_forward.4} parent=11 // pred_check_branch
        %281 = sbr.rel (%p279) target = $region28
      $region27: #{residual_block_forward.4} parent=11 // pred_region
        _
      $region28: #{residual_block_forward.4} parent=11 // pred_fallthru
        _
    $region12: #{residual_block_forward.4} parent=5 // pred_fallthru
      _
    %p282 = scmp.lt.s32.totalorder %s15, 16
    // Predicated region
    $region29: #{residual_block_forward.4} parent=5 // pred_check
      %p283 = pneg %p282
    $region30: #{residual_block_forward.4} parent=5 // pred_check_branch
      %285 = sbr.rel (%p283) target = $region32
    $region31: #{residual_block_forward.4} parent=5 // pred_region
      // Predicated region
      $region33: #{residual_block_forward.4} parent=31 // pred_check
        %p286 = pneg %p49
      $region34: #{residual_block_forward.4} parent=31 // pred_check_branch
        %288 = sbr.rel (%p286) target = $region36
      $region35: #{residual_block_forward.4} parent=31 // pred_region
        %p289 = scmp.lt.s32.totalorder %s22, 1
        %s290 = scalar_select %p289, %s22, 1
        %p291 = scmp.lt.s32.totalorder %s23, 9
        %s292 = scalar_select %p291, %s23, 9
        %s293 = smul.addr %s292, 20
        %s294 = smul.addr %s290, 200
        %s295 = sadd.s32 %s293, %s294
        %s296 = smul.addr %s295, 4
        %s297 = scalar_lea.vmem %s0, %s296
      $region36: #{residual_block_forward.4} parent=31 // pred_fallthru
        _
      // Predicated region
      $region37: #{residual_block_forward.4} parent=31 // pred_check
        %p298 = pneg %p79
      $region38: #{residual_block_forward.4} parent=31 // pred_check_branch
        %300 = sbr.rel (%p298) target = $region40
      $region39: #{residual_block_forward.4} parent=31 // pred_region
        %s301 = sadd.s32 %s23, 1
        %p302 = scmp.lt.s32.totalorder %s22, 1
        %s303 = scalar_select %p302, %s22, 1
        %p304 = scmp.lt.s32.totalorder %s301, 9
        %s305 = scalar_select %p304, %s301, 9
        %s306 = smul.addr %s305, 20
        %s307 = smul.addr %s303, 200
        %s308 = sadd.s32 %s306, %s307
        %s309 = smul.addr %s308, 4
        %s310 = scalar_lea.vmem %s1, %s309
        %s311 = sadd.s32 %s23, 1
      $region40: #{residual_block_forward.4} parent=31 // pred_fallthru
        _
      // Predicated region
      $region41: #{residual_block_forward.4} parent=31 // pred_check
        %p312 = pneg %p109
      $region42: #{residual_block_forward.4} parent=31 // pred_check_branch
        %314 = sbr.rel (%p312) target = $region44
      $region43: #{residual_block_forward.4} parent=31 // pred_region
        %s315 = sadd.s32 %s23, 2
        %p316 = scmp.lt.s32.totalorder %s22, 1
        %s317 = scalar_select %p316, %s22, 1
        %p318 = scmp.lt.s32.totalorder %s315, 9
        %s319 = scalar_select %p318, %s315, 9
        %s320 = smul.addr %s319, 20
        %s321 = smul.addr %s317, 200
        %s322 = sadd.s32 %s320, %s321
        %s323 = smul.addr %s322, 4
        %s324 = scalar_lea.vmem %s2, %s323
        %s325 = sadd.s32 %s23, 2
      $region44: #{residual_block_forward.4} parent=31 // pred_fallthru
        _
    $region32: #{residual_block_forward.4} parent=5 // pred_fallthru
      _
    %p326 = scmp.le.s32.totalorder 1, %s15
    %p327 = scmp.lt.s32.totalorder %s15, 17
    %p328 = pnand %p326, %p327
    %p329 = pneg %p328
    // Predicated region
    $region45: #{residual_block_forward.4} parent=5 // pred_check
      _
    $region46: #{residual_block_forward.4} parent=5 // pred_check_branch
      %331 = sbr.rel (%p328) target = $region48
    $region47: #{residual_block_forward.4} parent=5 // pred_region
      %s332 = ssub.s32 %s15, 1
      %p333 = scmp.lt.s32.totalorder %s24, 1
      %s334 = scalar_select %p333, %s24, 1
      %p335 = scmp.lt.s32.totalorder %s25, 9
      %s336 = scalar_select %p335, %s25, 9
      %s337 = smul.addr %s336, 20
      %s338 = smul.addr %s334, 200
      %s339 = sadd.s32 %s337, %s338
      %s340 = smul.addr %s339, 4
      %s341 = scalar_lea.vmem %s0, %s340
      %p342 = pneg %p55
      %p343 = pneg %p52
      %s344 = sadd.s32 %s25, 1
      %p345 = scmp.lt.s32.totalorder %s24, 1
      %s346 = scalar_select %p345, %s24, 1
      %p347 = scmp.lt.s32.totalorder %s344, 9
      %s348 = scalar_select %p347, %s344, 9
      %s349 = smul.addr %s348, 20
      %s350 = smul.addr %s346, 200
      %s351 = sadd.s32 %s349, %s350
      %s352 = smul.addr %s351, 4
      %s353 = scalar_lea.vmem %s1, %s352
      %p354 = pneg %p85
      %p355 = pneg %p82
      %s356 = sadd.s32 %s25, 2
      %p357 = scmp.lt.s32.totalorder %s24, 1
      %s358 = scalar_select %p357, %s24, 1
      %p359 = scmp.lt.s32.totalorder %s356, 9
      %s360 = scalar_select %p359, %s356, 9
      %s361 = smul.addr %s360, 20
      %s362 = smul.addr %s358, 200
      %s363 = sadd.s32 %s361, %s362
      %s364 = smul.addr %s363, 4
      %s365 = scalar_lea.vmem %s2, %s364
      %p366 = pneg %p115
      %p367 = pneg %p112
      %p368 = pneg %p136
      %p369 = pneg %p133
      %p370 = pneg %p157
      %p371 = pneg %p154
      %p372 = pneg %p178
      %p373 = pneg %p175
      %p374 = pneg %p199
      %p375 = pneg %p196
      %p376 = pneg %p227
      %p377 = pneg %p224
      %p378 = scmp.lt.s32.totalorder %s24, 1
      %s379 = scalar_select %p378, %s24, 1
      %p380 = scmp.lt.s32.totalorder %s25, 7
      %s381 = scalar_select %p380, %s25, 7
      %s382 = smul.addr %s381, 8
      %s383 = smul.addr %s379, 64
      %s384 = sadd.s32 %s382, %s383
      %s385 = smul.addr %s384, 4
      %s386 = scalar_lea.vmem %s7, %s385
      %p387 = pneg %p255
      %p388 = pneg %p252
      %p389 = scmp.lt.s32.totalorder %s24, 1
      %s390 = scalar_select %p389, %s24, 1
      %p391 = scmp.lt.s32.totalorder %s25, 7
      %s392 = scalar_select %p391, %s25, 7
      %s393 = smul.addr %s390, 8
      %s394 = sadd.s32 %s392, %s393
      %s395 = smul.addr %s394, 2
      %s396 = scalar_lea.vmem %s8, %s395
      %p397 = scmp.lt.s32.totalorder %s24, 1
      %s398 = scalar_select %p397, %s24, 1
      %p399 = scmp.lt.s32.totalorder %s25, 9
      %s400 = scalar_select %p399, %s25, 9
      %s401 = smul.addr %s400, 20
      %s402 = smul.addr %s398, 200
      %s403 = sadd.s32 %s401, %s402
      %s404 = smul.addr %s403, 4
      %s405 = scalar_lea.vmem %s0, %s404
      %s406 = sadd.s32 %s25, 1
      %p407 = scmp.lt.s32.totalorder %s24, 1
      %s408 = scalar_select %p407, %s24, 1
      %p409 = scmp.lt.s32.totalorder %s406, 9
      %s410 = scalar_select %p409, %s406, 9
      %s411 = smul.addr %s410, 20
      %s412 = smul.addr %s408, 200
      %s413 = sadd.s32 %s411, %s412
      %s414 = smul.addr %s413, 4
      %s415 = scalar_lea.vmem %s1, %s414
      %s416 = sadd.s32 %s25, 1
      %s417 = sadd.s32 %s25, 2
      %p418 = scmp.lt.s32.totalorder %s24, 1
      %s419 = scalar_select %p418, %s24, 1
      %p420 = scmp.lt.s32.totalorder %s417, 9
      %s421 = scalar_select %p420, %s417, 9
      %s422 = smul.addr %s421, 20
      %s423 = smul.addr %s419, 200
      %s424 = sadd.s32 %s422, %s423
      %s425 = smul.addr %s424, 4
      %s426 = scalar_lea.vmem %s2, %s425
      %s427 = sadd.s32 %s25, 2
      %p428 = scmp.lt.s32.totalorder %s24, 1
      %s429 = scalar_select %p428, %s24, 1
      %p430 = scmp.lt.s32.totalorder %s25, 7
      %s431 = scalar_select %p430, %s25, 7
      %s432 = smul.addr %s431, 8
      %s433 = smul.addr %s429, 64
      %s434 = sadd.s32 %s432, %s433
      %s435 = smul.addr %s434, 4
      %s436 = scalar_lea.vmem %s7, %s435
      %p437 = scmp.lt.s32.totalorder %s24, 1
      %s438 = scalar_select %p437, %s24, 1
      %p439 = scmp.lt.s32.totalorder %s25, 7
      %s440 = scalar_select %p439, %s25, 7
      %s441 = smul.addr %s438, 8
      %s442 = sadd.s32 %s440, %s441
      %s443 = smul.addr %s442, 2
      %s444 = scalar_lea.vmem %s8, %s443
      %v445 = vlaneseq
      %v446 = vshrl.u32 %v445, 7
      %v447 = vadd.s32 %v446, 8
      %vm448 = vcmp.ge.s32.totalorder %v446, 1
      %vm449 = vcmp.ge.s32.totalorder %v447, 1
      %vm450 = vmand 0, %vm448
      %vm451 = vmand 0, %vm449
      %vm452 = vmand 1, %vm448
      %vm453 = vmand 1, %vm449
      %vm454 = vcmp.le.s32.totalorder %v446, 8
      %vm455 = vcmp.le.s32.totalorder %v447, 8
      %vm456 = vmand %vm450, %vm454
      %vm457 = vmand %vm451, %vm455
      %vm458 = vmand %vm452, %vm454
      %vm459 = vmand %vm453, %vm455
      %v460 = vld [vmem:[%s5] sm:$0x1]
      %v461 = vld [vmem:[%s6] sm:$0x1]
      %v462 = vld [vmem:[%s405] sm:$0xf]
      %v463 = vld [vmem:[%s405 + $0x4] sm:$0x1]
      %v464 = vld [vmem:[%s405 + $0x8] sm:$0xf]
      %v465 = vld [vmem:[%s405 + $0xc] sm:$0x1]
      %v466 = vld [vmem:[%s405 + $0x10] sm:$0xf]
      %v467 = vld [vmem:[%s405 + $0x14] sm:$0x1]
      %v468 = vld [vmem:[%s405 + $0x18] sm:$0xf]
      %v469 = vld [vmem:[%s405 + $0x1c] sm:$0x1]
      %v470 = vld [vmem:[%s405 + $0x20] sm:$0xf]
      %v471 = vld [vmem:[%s405 + $0x24] sm:$0x1]
      %v472 = vld [vmem:[%s405 + $0x28] sm:$0xf]
      %v473 = vld [vmem:[%s405 + $0x2c] sm:$0x1]
      %v474 = vld [vmem:[%s405 + $0x30] sm:$0xf]
      %v475 = vld [vmem:[%s405 + $0x34] sm:$0x1]
      %v476 = vld [vmem:[%s405 + $0x38] sm:$0xf]
      %v477 = vld [vmem:[%s405 + $0x3c] sm:$0x1]
      %v478 = vld [vmem:[%s405 + $0x40] sm:$0xf]
      %v479 = vld [vmem:[%s405 + $0x44] sm:$0x1]
      %v480 = vld [vmem:[%s405 + $0x48] sm:$0xf]
      %v481 = vld [vmem:[%s405 + $0x4c] sm:$0x1]
      %v482 = vunpack.c.l.bf16 %v462
      %v483 = vunpack.c.l.bf16 %v463
      %v484 = vunpack.c.l.bf16 %v464
      %v485 = vunpack.c.l.bf16 %v465
      %v486 = vunpack.c.l.bf16 %v466
      %v487 = vunpack.c.l.bf16 %v467
      %v488 = vunpack.c.l.bf16 %v468
      %v489 = vunpack.c.l.bf16 %v469
      %v490 = vunpack.c.l.bf16 %v470
      %v491 = vunpack.c.l.bf16 %v471
      %v492 = vunpack.c.l.bf16 %v472
      %v493 = vunpack.c.l.bf16 %v473
      %v494 = vunpack.c.l.bf16 %v474
      %v495 = vunpack.c.l.bf16 %v475
      %v496 = vunpack.c.l.bf16 %v476
      %v497 = vunpack.c.l.bf16 %v477
      %v498 = vunpack.c.l.bf16 %v478
      %v499 = vunpack.c.l.bf16 %v479
      %v500 = vunpack.c.l.bf16 %v480
      %v501 = vunpack.c.l.bf16 %v481
      %p502 = scmp.ge.s32.totalorder %s25, 1
      %p503 = scmp.le.s32.totalorder %s25, 8
      %p504 = pnand %p502, %p503
      %p505 = pneg %p504
      %s506 = scalar_select %p505, 1, 0
      %v507 = vstv %s506
      %vm508 = vcmp.eq.s32.totalorder %v507, 1
      %vm509 = vmand %vm456, %vm508
      %vm510 = vmand %vm457, %vm508
      %vm511 = vmand %vm458, %vm508
      %vm512 = vmand %vm459, %vm508
      %v514 = vperm.slane %v460, 0
      %v516 = vmul.f32 %v482, %v514
      %v517 = vmul.f32 %v483, %v514
      %v518 = vmul.f32 %v484, %v514
      %v519 = vmul.f32 %v485, %v514
      %v520 = vmul.f32 %v486, %v514
      %v521 = vmul.f32 %v487, %v514
      %v522 = vmul.f32 %v488, %v514
      %v523 = vmul.f32 %v489, %v514
      %v524 = vmul.f32 %v490, %v514
      %v525 = vmul.f32 %v491, %v514
      %v526 = vmul.f32 %v492, %v514
      %v527 = vmul.f32 %v493, %v514
      %v528 = vmul.f32 %v494, %v514
      %v529 = vmul.f32 %v495, %v514
      %v530 = vmul.f32 %v496, %v514
      %v531 = vmul.f32 %v497, %v514
      %v532 = vmul.f32 %v498, %v514
      %v533 = vmul.f32 %v499, %v514
      %v534 = vmul.f32 %v500, %v514
      %v535 = vmul.f32 %v501, %v514
      %v537 = vperm.slane %v461, 0
      %v539 = vadd.f32 %v516, %v537
      %v540 = vadd.f32 %v517, %v537
      %v541 = vadd.f32 %v518, %v537
      %v542 = vadd.f32 %v519, %v537
      %v543 = vadd.f32 %v520, %v537
      %v544 = vadd.f32 %v521, %v537
      %v545 = vadd.f32 %v522, %v537
      %v546 = vadd.f32 %v523, %v537
      %v547 = vadd.f32 %v524, %v537
      %v548 = vadd.f32 %v525, %v537
      %v549 = vadd.f32 %v526, %v537
      %v550 = vadd.f32 %v527, %v537
      %v551 = vadd.f32 %v528, %v537
      %v552 = vadd.f32 %v529, %v537
      %v553 = vadd.f32 %v530, %v537
      %v554 = vadd.f32 %v531, %v537
      %v555 = vadd.f32 %v532, %v537
      %v556 = vadd.f32 %v533, %v537
      %v557 = vadd.f32 %v534, %v537
      %v558 = vadd.f32 %v535, %v537
      %v559 = vsel %vm509, 1, 0
      %v560 = vsel %vm510, 1, 0
      %v561 = vsel %vm511, 1, 0
      %v562 = vsel %vm512, 1, 0
      %vm563 = vcmp.eq.s32.totalorder %v559, 1
      %vm564 = vcmp.eq.s32.totalorder %v560, 1
      %vm565 = vcmp.eq.s32.totalorder %v561, 1
      %vm566 = vcmp.eq.s32.totalorder %v562, 1
      %v567 = vsel %vm563, %v539, 0.0
      %v568 = vsel %vm564, %v540, 0.0
      %v569 = vsel %vm565, %v541, 0.0
      %v570 = vsel %vm566, %v542, 0.0
      %v571 = vsel %vm565, %v543, 0.0
      %v572 = vsel %vm566, %v544, 0.0
      %v573 = vsel %vm565, %v545, 0.0
      %v574 = vsel %vm566, %v546, 0.0
      %v575 = vsel %vm565, %v547, 0.0
      %v576 = vsel %vm566, %v548, 0.0
      %v577 = vsel %vm565, %v549, 0.0
      %v578 = vsel %vm566, %v550, 0.0
      %v579 = vsel %vm565, %v551, 0.0
      %v580 = vsel %vm566, %v552, 0.0
      %v581 = vsel %vm565, %v553, 0.0
      %v582 = vsel %vm566, %v554, 0.0
      %v583 = vsel %vm565, %v555, 0.0
      %v584 = vsel %vm566, %v556, 0.0
      %v585 = vsel %vm563, %v557, 0.0
      %v586 = vsel %vm564, %v558, 0.0
      %v587 = vld [vmem:[%s415] sm:$0xf]
      %v588 = vld [vmem:[%s415 + $0x4] sm:$0x1]
      %v589 = vld [vmem:[%s415 + $0x8] sm:$0xf]
      %v590 = vld [vmem:[%s415 + $0xc] sm:$0x1]
      %v591 = vld [vmem:[%s415 + $0x10] sm:$0xf]
      %v592 = vld [vmem:[%s415 + $0x14] sm:$0x1]
      %v593 = vld [vmem:[%s415 + $0x18] sm:$0xf]
      %v594 = vld [vmem:[%s415 + $0x1c] sm:$0x1]
      %v595 = vld [vmem:[%s415 + $0x20] sm:$0xf]
      %v596 = vld [vmem:[%s415 + $0x24] sm:$0x1]
      %v597 = vld [vmem:[%s415 + $0x28] sm:$0xf]
      %v598 = vld [vmem:[%s415 + $0x2c] sm:$0x1]
      %v599 = vld [vmem:[%s415 + $0x30] sm:$0xf]
      %v600 = vld [vmem:[%s415 + $0x34] sm:$0x1]
      %v601 = vld [vmem:[%s415 + $0x38] sm:$0xf]
      %v602 = vld [vmem:[%s415 + $0x3c] sm:$0x1]
      %v603 = vld [vmem:[%s415 + $0x40] sm:$0xf]
      %v604 = vld [vmem:[%s415 + $0x44] sm:$0x1]
      %v605 = vld [vmem:[%s415 + $0x48] sm:$0xf]
      %v606 = vld [vmem:[%s415 + $0x4c] sm:$0x1]
      %v607 = vunpack.c.l.bf16 %v587
      %v608 = vunpack.c.l.bf16 %v588
      %v609 = vunpack.c.l.bf16 %v589
      %v610 = vunpack.c.l.bf16 %v590
      %v611 = vunpack.c.l.bf16 %v591
      %v612 = vunpack.c.l.bf16 %v592
      %v613 = vunpack.c.l.bf16 %v593
      %v614 = vunpack.c.l.bf16 %v594
      %v615 = vunpack.c.l.bf16 %v595
      %v616 = vunpack.c.l.bf16 %v596
      %v617 = vunpack.c.l.bf16 %v597
      %v618 = vunpack.c.l.bf16 %v598
      %v619 = vunpack.c.l.bf16 %v599
      %v620 = vunpack.c.l.bf16 %v600
      %v621 = vunpack.c.l.bf16 %v601
      %v622 = vunpack.c.l.bf16 %v602
      %v623 = vunpack.c.l.bf16 %v603
      %v624 = vunpack.c.l.bf16 %v604
      %v625 = vunpack.c.l.bf16 %v605
      %v626 = vunpack.c.l.bf16 %v606
      %s627 = sadd.s32 %s25, 1
      %p628 = scmp.ge.s32.totalorder %s627, 1
      %p629 = scmp.le.s32.totalorder %s627, 8
      %p630 = pnand %p628, %p629
      %p631 = pneg %p630
      %s632 = scalar_select %p631, 1, 0
      %v633 = vstv %s632
      %vm634 = vcmp.eq.s32.totalorder %v633, 1
      %vm635 = vmand %vm456, %vm634
      %vm636 = vmand %vm457, %vm634
      %vm637 = vmand %vm458, %vm634
      %vm638 = vmand %vm459, %vm634
      %v639 = vmul.f32 %v607, %v514
      %v640 = vmul.f32 %v608, %v514
      %v641 = vmul.f32 %v609, %v514
      %v642 = vmul.f32 %v610, %v514
      %v643 = vmul.f32 %v611, %v514
      %v644 = vmul.f32 %v612, %v514
      %v645 = vmul.f32 %v613, %v514
      %v646 = vmul.f32 %v614, %v514
      %v647 = vmul.f32 %v615, %v514
      %v648 = vmul.f32 %v616, %v514
      %v649 = vmul.f32 %v617, %v514
      %v650 = vmul.f32 %v618, %v514
      %v651 = vmul.f32 %v619, %v514
      %v652 = vmul.f32 %v620, %v514
      %v653 = vmul.f32 %v621, %v514
      %v654 = vmul.f32 %v622, %v514
      %v655 = vmul.f32 %v623, %v514
      %v656 = vmul.f32 %v624, %v514
      %v657 = vmul.f32 %v625, %v514
      %v658 = vmul.f32 %v626, %v514
      %v659 = vadd.f32 %v639, %v537
      %v660 = vadd.f32 %v640, %v537
      %v661 = vadd.f32 %v641, %v537
      %v662 = vadd.f32 %v642, %v537
      %v663 = vadd.f32 %v643, %v537
      %v664 = vadd.f32 %v644, %v537
      %v665 = vadd.f32 %v645, %v537
      %v666 = vadd.f32 %v646, %v537
      %v667 = vadd.f32 %v647, %v537
      %v668 = vadd.f32 %v648, %v537
      %v669 = vadd.f32 %v649, %v537
      %v670 = vadd.f32 %v650, %v537
      %v671 = vadd.f32 %v651, %v537
      %v672 = vadd.f32 %v652, %v537
      %v673 = vadd.f32 %v653, %v537
      %v674 = vadd.f32 %v654, %v537
      %v675 = vadd.f32 %v655, %v537
      %v676 = vadd.f32 %v656, %v537
      %v677 = vadd.f32 %v657, %v537
      %v678 = vadd.f32 %v658, %v537
      %v679 = vsel %vm635, 1, 0
      %v680 = vsel %vm636, 1, 0
      %v681 = vsel %vm637, 1, 0
      %v682 = vsel %vm638, 1, 0
      %vm683 = vcmp.eq.s32.totalorder %v679, 1
      %vm684 = vcmp.eq.s32.totalorder %v680, 1
      %vm685 = vcmp.eq.s32.totalorder %v681, 1
      %vm686 = vcmp.eq.s32.totalorder %v682, 1
      %v687 = vsel %vm683, %v659, 0.0
      %v688 = vsel %vm684, %v660, 0.0
      %v689 = vsel %vm685, %v661, 0.0
      %v690 = vsel %vm686, %v662, 0.0
      %v691 = vsel %vm685, %v663, 0.0
      %v692 = vsel %vm686, %v664, 0.0
      %v693 = vsel %vm685, %v665, 0.0
      %v694 = vsel %vm686, %v666, 0.0
      %v695 = vsel %vm685, %v667, 0.0
      %v696 = vsel %vm686, %v668, 0.0
      %v697 = vsel %vm685, %v669, 0.0
      %v698 = vsel %vm686, %v670, 0.0
      %v699 = vsel %vm685, %v671, 0.0
      %v700 = vsel %vm686, %v672, 0.0
      %v701 = vsel %vm685, %v673, 0.0
      %v702 = vsel %vm686, %v674, 0.0
      %v703 = vsel %vm685, %v675, 0.0
      %v704 = vsel %vm686, %v676, 0.0
      %v705 = vsel %vm683, %v677, 0.0
      %v706 = vsel %vm684, %v678, 0.0
      %v707 = vld [vmem:[%s426] sm:$0xf]
      %v708 = vld [vmem:[%s426 + $0x4] sm:$0x1]
      %v709 = vld [vmem:[%s426 + $0x8] sm:$0xf]
      %v710 = vld [vmem:[%s426 + $0xc] sm:$0x1]
      %v711 = vld [vmem:[%s426 + $0x10] sm:$0xf]
      %v712 = vld [vmem:[%s426 + $0x14] sm:$0x1]
      %v713 = vld [vmem:[%s426 + $0x18] sm:$0xf]
      %v714 = vld [vmem:[%s426 + $0x1c] sm:$0x1]
      %v715 = vld [vmem:[%s426 + $0x20] sm:$0xf]
      %v716 = vld [vmem:[%s426 + $0x24] sm:$0x1]
      %v717 = vld [vmem:[%s426 + $0x28] sm:$0xf]
      %v718 = vld [vmem:[%s426 + $0x2c] sm:$0x1]
      %v719 = vld [vmem:[%s426 + $0x30] sm:$0xf]
      %v720 = vld [vmem:[%s426 + $0x34] sm:$0x1]
      %v721 = vld [vmem:[%s426 + $0x38] sm:$0xf]
      %v722 = vld [vmem:[%s426 + $0x3c] sm:$0x1]
      %v723 = vld [vmem:[%s426 + $0x40] sm:$0xf]
      %v724 = vld [vmem:[%s426 + $0x44] sm:$0x1]
      %v725 = vld [vmem:[%s426 + $0x48] sm:$0xf]
      %v726 = vld [vmem:[%s426 + $0x4c] sm:$0x1]
      %v727 = vunpack.c.l.bf16 %v707
      %v728 = vunpack.c.l.bf16 %v708
      %v729 = vunpack.c.l.bf16 %v709
      %v730 = vunpack.c.l.bf16 %v710
      %v731 = vunpack.c.l.bf16 %v711
      %v732 = vunpack.c.l.bf16 %v712
      %v733 = vunpack.c.l.bf16 %v713
      %v734 = vunpack.c.l.bf16 %v714
      %v735 = vunpack.c.l.bf16 %v715
      %v736 = vunpack.c.l.bf16 %v716
      %v737 = vunpack.c.l.bf16 %v717
      %v738 = vunpack.c.l.bf16 %v718
      %v739 = vunpack.c.l.bf16 %v719
      %v740 = vunpack.c.l.bf16 %v720
      %v741 = vunpack.c.l.bf16 %v721
      %v742 = vunpack.c.l.bf16 %v722
      %v743 = vunpack.c.l.bf16 %v723
      %v744 = vunpack.c.l.bf16 %v724
      %v745 = vunpack.c.l.bf16 %v725
      %v746 = vunpack.c.l.bf16 %v726
      %s747 = sadd.s32 %s25, 2
      %p748 = scmp.ge.s32.totalorder %s747, 1
      %p749 = scmp.le.s32.totalorder %s747, 8
      %p750 = pnand %p748, %p749
      %p751 = pneg %p750
      %s752 = scalar_select %p751, 1, 0
      %v753 = vstv %s752
      %vm754 = vcmp.eq.s32.totalorder %v753, 1
      %vm755 = vmand %vm456, %vm754
      %vm756 = vmand %vm457, %vm754
      %vm757 = vmand %vm458, %vm754
      %vm758 = vmand %vm459, %vm754
      %v759 = vmul.f32 %v727, %v514
      %v760 = vmul.f32 %v728, %v514
      %v761 = vmul.f32 %v729, %v514
      %v762 = vmul.f32 %v730, %v514
      %v763 = vmul.f32 %v731, %v514
      %v764 = vmul.f32 %v732, %v514
      %v765 = vmul.f32 %v733, %v514
      %v766 = vmul.f32 %v734, %v514
      %v767 = vmul.f32 %v735, %v514
      %v768 = vmul.f32 %v736, %v514
      %v769 = vmul.f32 %v737, %v514
      %v770 = vmul.f32 %v738, %v514
      %v771 = vmul.f32 %v739, %v514
      %v772 = vmul.f32 %v740, %v514
      %v773 = vmul.f32 %v741, %v514
      %v774 = vmul.f32 %v742, %v514
      %v775 = vmul.f32 %v743, %v514
      %v776 = vmul.f32 %v744, %v514
      %v777 = vmul.f32 %v745, %v514
      %v778 = vmul.f32 %v746, %v514
      %v779 = vadd.f32 %v759, %v537
      %v780 = vadd.f32 %v760, %v537
      %v781 = vadd.f32 %v761, %v537
      %v782 = vadd.f32 %v762, %v537
      %v783 = vadd.f32 %v763, %v537
      %v784 = vadd.f32 %v764, %v537
      %v785 = vadd.f32 %v765, %v537
      %v786 = vadd.f32 %v766, %v537
      %v787 = vadd.f32 %v767, %v537
      %v788 = vadd.f32 %v768, %v537
      %v789 = vadd.f32 %v769, %v537
      %v790 = vadd.f32 %v770, %v537
      %v791 = vadd.f32 %v771, %v537
      %v792 = vadd.f32 %v772, %v537
      %v793 = vadd.f32 %v773, %v537
      %v794 = vadd.f32 %v774, %v537
      %v795 = vadd.f32 %v775, %v537
      %v796 = vadd.f32 %v776, %v537
      %v797 = vadd.f32 %v777, %v537
      %v798 = vadd.f32 %v778, %v537
      %v799 = vsel %vm755, 1, 0
      %v800 = vsel %vm756, 1, 0
      %v801 = vsel %vm757, 1, 0
      %v802 = vsel %vm758, 1, 0
      %vm803 = vcmp.eq.s32.totalorder %v799, 1
      %vm804 = vcmp.eq.s32.totalorder %v800, 1
      %vm805 = vcmp.eq.s32.totalorder %v801, 1
      %vm806 = vcmp.eq.s32.totalorder %v802, 1
      %v807 = vsel %vm803, %v779, 0.0
      %v808 = vsel %vm804, %v780, 0.0
      %v809 = vsel %vm805, %v781, 0.0
      %v810 = vsel %vm806, %v782, 0.0
      %v811 = vsel %vm805, %v783, 0.0
      %v812 = vsel %vm806, %v784, 0.0
      %v813 = vsel %vm805, %v785, 0.0
      %v814 = vsel %vm806, %v786, 0.0
      %v815 = vsel %vm805, %v787, 0.0
      %v816 = vsel %vm806, %v788, 0.0
      %v817 = vsel %vm805, %v789, 0.0
      %v818 = vsel %vm806, %v790, 0.0
      %v819 = vsel %vm805, %v791, 0.0
      %v820 = vsel %vm806, %v792, 0.0
      %v821 = vsel %vm805, %v793, 0.0
      %v822 = vsel %vm806, %v794, 0.0
      %v823 = vsel %vm805, %v795, 0.0
      %v824 = vsel %vm806, %v796, 0.0
      %v825 = vsel %vm803, %v797, 0.0
      %v826 = vsel %vm804, %v798, 0.0
      %v827 = vpack.c.bf16 %v569, %v567
      %v828 = vpack.c.bf16 %v573, %v571
      %v829 = vpack.c.bf16 %v577, %v575
      %v830 = vpack.c.bf16 %v581, %v579
      %v831 = vld [vmem:[%s3] sm:$0xf]
      %v832 = vld [vmem:[%s3 + $0x4] sm:$0xf]
      %v833 = vld [vmem:[%s3 + $0x8] sm:$0xf]
      %v834 = vld [vmem:[%s3 + $0xc] sm:$0xf]
      %v835 = vld [vmem:[%s3 + $0x10] sm:$0xf]
      %v836 = vld [vmem:[%s3 + $0x14] sm:$0xf]
      %v837 = vld [vmem:[%s3 + $0x18] sm:$0xf]
      %v838 = vld [vmem:[%s3 + $0x1c] sm:$0xf]
      %v839 = vld [vmem:[%s3 + $0x20] sm:$0xf]
      %v840 = vld [vmem:[%s3 + $0x24] sm:$0xf]
      %v841 = vld [vmem:[%s3 + $0x28] sm:$0xf]
      %v842 = vld [vmem:[%s3 + $0x2c] sm:$0xf]
      %v843 = vld [vmem:[%s3 + $0x30] sm:$0xf]
      %v844 = vld [vmem:[%s3 + $0x34] sm:$0xf]
      %v845 = vld [vmem:[%s3 + $0x38] sm:$0xf]
      %v846 = vld [vmem:[%s3 + $0x3c] sm:$0xf]
      %vm863 = vcmask 1046528
      %v864 = vrot.slane %v567, 1
      %v865 = vrot.slane %v568, 1
      %v866 = vsel %vm863, %v864, %v865
      %v867 = vrot.slane %v569, 1
      %v868 = vrot.slane %v570, 1
      %v869 = vsel %vm863, %v867, %v868
      %v870 = vrot.slane %v571, 1
      %v871 = vrot.slane %v572, 1
      %v872 = vsel %vm863, %v870, %v871
      %v873 = vrot.slane %v573, 1
      %v874 = vrot.slane %v574, 1
      %v875 = vsel %vm863, %v873, %v874
      %v876 = vrot.slane %v575, 1
      %v877 = vrot.slane %v576, 1
      %v878 = vsel %vm863, %v876, %v877
      %v879 = vrot.slane %v577, 1
      %v880 = vrot.slane %v578, 1
      %v881 = vsel %vm863, %v879, %v880
      %v882 = vrot.slane %v579, 1
      %v883 = vrot.slane %v580, 1
      %v884 = vsel %vm863, %v882, %v883
      %v885 = vrot.slane %v581, 1
      %v886 = vrot.slane %v582, 1
      %v887 = vsel %vm863, %v885, %v886
      %v896 = vpack.c.bf16 %v869, %v866
      %v897 = vpack.c.bf16 %v875, %v872
      %v898 = vpack.c.bf16 %v881, %v878
      %v899 = vpack.c.bf16 %v887, %v884
      %s900 = scalar_lea.vmem %s3, 64
      %v901 = vld [vmem:[%s900] sm:$0xf]
      %v902 = vld [vmem:[%s900 + $0x4] sm:$0xf]
      %v903 = vld [vmem:[%s900 + $0x8] sm:$0xf]
      %v904 = vld [vmem:[%s900 + $0xc] sm:$0xf]
      %v905 = vld [vmem:[%s900 + $0x10] sm:$0xf]
      %v906 = vld [vmem:[%s900 + $0x14] sm:$0xf]
      %v907 = vld [vmem:[%s900 + $0x18] sm:$0xf]
      %v908 = vld [vmem:[%s900 + $0x1c] sm:$0xf]
      %v909 = vld [vmem:[%s900 + $0x20] sm:$0xf]
      %v910 = vld [vmem:[%s900 + $0x24] sm:$0xf]
      %v911 = vld [vmem:[%s900 + $0x28] sm:$0xf]
      %v912 = vld [vmem:[%s900 + $0x2c] sm:$0xf]
      %v913 = vld [vmem:[%s900 + $0x30] sm:$0xf]
      %v914 = vld [vmem:[%s900 + $0x34] sm:$0xf]
      %v915 = vld [vmem:[%s900 + $0x38] sm:$0xf]
      %v916 = vld [vmem:[%s900 + $0x3c] sm:$0xf]
      %v933 = vunpack.c.l.b16 %v901
      %v934 = vunpack.c.l.b16 %v902
      %v935 = vunpack.c.l.b16 %v903
      %v936 = vunpack.c.l.b16 %v904
      %v937 = vunpack.c.l.b16 %v905
      %v938 = vunpack.c.l.b16 %v906
      %v939 = vunpack.c.l.b16 %v907
      %v940 = vunpack.c.l.b16 %v908
      %v941 = vunpack.c.l.b16 %v909
      %v942 = vunpack.c.l.b16 %v910
      %v943 = vunpack.c.l.b16 %v911
      %v944 = vunpack.c.l.b16 %v912
      %v945 = vunpack.c.l.b16 %v913
      %v946 = vunpack.c.l.b16 %v914
      %v947 = vunpack.c.l.b16 %v915
      %v948 = vunpack.c.l.b16 %v916
      %v949 = vpack.c.b16 %v934, %v933
      %v950 = vpack.c.b16 %v936, %v935
      %v951 = vpack.c.b16 %v938, %v937
      %v952 = vpack.c.b16 %v940, %v939
      %v953 = vpack.c.b16 %v942, %v941
      %v954 = vpack.c.b16 %v944, %v943
      %v955 = vpack.c.b16 %v946, %v945
      %v956 = vpack.c.b16 %v948, %v947
      %965 = vmatpush.bf16.msra.mxu0 %v956
      %966 = vmatpush.bf16.msra.mxu0 %v955
      %967 = vmatpush.bf16.msra.mxu0 %v954
      %968 = vmatpush.bf16.msra.mxu0 %v953
      %969 = vmatpush.bf16.msra.mxu0 %v952
      %970 = vmatpush.bf16.msra.mxu0 %v951
      %971 = vmatpush.bf16.msra.mxu0 %v950
      %972 = vmatpush.bf16.msra.mxu0 %v949
      %973 = vmatmul.bf16.gmra.mxu0 %v896
      %v974 = vpop.f32.mrf.mxu0
      %v975 = vadd.f32 0.0, %v974
      %v976 = vpop.f32.mrf.mxu0
      %v977 = vadd.f32 0.0, %v976
      %978 = vmatmul.bf16.gmra.mxu0 %v897
      %v979 = vpop.f32.mrf.mxu0
      %v980 = vadd.f32 0.0, %v979
      %v981 = vpop.f32.mrf.mxu0
      %v982 = vadd.f32 0.0, %v981
      %983 = vmatmul.bf16.gmra.mxu0 %v898
      %v984 = vpop.f32.mrf.mxu0
      %v985 = vadd.f32 0.0, %v984
      %v986 = vpop.f32.mrf.mxu0
      %v987 = vadd.f32 0.0, %v986
      %988 = vmatmul.bf16.gmra.mxu0 %v899
      %v989 = vpop.f32.mrf.mxu0
      %v990 = vadd.f32 0.0, %v989
      %v991 = vpop.f32.mrf.mxu0
      %v992 = vadd.f32 0.0, %v991
      %993 = vdwg.mxu0
      %v1010 = vunpack.c.l.b16 %v831
      %v1011 = vunpack.c.l.b16 %v832
      %v1012 = vunpack.c.l.b16 %v833
      %v1013 = vunpack.c.l.b16 %v834
      %v1014 = vunpack.c.l.b16 %v835
      %v1015 = vunpack.c.l.b16 %v836
      %v1016 = vunpack.c.l.b16 %v837
      %v1017 = vunpack.c.l.b16 %v838
      %v1018 = vunpack.c.l.b16 %v839
      %v1019 = vunpack.c.l.b16 %v840
      %v1020 = vunpack.c.l.b16 %v841
      %v1021 = vunpack.c.l.b16 %v842
      %v1022 = vunpack.c.l.b16 %v843
      %v1023 = vunpack.c.l.b16 %v844
      %v1024 = vunpack.c.l.b16 %v845
      %v1025 = vunpack.c.l.b16 %v846
      %v1026 = vpack.c.b16 %v1011, %v1010
      %v1027 = vpack.c.b16 %v1013, %v1012
      %v1028 = vpack.c.b16 %v1015, %v1014
      %v1029 = vpack.c.b16 %v1017, %v1016
      %v1030 = vpack.c.b16 %v1019, %v1018
      %v1031 = vpack.c.b16 %v1021, %v1020
      %v1032 = vpack.c.b16 %v1023, %v1022
      %v1033 = vpack.c.b16 %v1025, %v1024
      %1042 = vmatpush.bf16.msra.mxu0 %v1033
      %1043 = vmatpush.bf16.msra.mxu0 %v1032
      %1044 = vmatpush.bf16.msra.mxu0 %v1031
      %1045 = vmatpush.bf16.msra.mxu0 %v1030
      %1046 = vmatpush.bf16.msra.mxu0 %v1029
      %1047 = vmatpush.bf16.msra.mxu0 %v1028
      %1048 = vmatpush.bf16.msra.mxu0 %v1027
      %1049 = vmatpush.bf16.msra.mxu0 %v1026
      %1050 = vmatmul.bf16.gmra.mxu0 %v827
      %v1051 = vpop.f32.mrf.mxu0
      %v1052 = vadd.f32 %v975, %v1051
      %v1053 = vpop.f32.mrf.mxu0
      %v1054 = vadd.f32 %v977, %v1053
      %1055 = vmatmul.bf16.gmra.mxu0 %v828
      %v1056 = vpop.f32.mrf.mxu0
      %v1057 = vadd.f32 %v980, %v1056
      %v1058 = vpop.f32.mrf.mxu0
      %v1059 = vadd.f32 %v982, %v1058
      %1060 = vmatmul.bf16.gmra.mxu0 %v829
      %v1061 = vpop.f32.mrf.mxu0
      %v1062 = vadd.f32 %v985, %v1061
      %v1063 = vpop.f32.mrf.mxu0
      %v1064 = vadd.f32 %v987, %v1063
      %1065 = vmatmul.bf16.gmra.mxu0 %v830
      %v1066 = vpop.f32.mrf.mxu0
      %v1067 = vadd.f32 %v990, %v1066
      %v1068 = vpop.f32.mrf.mxu0
      %v1069 = vadd.f32 %v992, %v1068
      %1070 = vdwg.mxu0
      %vm1071 = vcmask 1045504
      %v1072 = vrot.slane %v567, 2
      %v1073 = vrot.slane %v568, 2
      %v1074 = vsel %vm1071, %v1072, %v1073
      %v1075 = vrot.slane %v569, 2
      %v1076 = vrot.slane %v570, 2
      %v1077 = vsel %vm1071, %v1075, %v1076
      %v1078 = vrot.slane %v571, 2
      %v1079 = vrot.slane %v572, 2
      %v1080 = vsel %vm1071, %v1078, %v1079
      %v1081 = vrot.slane %v573, 2
      %v1082 = vrot.slane %v574, 2
      %v1083 = vsel %vm1071, %v1081, %v1082
      %v1084 = vrot.slane %v575, 2
      %v1085 = vrot.slane %v576, 2
      %v1086 = vsel %vm1071, %v1084, %v1085
      %v1087 = vrot.slane %v577, 2
      %v1088 = vrot.slane %v578, 2
      %v1089 = vsel %vm1071, %v1087, %v1088
      %v1090 = vrot.slane %v579, 2
      %v1091 = vrot.slane %v580, 2
      %v1092 = vsel %vm1071, %v1090, %v1091
      %v1093 = vrot.slane %v581, 2
      %v1094 = vrot.slane %v582, 2
      %v1095 = vsel %vm1071, %v1093, %v1094
      %v1104 = vpack.c.bf16 %v1077, %v1074
      %v1105 = vpack.c.bf16 %v1083, %v1080
      %v1106 = vpack.c.bf16 %v1089, %v1086
      %v1107 = vpack.c.bf16 %v1095, %v1092
      %s1108 = scalar_lea.vmem %s3, 128
      %v1109 = vld [vmem:[%s1108] sm:$0xf]
      %v1110 = vld [vmem:[%s1108 + $0x4] sm:$0xf]
      %v1111 = vld [vmem:[%s1108 + $0x8] sm:$0xf]
      %v1112 = vld [vmem:[%s1108 + $0xc] sm:$0xf]
      %v1113 = vld [vmem:[%s1108 + $0x10] sm:$0xf]
      %v1114 = vld [vmem:[%s1108 + $0x14] sm:$0xf]
      %v1115 = vld [vmem:[%s1108 + $0x18] sm:$0xf]
      %v1116 = vld [vmem:[%s1108 + $0x1c] sm:$0xf]
      %v1117 = vld [vmem:[%s1108 + $0x20] sm:$0xf]
      %v1118 = vld [vmem:[%s1108 + $0x24] sm:$0xf]
      %v1119 = vld [vmem:[%s1108 + $0x28] sm:$0xf]
      %v1120 = vld [vmem:[%s1108 + $0x2c] sm:$0xf]
      %v1121 = vld [vmem:[%s1108 + $0x30] sm:$0xf]
      %v1122 = vld [vmem:[%s1108 + $0x34] sm:$0xf]
      %v1123 = vld [vmem:[%s1108 + $0x38] sm:$0xf]
      %v1124 = vld [vmem:[%s1108 + $0x3c] sm:$0xf]
      %v1141 = vunpack.c.l.b16 %v1109
      %v1142 = vunpack.c.l.b16 %v1110
      %v1143 = vunpack.c.l.b16 %v1111
      %v1144 = vunpack.c.l.b16 %v1112
      %v1145 = vunpack.c.l.b16 %v1113
      %v1146 = vunpack.c.l.b16 %v1114
      %v1147 = vunpack.c.l.b16 %v1115
      %v1148 = vunpack.c.l.b16 %v1116
      %v1149 = vunpack.c.l.b16 %v1117
      %v1150 = vunpack.c.l.b16 %v1118
      %v1151 = vunpack.c.l.b16 %v1119
      %v1152 = vunpack.c.l.b16 %v1120
      %v1153 = vunpack.c.l.b16 %v1121
      %v1154 = vunpack.c.l.b16 %v1122
      %v1155 = vunpack.c.l.b16 %v1123
      %v1156 = vunpack.c.l.b16 %v1124
      %v1157 = vpack.c.b16 %v1142, %v1141
      %v1158 = vpack.c.b16 %v1144, %v1143
      %v1159 = vpack.c.b16 %v1146, %v1145
      %v1160 = vpack.c.b16 %v1148, %v1147
      %v1161 = vpack.c.b16 %v1150, %v1149
      %v1162 = vpack.c.b16 %v1152, %v1151
      %v1163 = vpack.c.b16 %v1154, %v1153
      %v1164 = vpack.c.b16 %v1156, %v1155
      %1173 = vmatpush.bf16.msra.mxu0 %v1164
      %1174 = vmatpush.bf16.msra.mxu0 %v1163
      %1175 = vmatpush.bf16.msra.mxu0 %v1162
      %1176 = vmatpush.bf16.msra.mxu0 %v1161
      %1177 = vmatpush.bf16.msra.mxu0 %v1160
      %1178 = vmatpush.bf16.msra.mxu0 %v1159
      %1179 = vmatpush.bf16.msra.mxu0 %v1158
      %1180 = vmatpush.bf16.msra.mxu0 %v1157
      %1181 = vmatmul.bf16.gmra.mxu0 %v1104
      %v1182 = vpop.f32.mrf.mxu0
      %v1183 = vadd.f32 0.0, %v1182
      %v1184 = vpop.f32.mrf.mxu0
      %v1185 = vadd.f32 0.0, %v1184
      %1186 = vmatmul.bf16.gmra.mxu0 %v1105
      %v1187 = vpop.f32.mrf.mxu0
      %v1188 = vadd.f32 0.0, %v1187
      %v1189 = vpop.f32.mrf.mxu0
      %v1190 = vadd.f32 0.0, %v1189
      %1191 = vmatmul.bf16.gmra.mxu0 %v1106
      %v1192 = vpop.f32.mrf.mxu0
      %v1193 = vadd.f32 0.0, %v1192
      %v1194 = vpop.f32.mrf.mxu0
      %v1195 = vadd.f32 0.0, %v1194
      %1196 = vmatmul.bf16.gmra.mxu0 %v1107
      %v1197 = vpop.f32.mrf.mxu0
      %v1198 = vadd.f32 0.0, %v1197
      %v1199 = vpop.f32.mrf.mxu0
      %v1200 = vadd.f32 0.0, %v1199
      %1201 = vdwg.mxu0
      %v1202 = vadd.f32 %v1052, %v1183
      %v1203 = vadd.f32 %v1054, %v1185
      %v1204 = vadd.f32 %v1057, %v1188
      %v1205 = vadd.f32 %v1059, %v1190
      %v1206 = vadd.f32 %v1062, %v1193
      %v1207 = vadd.f32 %v1064, %v1195
      %v1208 = vadd.f32 %v1067, %v1198
      %v1209 = vadd.f32 %v1069, %v1200
      %v1210 = vpack.c.bf16 %v571, %v569
      %v1211 = vpack.c.bf16 %v575, %v573
      %v1212 = vpack.c.bf16 %v579, %v577
      %v1213 = vpack.c.bf16 %v583, %v581
      %s1214 = scalar_lea.vmem %s3, 192
      %v1215 = vld [vmem:[%s1214] sm:$0xf]
      %v1216 = vld [vmem:[%s1214 + $0x4] sm:$0xf]
      %v1217 = vld [vmem:[%s1214 + $0x8] sm:$0xf]
      %v1218 = vld [vmem:[%s1214 + $0xc] sm:$0xf]
      %v1219 = vld [vmem:[%s1214 + $0x10] sm:$0xf]
      %v1220 = vld [vmem:[%s1214 + $0x14] sm:$0xf]
      %v1221 = vld [vmem:[%s1214 + $0x18] sm:$0xf]
      %v1222 = vld [vmem:[%s1214 + $0x1c] sm:$0xf]
      %v1223 = vld [vmem:[%s1214 + $0x20] sm:$0xf]
      %v1224 = vld [vmem:[%s1214 + $0x24] sm:$0xf]
      %v1225 = vld [vmem:[%s1214 + $0x28] sm:$0xf]
      %v1226 = vld [vmem:[%s1214 + $0x2c] sm:$0xf]
      %v1227 = vld [vmem:[%s1214 + $0x30] sm:$0xf]
      %v1228 = vld [vmem:[%s1214 + $0x34] sm:$0xf]
      %v1229 = vld [vmem:[%s1214 + $0x38] sm:$0xf]
      %v1230 = vld [vmem:[%s1214 + $0x3c] sm:$0xf]
      %v1247 = vunpack.c.l.b16 %v1215
      %v1248 = vunpack.c.l.b16 %v1216
      %v1249 = vunpack.c.l.b16 %v1217
      %v1250 = vunpack.c.l.b16 %v1218
      %v1251 = vunpack.c.l.b16 %v1219
      %v1252 = vunpack.c.l.b16 %v1220
      %v1253 = vunpack.c.l.b16 %v1221
      %v1254 = vunpack.c.l.b16 %v1222
      %v1255 = vunpack.c.l.b16 %v1223
      %v1256 = vunpack.c.l.b16 %v1224
      %v1257 = vunpack.c.l.b16 %v1225
      %v1258 = vunpack.c.l.b16 %v1226
      %v1259 = vunpack.c.l.b16 %v1227
      %v1260 = vunpack.c.l.b16 %v1228
      %v1261 = vunpack.c.l.b16 %v1229
      %v1262 = vunpack.c.l.b16 %v1230
      %v1263 = vpack.c.b16 %v1248, %v1247
      %v1264 = vpack.c.b16 %v1250, %v1249
      %v1265 = vpack.c.b16 %v1252, %v1251
      %v1266 = vpack.c.b16 %v1254, %v1253
      %v1267 = vpack.c.b16 %v1256, %v1255
      %v1268 = vpack.c.b16 %v1258, %v1257
      %v1269 = vpack.c.b16 %v1260, %v1259
      %v1270 = vpack.c.b16 %v1262, %v1261
      %1279 = vmatpush.bf16.msra.mxu0 %v1270
      %1280 = vmatpush.bf16.msra.mxu0 %v1269
      %1281 = vmatpush.bf16.msra.mxu0 %v1268
      %1282 = vmatpush.bf16.msra.mxu0 %v1267
      %1283 = vmatpush.bf16.msra.mxu0 %v1266
      %1284 = vmatpush.bf16.msra.mxu0 %v1265
      %1285 = vmatpush.bf16.msra.mxu0 %v1264
      %1286 = vmatpush.bf16.msra.mxu0 %v1263
      %1287 = vmatmul.bf16.gmra.mxu0 %v1210
      %v1288 = vpop.f32.mrf.mxu0
      %v1289 = vadd.f32 0.0, %v1288
      %v1290 = vpop.f32.mrf.mxu0
      %v1291 = vadd.f32 0.0, %v1290
      %1292 = vmatmul.bf16.gmra.mxu0 %v1211
      %v1293 = vpop.f32.mrf.mxu0
      %v1294 = vadd.f32 0.0, %v1293
      %v1295 = vpop.f32.mrf.mxu0
      %v1296 = vadd.f32 0.0, %v1295
      %1297 = vmatmul.bf16.gmra.mxu0 %v1212
      %v1298 = vpop.f32.mrf.mxu0
      %v1299 = vadd.f32 0.0, %v1298
      %v1300 = vpop.f32.mrf.mxu0
      %v1301 = vadd.f32 0.0, %v1300
      %1302 = vmatmul.bf16.gmra.mxu0 %v1213
      %v1303 = vpop.f32.mrf.mxu0
      %v1304 = vadd.f32 0.0, %v1303
      %v1305 = vpop.f32.mrf.mxu0
      %v1306 = vadd.f32 0.0, %v1305
      %1307 = vdwg.mxu0
      %v1308 = vadd.f32 %v1202, %v1289
      %v1309 = vadd.f32 %v1203, %v1291
      %v1310 = vadd.f32 %v1204, %v1294
      %v1311 = vadd.f32 %v1205, %v1296
      %v1312 = vadd.f32 %v1206, %v1299
      %v1313 = vadd.f32 %v1207, %v1301
      %v1314 = vadd.f32 %v1208, %v1304
      %v1315 = vadd.f32 %v1209, %v1306
      %v1318 = vrot.slane %v583, 1
      %v1319 = vrot.slane %v584, 1
      %v1320 = vsel %vm863, %v1318, %v1319
      %v1322 = vpack.c.bf16 %v872, %v869
      %v1323 = vpack.c.bf16 %v878, %v875
      %v1324 = vpack.c.bf16 %v884, %v881
      %v1325 = vpack.c.bf16 %v1320, %v887
      %s1326 = scalar_lea.vmem %s3, 256
      %v1327 = vld [vmem:[%s1326] sm:$0xf]
      %v1328 = vld [vmem:[%s1326 + $0x4] sm:$0xf]
      %v1329 = vld [vmem:[%s1326 + $0x8] sm:$0xf]
      %v1330 = vld [vmem:[%s1326 + $0xc] sm:$0xf]
      %v1331 = vld [vmem:[%s1326 + $0x10] sm:$0xf]
      %v1332 = vld [vmem:[%s1326 + $0x14] sm:$0xf]
      %v1333 = vld [vmem:[%s1326 + $0x18] sm:$0xf]
      %v1334 = vld [vmem:[%s1326 + $0x1c] sm:$0xf]
      %v1335 = vld [vmem:[%s1326 + $0x20] sm:$0xf]
      %v1336 = vld [vmem:[%s1326 + $0x24] sm:$0xf]
      %v1337 = vld [vmem:[%s1326 + $0x28] sm:$0xf]
      %v1338 = vld [vmem:[%s1326 + $0x2c] sm:$0xf]
      %v1339 = vld [vmem:[%s1326 + $0x30] sm:$0xf]
      %v1340 = vld [vmem:[%s1326 + $0x34] sm:$0xf]
      %v1341 = vld [vmem:[%s1326 + $0x38] sm:$0xf]
      %v1342 = vld [vmem:[%s1326 + $0x3c] sm:$0xf]
      %v1359 = vunpack.c.l.b16 %v1327
      %v1360 = vunpack.c.l.b16 %v1328
      %v1361 = vunpack.c.l.b16 %v1329
      %v1362 = vunpack.c.l.b16 %v1330
      %v1363 = vunpack.c.l.b16 %v1331
      %v1364 = vunpack.c.l.b16 %v1332
      %v1365 = vunpack.c.l.b16 %v1333
      %v1366 = vunpack.c.l.b16 %v1334
      %v1367 = vunpack.c.l.b16 %v1335
      %v1368 = vunpack.c.l.b16 %v1336
      %v1369 = vunpack.c.l.b16 %v1337
      %v1370 = vunpack.c.l.b16 %v1338
      %v1371 = vunpack.c.l.b16 %v1339
      %v1372 = vunpack.c.l.b16 %v1340
      %v1373 = vunpack.c.l.b16 %v1341
      %v1374 = vunpack.c.l.b16 %v1342
      %v1375 = vpack.c.b16 %v1360, %v1359
      %v1376 = vpack.c.b16 %v1362, %v1361
      %v1377 = vpack.c.b16 %v1364, %v1363
      %v1378 = vpack.c.b16 %v1366, %v1365
      %v1379 = vpack.c.b16 %v1368, %v1367
      %v1380 = vpack.c.b16 %v1370, %v1369
      %v1381 = vpack.c.b16 %v1372, %v1371
      %v1382 = vpack.c.b16 %v1374, %v1373
      %1391 = vmatpush.bf16.msra.mxu0 %v1382
      %1392 = vmatpush.bf16.msra.mxu0 %v1381
      %1393 = vmatpush.bf16.msra.mxu0 %v1380
      %1394 = vmatpush.bf16.msra.mxu0 %v1379
      %1395 = vmatpush.bf16.msra.mxu0 %v1378
      %1396 = vmatpush.bf16.msra.mxu0 %v1377
      %1397 = vmatpush.bf16.msra.mxu0 %v1376
      %1398 = vmatpush.bf16.msra.mxu0 %v1375
      %1399 = vmatmul.bf16.gmra.mxu0 %v1322
      %v1400 = vpop.f32.mrf.mxu0
      %v1401 = vadd.f32 0.0, %v1400
      %v1402 = vpop.f32.mrf.mxu0
      %v1403 = vadd.f32 0.0, %v1402
      %1404 = vmatmul.bf16.gmra.mxu0 %v1323
      %v1405 = vpop.f32.mrf.mxu0
      %v1406 = vadd.f32 0.0, %v1405
      %v1407 = vpop.f32.mrf.mxu0
      %v1408 = vadd.f32 0.0, %v1407
      %1409 = vmatmul.bf16.gmra.mxu0 %v1324
      %v1410 = vpop.f32.mrf.mxu0
      %v1411 = vadd.f32 0.0, %v1410
      %v1412 = vpop.f32.mrf.mxu0
      %v1413 = vadd.f32 0.0, %v1412
      %1414 = vmatmul.bf16.gmra.mxu0 %v1325
      %v1415 = vpop.f32.mrf.mxu0
      %v1416 = vadd.f32 0.0, %v1415
      %v1417 = vpop.f32.mrf.mxu0
      %v1418 = vadd.f32 0.0, %v1417
      %1419 = vdwg.mxu0
      %v1420 = vadd.f32 %v1308, %v1401
      %v1421 = vadd.f32 %v1309, %v1403
      %v1422 = vadd.f32 %v1310, %v1406
      %v1423 = vadd.f32 %v1311, %v1408
      %v1424 = vadd.f32 %v1312, %v1411
      %v1425 = vadd.f32 %v1313, %v1413
      %v1426 = vadd.f32 %v1314, %v1416
      %v1427 = vadd.f32 %v1315, %v1418
      %v1428 = vrot.slane %v583, 2
      %v1429 = vrot.slane %v584, 2
      %v1430 = vsel %vm1071, %v1428, %v1429
      %v1432 = vpack.c.bf16 %v1080, %v1077
      %v1433 = vpack.c.bf16 %v1086, %v1083
      %v1434 = vpack.c.bf16 %v1092, %v1089
      %v1435 = vpack.c.bf16 %v1430, %v1095
      %s1436 = scalar_lea.vmem %s3, 320
      %v1437 = vld [vmem:[%s1436] sm:$0xf]
      %v1438 = vld [vmem:[%s1436 + $0x4] sm:$0xf]
      %v1439 = vld [vmem:[%s1436 + $0x8] sm:$0xf]
      %v1440 = vld [vmem:[%s1436 + $0xc] sm:$0xf]
      %v1441 = vld [vmem:[%s1436 + $0x10] sm:$0xf]
      %v1442 = vld [vmem:[%s1436 + $0x14] sm:$0xf]
      %v1443 = vld [vmem:[%s1436 + $0x18] sm:$0xf]
      %v1444 = vld [vmem:[%s1436 + $0x1c] sm:$0xf]
      %v1445 = vld [vmem:[%s1436 + $0x20] sm:$0xf]
      %v1446 = vld [vmem:[%s1436 + $0x24] sm:$0xf]
      %v1447 = vld [vmem:[%s1436 + $0x28] sm:$0xf]
      %v1448 = vld [vmem:[%s1436 + $0x2c] sm:$0xf]
      %v1449 = vld [vmem:[%s1436 + $0x30] sm:$0xf]
      %v1450 = vld [vmem:[%s1436 + $0x34] sm:$0xf]
      %v1451 = vld [vmem:[%s1436 + $0x38] sm:$0xf]
      %v1452 = vld [vmem:[%s1436 + $0x3c] sm:$0xf]
      %v1469 = vunpack.c.l.b16 %v1437
      %v1470 = vunpack.c.l.b16 %v1438
      %v1471 = vunpack.c.l.b16 %v1439
      %v1472 = vunpack.c.l.b16 %v1440
      %v1473 = vunpack.c.l.b16 %v1441
      %v1474 = vunpack.c.l.b16 %v1442
      %v1475 = vunpack.c.l.b16 %v1443
      %v1476 = vunpack.c.l.b16 %v1444
      %v1477 = vunpack.c.l.b16 %v1445
      %v1478 = vunpack.c.l.b16 %v1446
      %v1479 = vunpack.c.l.b16 %v1447
      %v1480 = vunpack.c.l.b16 %v1448
      %v1481 = vunpack.c.l.b16 %v1449
      %v1482 = vunpack.c.l.b16 %v1450
      %v1483 = vunpack.c.l.b16 %v1451
      %v1484 = vunpack.c.l.b16 %v1452
      %v1485 = vpack.c.b16 %v1470, %v1469
      %v1486 = vpack.c.b16 %v1472, %v1471
      %v1487 = vpack.c.b16 %v1474, %v1473
      %v1488 = vpack.c.b16 %v1476, %v1475
      %v1489 = vpack.c.b16 %v1478, %v1477
      %v1490 = vpack.c.b16 %v1480, %v1479
      %v1491 = vpack.c.b16 %v1482, %v1481
      %v1492 = vpack.c.b16 %v1484, %v1483
      %1501 = vmatpush.bf16.msra.mxu0 %v1492
      %1502 = vmatpush.bf16.msra.mxu0 %v1491
      %1503 = vmatpush.bf16.msra.mxu0 %v1490
      %1504 = vmatpush.bf16.msra.mxu0 %v1489
      %1505 = vmatpush.bf16.msra.mxu0 %v1488
      %1506 = vmatpush.bf16.msra.mxu0 %v1487
      %1507 = vmatpush.bf16.msra.mxu0 %v1486
      %1508 = vmatpush.bf16.msra.mxu0 %v1485
      %1509 = vmatmul.bf16.gmra.mxu0 %v1432
      %v1510 = vpop.f32.mrf.mxu0
      %v1511 = vadd.f32 0.0, %v1510
      %v1512 = vpop.f32.mrf.mxu0
      %v1513 = vadd.f32 0.0, %v1512
      %1514 = vmatmul.bf16.gmra.mxu0 %v1433
      %v1515 = vpop.f32.mrf.mxu0
      %v1516 = vadd.f32 0.0, %v1515
      %v1517 = vpop.f32.mrf.mxu0
      %v1518 = vadd.f32 0.0, %v1517
      %1519 = vmatmul.bf16.gmra.mxu0 %v1434
      %v1520 = vpop.f32.mrf.mxu0
      %v1521 = vadd.f32 0.0, %v1520
      %v1522 = vpop.f32.mrf.mxu0
      %v1523 = vadd.f32 0.0, %v1522
      %1524 = vmatmul.bf16.gmra.mxu0 %v1435
      %v1525 = vpop.f32.mrf.mxu0
      %v1526 = vadd.f32 0.0, %v1525
      %v1527 = vpop.f32.mrf.mxu0
      %v1528 = vadd.f32 0.0, %v1527
      %1529 = vdwg.mxu0
      %v1530 = vadd.f32 %v1420, %v1511
      %v1531 = vadd.f32 %v1421, %v1513
      %v1532 = vadd.f32 %v1422, %v1516
      %v1533 = vadd.f32 %v1423, %v1518
      %v1534 = vadd.f32 %v1424, %v1521
      %v1535 = vadd.f32 %v1425, %v1523
      %v1536 = vadd.f32 %v1426, %v1526
      %v1537 = vadd.f32 %v1427, %v1528
      %v1538 = vpack.c.bf16 %v585, %v583
      %s1539 = scalar_lea.vmem %s3, 384
      %v1540 = vld [vmem:[%s1539] sm:$0xf]
      %v1541 = vld [vmem:[%s1539 + $0x4] sm:$0xf]
      %v1542 = vld [vmem:[%s1539 + $0x8] sm:$0xf]
      %v1543 = vld [vmem:[%s1539 + $0xc] sm:$0xf]
      %v1544 = vld [vmem:[%s1539 + $0x10] sm:$0xf]
      %v1545 = vld [vmem:[%s1539 + $0x14] sm:$0xf]
      %v1546 = vld [vmem:[%s1539 + $0x18] sm:$0xf]
      %v1547 = vld [vmem:[%s1539 + $0x1c] sm:$0xf]
      %v1548 = vld [vmem:[%s1539 + $0x20] sm:$0xf]
      %v1549 = vld [vmem:[%s1539 + $0x24] sm:$0xf]
      %v1550 = vld [vmem:[%s1539 + $0x28] sm:$0xf]
      %v1551 = vld [vmem:[%s1539 + $0x2c] sm:$0xf]
      %v1552 = vld [vmem:[%s1539 + $0x30] sm:$0xf]
      %v1553 = vld [vmem:[%s1539 + $0x34] sm:$0xf]
      %v1554 = vld [vmem:[%s1539 + $0x38] sm:$0xf]
      %v1555 = vld [vmem:[%s1539 + $0x3c] sm:$0xf]
      %v1572 = vunpack.c.l.b16 %v1540
      %v1573 = vunpack.c.l.b16 %v1541
      %v1574 = vunpack.c.l.b16 %v1542
      %v1575 = vunpack.c.l.b16 %v1543
      %v1576 = vunpack.c.l.b16 %v1544
      %v1577 = vunpack.c.l.b16 %v1545
      %v1578 = vunpack.c.l.b16 %v1546
      %v1579 = vunpack.c.l.b16 %v1547
      %v1580 = vunpack.c.l.b16 %v1548
      %v1581 = vunpack.c.l.b16 %v1549
      %v1582 = vunpack.c.l.b16 %v1550
      %v1583 = vunpack.c.l.b16 %v1551
      %v1584 = vunpack.c.l.b16 %v1552
      %v1585 = vunpack.c.l.b16 %v1553
      %v1586 = vunpack.c.l.b16 %v1554
      %v1587 = vunpack.c.l.b16 %v1555
      %v1588 = vpack.c.b16 %v1573, %v1572
      %v1589 = vpack.c.b16 %v1575, %v1574
      %v1590 = vpack.c.b16 %v1577, %v1576
      %v1591 = vpack.c.b16 %v1579, %v1578
      %v1592 = vpack.c.b16 %v1581, %v1580
      %v1593 = vpack.c.b16 %v1583, %v1582
      %v1594 = vpack.c.b16 %v1585, %v1584
      %v1595 = vpack.c.b16 %v1587, %v1586
      %1604 = vmatpush.bf16.msra.mxu0 %v1595
      %1605 = vmatpush.bf16.msra.mxu0 %v1594
      %1606 = vmatpush.bf16.msra.mxu0 %v1593
      %1607 = vmatpush.bf16.msra.mxu0 %v1592
      %1608 = vmatpush.bf16.msra.mxu0 %v1591
      %1609 = vmatpush.bf16.msra.mxu0 %v1590
      %1610 = vmatpush.bf16.msra.mxu0 %v1589
      %1611 = vmatpush.bf16.msra.mxu0 %v1588
      %1612 = vmatmul.bf16.gmra.mxu0 %v828
      %v1613 = vpop.f32.mrf.mxu0
      %v1614 = vadd.f32 0.0, %v1613
      %v1615 = vpop.f32.mrf.mxu0
      %v1616 = vadd.f32 0.0, %v1615
      %1617 = vmatmul.bf16.gmra.mxu0 %v829
      %v1618 = vpop.f32.mrf.mxu0
      %v1619 = vadd.f32 0.0, %v1618
      %v1620 = vpop.f32.mrf.mxu0
      %v1621 = vadd.f32 0.0, %v1620
      %1622 = vmatmul.bf16.gmra.mxu0 %v830
      %v1623 = vpop.f32.mrf.mxu0
      %v1624 = vadd.f32 0.0, %v1623
      %v1625 = vpop.f32.mrf.mxu0
      %v1626 = vadd.f32 0.0, %v1625
      %1627 = vmatmul.bf16.gmra.mxu0 %v1538
      %v1628 = vpop.f32.mrf.mxu0
      %v1629 = vadd.f32 0.0, %v1628
      %v1630 = vpop.f32.mrf.mxu0
      %v1631 = vadd.f32 0.0, %v1630
      %1632 = vdwg.mxu0
      %v1633 = vadd.f32 %v1530, %v1614
      %v1634 = vadd.f32 %v1531, %v1616
      %v1635 = vadd.f32 %v1532, %v1619
      %v1636 = vadd.f32 %v1533, %v1621
      %v1637 = vadd.f32 %v1534, %v1624
      %v1638 = vadd.f32 %v1535, %v1626
      %v1639 = vadd.f32 %v1536, %v1629
      %v1640 = vadd.f32 %v1537, %v1631
      %v1643 = vrot.slane %v585, 1
      %v1644 = vrot.slane %v586, 1
      %v1645 = vsel %vm863, %v1643, %v1644
      %v1647 = vpack.c.bf16 %v1645, %v1320
      %s1648 = scalar_lea.vmem %s3, 448
      %v1649 = vld [vmem:[%s1648] sm:$0xf]
      %v1650 = vld [vmem:[%s1648 + $0x4] sm:$0xf]
      %v1651 = vld [vmem:[%s1648 + $0x8] sm:$0xf]
      %v1652 = vld [vmem:[%s1648 + $0xc] sm:$0xf]
      %v1653 = vld [vmem:[%s1648 + $0x10] sm:$0xf]
      %v1654 = vld [vmem:[%s1648 + $0x14] sm:$0xf]
      %v1655 = vld [vmem:[%s1648 + $0x18] sm:$0xf]
      %v1656 = vld [vmem:[%s1648 + $0x1c] sm:$0xf]
      %v1657 = vld [vmem:[%s1648 + $0x20] sm:$0xf]
      %v1658 = vld [vmem:[%s1648 + $0x24] sm:$0xf]
      %v1659 = vld [vmem:[%s1648 + $0x28] sm:$0xf]
      %v1660 = vld [vmem:[%s1648 + $0x2c] sm:$0xf]
      %v1661 = vld [vmem:[%s1648 + $0x30] sm:$0xf]
      %v1662 = vld [vmem:[%s1648 + $0x34] sm:$0xf]
      %v1663 = vld [vmem:[%s1648 + $0x38] sm:$0xf]
      %v1664 = vld [vmem:[%s1648 + $0x3c] sm:$0xf]
      %v1681 = vunpack.c.l.b16 %v1649
      %v1682 = vunpack.c.l.b16 %v1650
      %v1683 = vunpack.c.l.b16 %v1651
      %v1684 = vunpack.c.l.b16 %v1652
      %v1685 = vunpack.c.l.b16 %v1653
      %v1686 = vunpack.c.l.b16 %v1654
      %v1687 = vunpack.c.l.b16 %v1655
      %v1688 = vunpack.c.l.b16 %v1656
      %v1689 = vunpack.c.l.b16 %v1657
      %v1690 = vunpack.c.l.b16 %v1658
      %v1691 = vunpack.c.l.b16 %v1659
      %v1692 = vunpack.c.l.b16 %v1660
      %v1693 = vunpack.c.l.b16 %v1661
      %v1694 = vunpack.c.l.b16 %v1662
      %v1695 = vunpack.c.l.b16 %v1663
      %v1696 = vunpack.c.l.b16 %v1664
      %v1697 = vpack.c.b16 %v1682, %v1681
      %v1698 = vpack.c.b16 %v1684, %v1683
      %v1699 = vpack.c.b16 %v1686, %v1685
      %v1700 = vpack.c.b16 %v1688, %v1687
      %v1701 = vpack.c.b16 %v1690, %v1689
      %v1702 = vpack.c.b16 %v1692, %v1691
      %v1703 = vpack.c.b16 %v1694, %v1693
      %v1704 = vpack.c.b16 %v1696, %v1695
      %1713 = vmatpush.bf16.msra.mxu0 %v1704
      %1714 = vmatpush.bf16.msra.mxu0 %v1703
      %1715 = vmatpush.bf16.msra.mxu0 %v1702
      %1716 = vmatpush.bf16.msra.mxu0 %v1701
      %1717 = vmatpush.bf16.msra.mxu0 %v1700
      %1718 = vmatpush.bf16.msra.mxu0 %v1699
      %1719 = vmatpush.bf16.msra.mxu0 %v1698
      %1720 = vmatpush.bf16.msra.mxu0 %v1697
      %1721 = vmatmul.bf16.gmra.mxu0 %v897
      %v1722 = vpop.f32.mrf.mxu0
      %v1723 = vadd.f32 0.0, %v1722
      %v1724 = vpop.f32.mrf.mxu0
      %v1725 = vadd.f32 0.0, %v1724
      %1726 = vmatmul.bf16.gmra.mxu0 %v898
      %v1727 = vpop.f32.mrf.mxu0
      %v1728 = vadd.f32 0.0, %v1727
      %v1729 = vpop.f32.mrf.mxu0
      %v1730 = vadd.f32 0.0, %v1729
      %1731 = vmatmul.bf16.gmra.mxu0 %v899
      %v1732 = vpop.f32.mrf.mxu0
      %v1733 = vadd.f32 0.0, %v1732
      %v1734 = vpop.f32.mrf.mxu0
      %v1735 = vadd.f32 0.0, %v1734
      %1736 = vmatmul.bf16.gmra.mxu0 %v1647
      %v1737 = vpop.f32.mrf.mxu0
      %v1738 = vadd.f32 0.0, %v1737
      %v1739 = vpop.f32.mrf.mxu0
      %v1740 = vadd.f32 0.0, %v1739
      %1741 = vdwg.mxu0
      %v1742 = vadd.f32 %v1633, %v1723
      %v1743 = vadd.f32 %v1634, %v1725
      %v1744 = vadd.f32 %v1635, %v1728
      %v1745 = vadd.f32 %v1636, %v1730
      %v1746 = vadd.f32 %v1637, %v1733
      %v1747 = vadd.f32 %v1638, %v1735
      %v1748 = vadd.f32 %v1639, %v1738
      %v1749 = vadd.f32 %v1640, %v1740
      %v1750 = vrot.slane %v585, 2
      %v1751 = vrot.slane %v586, 2
      %v1752 = vsel %vm1071, %v1750, %v1751
      %v1754 = vpack.c.bf16 %v1752, %v1430
      %s1755 = scalar_lea.vmem %s3, 512
      %v1756 = vld [vmem:[%s1755] sm:$0xf]
      %v1757 = vld [vmem:[%s1755 + $0x4] sm:$0xf]
      %v1758 = vld [vmem:[%s1755 + $0x8] sm:$0xf]
      %v1759 = vld [vmem:[%s1755 + $0xc] sm:$0xf]
      %v1760 = vld [vmem:[%s1755 + $0x10] sm:$0xf]
      %v1761 = vld [vmem:[%s1755 + $0x14] sm:$0xf]
      %v1762 = vld [vmem:[%s1755 + $0x18] sm:$0xf]
      %v1763 = vld [vmem:[%s1755 + $0x1c] sm:$0xf]
      %v1764 = vld [vmem:[%s1755 + $0x20] sm:$0xf]
      %v1765 = vld [vmem:[%s1755 + $0x24] sm:$0xf]
      %v1766 = vld [vmem:[%s1755 + $0x28] sm:$0xf]
      %v1767 = vld [vmem:[%s1755 + $0x2c] sm:$0xf]
      %v1768 = vld [vmem:[%s1755 + $0x30] sm:$0xf]
      %v1769 = vld [vmem:[%s1755 + $0x34] sm:$0xf]
      %v1770 = vld [vmem:[%s1755 + $0x38] sm:$0xf]
      %v1771 = vld [vmem:[%s1755 + $0x3c] sm:$0xf]
      %v1788 = vunpack.c.l.b16 %v1756
      %v1789 = vunpack.c.l.b16 %v1757
      %v1790 = vunpack.c.l.b16 %v1758
      %v1791 = vunpack.c.l.b16 %v1759
      %v1792 = vunpack.c.l.b16 %v1760
      %v1793 = vunpack.c.l.b16 %v1761
      %v1794 = vunpack.c.l.b16 %v1762
      %v1795 = vunpack.c.l.b16 %v1763
      %v1796 = vunpack.c.l.b16 %v1764
      %v1797 = vunpack.c.l.b16 %v1765
      %v1798 = vunpack.c.l.b16 %v1766
      %v1799 = vunpack.c.l.b16 %v1767
      %v1800 = vunpack.c.l.b16 %v1768
      %v1801 = vunpack.c.l.b16 %v1769
      %v1802 = vunpack.c.l.b16 %v1770
      %v1803 = vunpack.c.l.b16 %v1771
      %v1804 = vpack.c.b16 %v1789, %v1788
      %v1805 = vpack.c.b16 %v1791, %v1790
      %v1806 = vpack.c.b16 %v1793, %v1792
      %v1807 = vpack.c.b16 %v1795, %v1794
      %v1808 = vpack.c.b16 %v1797, %v1796
      %v1809 = vpack.c.b16 %v1799, %v1798
      %v1810 = vpack.c.b16 %v1801, %v1800
      %v1811 = vpack.c.b16 %v1803, %v1802
      %1820 = vmatpush.bf16.msra.mxu0 %v1811
      %1821 = vmatpush.bf16.msra.mxu0 %v1810
      %1822 = vmatpush.bf16.msra.mxu0 %v1809
      %1823 = vmatpush.bf16.msra.mxu0 %v1808
      %1824 = vmatpush.bf16.msra.mxu0 %v1807
      %1825 = vmatpush.bf16.msra.mxu0 %v1806
      %1826 = vmatpush.bf16.msra.mxu0 %v1805
      %1827 = vmatpush.bf16.msra.mxu0 %v1804
      %1828 = vmatmul.bf16.gmra.mxu0 %v1105
      %v1829 = vpop.f32.mrf.mxu0
      %v1830 = vadd.f32 0.0, %v1829
      %v1831 = vpop.f32.mrf.mxu0
      %v1832 = vadd.f32 0.0, %v1831
      %1833 = vmatmul.bf16.gmra.mxu0 %v1106
      %v1834 = vpop.f32.mrf.mxu0
      %v1835 = vadd.f32 0.0, %v1834
      %v1836 = vpop.f32.mrf.mxu0
      %v1837 = vadd.f32 0.0, %v1836
      %1838 = vmatmul.bf16.gmra.mxu0 %v1107
      %v1839 = vpop.f32.mrf.mxu0
      %v1840 = vadd.f32 0.0, %v1839
      %v1841 = vpop.f32.mrf.mxu0
      %v1842 = vadd.f32 0.0, %v1841
      %1843 = vmatmul.bf16.gmra.mxu0 %v1754
      %v1844 = vpop.f32.mrf.mxu0
      %v1845 = vadd.f32 0.0, %v1844
      %v1846 = vpop.f32.mrf.mxu0
      %v1847 = vadd.f32 0.0, %v1846
      %1848 = vdwg.mxu0
      %v1849 = vadd.f32 %v1742, %v1830
      %v1850 = vadd.f32 %v1743, %v1832
      %v1851 = vadd.f32 %v1744, %v1835
      %v1852 = vadd.f32 %v1745, %v1837
      %v1853 = vadd.f32 %v1746, %v1840
      %v1854 = vadd.f32 %v1747, %v1842
      %v1855 = vadd.f32 %v1748, %v1845
      %v1856 = vadd.f32 %v1749, %v1847
      %v1857 = vpack.c.bf16 %v689, %v687
      %v1858 = vpack.c.bf16 %v693, %v691
      %v1859 = vpack.c.bf16 %v697, %v695
      %v1860 = vpack.c.bf16 %v701, %v699
      %s1861 = scalar_lea.vmem %s3, 576
      %v1862 = vld [vmem:[%s1861] sm:$0xf]
      %v1863 = vld [vmem:[%s1861 + $0x4] sm:$0xf]
      %v1864 = vld [vmem:[%s1861 + $0x8] sm:$0xf]
      %v1865 = vld [vmem:[%s1861 + $0xc] sm:$0xf]
      %v1866 = vld [vmem:[%s1861 + $0x10] sm:$0xf]
      %v1867 = vld [vmem:[%s1861 + $0x14] sm:$0xf]
      %v1868 = vld [vmem:[%s1861 + $0x18] sm:$0xf]
      %v1869 = vld [vmem:[%s1861 + $0x1c] sm:$0xf]
      %v1870 = vld [vmem:[%s1861 + $0x20] sm:$0xf]
      %v1871 = vld [vmem:[%s1861 + $0x24] sm:$0xf]
      %v1872 = vld [vmem:[%s1861 + $0x28] sm:$0xf]
      %v1873 = vld [vmem:[%s1861 + $0x2c] sm:$0xf]
      %v1874 = vld [vmem:[%s1861 + $0x30] sm:$0xf]
      %v1875 = vld [vmem:[%s1861 + $0x34] sm:$0xf]
      %v1876 = vld [vmem:[%s1861 + $0x38] sm:$0xf]
      %v1877 = vld [vmem:[%s1861 + $0x3c] sm:$0xf]
      %v1894 = vunpack.c.l.b16 %v1862
      %v1895 = vunpack.c.l.b16 %v1863
      %v1896 = vunpack.c.l.b16 %v1864
      %v1897 = vunpack.c.l.b16 %v1865
      %v1898 = vunpack.c.l.b16 %v1866
      %v1899 = vunpack.c.l.b16 %v1867
      %v1900 = vunpack.c.l.b16 %v1868
      %v1901 = vunpack.c.l.b16 %v1869
      %v1902 = vunpack.c.l.b16 %v1870
      %v1903 = vunpack.c.l.b16 %v1871
      %v1904 = vunpack.c.l.b16 %v1872
      %v1905 = vunpack.c.l.b16 %v1873
      %v1906 = vunpack.c.l.b16 %v1874
      %v1907 = vunpack.c.l.b16 %v1875
      %v1908 = vunpack.c.l.b16 %v1876
      %v1909 = vunpack.c.l.b16 %v1877
      %v1910 = vpack.c.b16 %v1895, %v1894
      %v1911 = vpack.c.b16 %v1897, %v1896
      %v1912 = vpack.c.b16 %v1899, %v1898
      %v1913 = vpack.c.b16 %v1901, %v1900
      %v1914 = vpack.c.b16 %v1903, %v1902
      %v1915 = vpack.c.b16 %v1905, %v1904
      %v1916 = vpack.c.b16 %v1907, %v1906
      %v1917 = vpack.c.b16 %v1909, %v1908
      %1926 = vmatpush.bf16.msra.mxu0 %v1917
      %1927 = vmatpush.bf16.msra.mxu0 %v1916
      %1928 = vmatpush.bf16.msra.mxu0 %v1915
      %1929 = vmatpush.bf16.msra.mxu0 %v1914
      %1930 = vmatpush.bf16.msra.mxu0 %v1913
      %1931 = vmatpush.bf16.msra.mxu0 %v1912
      %1932 = vmatpush.bf16.msra.mxu0 %v1911
      %1933 = vmatpush.bf16.msra.mxu0 %v1910
      %1934 = vmatmul.bf16.gmra.mxu0 %v1857
      %v1935 = vpop.f32.mrf.mxu0
      %v1936 = vadd.f32 0.0, %v1935
      %v1937 = vpop.f32.mrf.mxu0
      %v1938 = vadd.f32 0.0, %v1937
      %1939 = vmatmul.bf16.gmra.mxu0 %v1858
      %v1940 = vpop.f32.mrf.mxu0
      %v1941 = vadd.f32 0.0, %v1940
      %v1942 = vpop.f32.mrf.mxu0
      %v1943 = vadd.f32 0.0, %v1942
      %1944 = vmatmul.bf16.gmra.mxu0 %v1859
      %v1945 = vpop.f32.mrf.mxu0
      %v1946 = vadd.f32 0.0, %v1945
      %v1947 = vpop.f32.mrf.mxu0
      %v1948 = vadd.f32 0.0, %v1947
      %1949 = vmatmul.bf16.gmra.mxu0 %v1860
      %v1950 = vpop.f32.mrf.mxu0
      %v1951 = vadd.f32 0.0, %v1950
      %v1952 = vpop.f32.mrf.mxu0
      %v1953 = vadd.f32 0.0, %v1952
      %1954 = vdwg.mxu0
      %v1955 = vadd.f32 %v1849, %v1936
      %v1956 = vadd.f32 %v1850, %v1938
      %v1957 = vadd.f32 %v1851, %v1941
      %v1958 = vadd.f32 %v1852, %v1943
      %v1959 = vadd.f32 %v1853, %v1946
      %v1960 = vadd.f32 %v1854, %v1948
      %v1961 = vadd.f32 %v1855, %v1951
      %v1962 = vadd.f32 %v1856, %v1953
      %v1979 = vrot.slane %v687, 1
      %v1980 = vrot.slane %v688, 1
      %v1981 = vsel %vm863, %v1979, %v1980
      %v1982 = vrot.slane %v689, 1
      %v1983 = vrot.slane %v690, 1
      %v1984 = vsel %vm863, %v1982, %v1983
      %v1985 = vrot.slane %v691, 1
      %v1986 = vrot.slane %v692, 1
      %v1987 = vsel %vm863, %v1985, %v1986
      %v1988 = vrot.slane %v693, 1
      %v1989 = vrot.slane %v694, 1
      %v1990 = vsel %vm863, %v1988, %v1989
      %v1991 = vrot.slane %v695, 1
      %v1992 = vrot.slane %v696, 1
      %v1993 = vsel %vm863, %v1991, %v1992
      %v1994 = vrot.slane %v697, 1
      %v1995 = vrot.slane %v698, 1
      %v1996 = vsel %vm863, %v1994, %v1995
      %v1997 = vrot.slane %v699, 1
      %v1998 = vrot.slane %v700, 1
      %v1999 = vsel %vm863, %v1997, %v1998
      %v2000 = vrot.slane %v701, 1
      %v2001 = vrot.slane %v702, 1
      %v2002 = vsel %vm863, %v2000, %v2001
      %v2011 = vpack.c.bf16 %v1984, %v1981
      %v2012 = vpack.c.bf16 %v1990, %v1987
      %v2013 = vpack.c.bf16 %v1996, %v1993
      %v2014 = vpack.c.bf16 %v2002, %v1999
      %s2015 = scalar_lea.vmem %s3, 640
      %v2016 = vld [vmem:[%s2015] sm:$0xf]
      %v2017 = vld [vmem:[%s2015 + $0x4] sm:$0xf]
      %v2018 = vld [vmem:[%s2015 + $0x8] sm:$0xf]
      %v2019 = vld [vmem:[%s2015 + $0xc] sm:$0xf]
      %v2020 = vld [vmem:[%s2015 + $0x10] sm:$0xf]
      %v2021 = vld [vmem:[%s2015 + $0x14] sm:$0xf]
      %v2022 = vld [vmem:[%s2015 + $0x18] sm:$0xf]
      %v2023 = vld [vmem:[%s2015 + $0x1c] sm:$0xf]
      %v2024 = vld [vmem:[%s2015 + $0x20] sm:$0xf]
      %v2025 = vld [vmem:[%s2015 + $0x24] sm:$0xf]
      %v2026 = vld [vmem:[%s2015 + $0x28] sm:$0xf]
      %v2027 = vld [vmem:[%s2015 + $0x2c] sm:$0xf]
      %v2028 = vld [vmem:[%s2015 + $0x30] sm:$0xf]
      %v2029 = vld [vmem:[%s2015 + $0x34] sm:$0xf]
      %v2030 = vld [vmem:[%s2015 + $0x38] sm:$0xf]
      %v2031 = vld [vmem:[%s2015 + $0x3c] sm:$0xf]
      %v2048 = vunpack.c.l.b16 %v2016
      %v2049 = vunpack.c.l.b16 %v2017
      %v2050 = vunpack.c.l.b16 %v2018
      %v2051 = vunpack.c.l.b16 %v2019
      %v2052 = vunpack.c.l.b16 %v2020
      %v2053 = vunpack.c.l.b16 %v2021
      %v2054 = vunpack.c.l.b16 %v2022
      %v2055 = vunpack.c.l.b16 %v2023
      %v2056 = vunpack.c.l.b16 %v2024
      %v2057 = vunpack.c.l.b16 %v2025
      %v2058 = vunpack.c.l.b16 %v2026
      %v2059 = vunpack.c.l.b16 %v2027
      %v2060 = vunpack.c.l.b16 %v2028
      %v2061 = vunpack.c.l.b16 %v2029
      %v2062 = vunpack.c.l.b16 %v2030
      %v2063 = vunpack.c.l.b16 %v2031
      %v2064 = vpack.c.b16 %v2049, %v2048
      %v2065 = vpack.c.b16 %v2051, %v2050
      %v2066 = vpack.c.b16 %v2053, %v2052
      %v2067 = vpack.c.b16 %v2055, %v2054
      %v2068 = vpack.c.b16 %v2057, %v2056
      %v2069 = vpack.c.b16 %v2059, %v2058
      %v2070 = vpack.c.b16 %v2061, %v2060
      %v2071 = vpack.c.b16 %v2063, %v2062
      %2080 = vmatpush.bf16.msra.mxu0 %v2071
      %2081 = vmatpush.bf16.msra.mxu0 %v2070
      %2082 = vmatpush.bf16.msra.mxu0 %v2069
      %2083 = vmatpush.bf16.msra.mxu0 %v2068
      %2084 = vmatpush.bf16.msra.mxu0 %v2067
      %2085 = vmatpush.bf16.msra.mxu0 %v2066
      %2086 = vmatpush.bf16.msra.mxu0 %v2065
      %2087 = vmatpush.bf16.msra.mxu0 %v2064
      %2088 = vmatmul.bf16.gmra.mxu0 %v2011
      %v2089 = vpop.f32.mrf.mxu0
      %v2090 = vadd.f32 0.0, %v2089
      %v2091 = vpop.f32.mrf.mxu0
      %v2092 = vadd.f32 0.0, %v2091
      %2093 = vmatmul.bf16.gmra.mxu0 %v2012
      %v2094 = vpop.f32.mrf.mxu0
      %v2095 = vadd.f32 0.0, %v2094
      %v2096 = vpop.f32.mrf.mxu0
      %v2097 = vadd.f32 0.0, %v2096
      %2098 = vmatmul.bf16.gmra.mxu0 %v2013
      %v2099 = vpop.f32.mrf.mxu0
      %v2100 = vadd.f32 0.0, %v2099
      %v2101 = vpop.f32.mrf.mxu0
      %v2102 = vadd.f32 0.0, %v2101
      %2103 = vmatmul.bf16.gmra.mxu0 %v2014
      %v2104 = vpop.f32.mrf.mxu0
      %v2105 = vadd.f32 0.0, %v2104
      %v2106 = vpop.f32.mrf.mxu0
      %v2107 = vadd.f32 0.0, %v2106
      %2108 = vdwg.mxu0
      %v2109 = vadd.f32 %v1955, %v2090
      %v2110 = vadd.f32 %v1956, %v2092
      %v2111 = vadd.f32 %v1957, %v2095
      %v2112 = vadd.f32 %v1958, %v2097
      %v2113 = vadd.f32 %v1959, %v2100
      %v2114 = vadd.f32 %v1960, %v2102
      %v2115 = vadd.f32 %v1961, %v2105
      %v2116 = vadd.f32 %v1962, %v2107
      %v2117 = vrot.slane %v687, 2
      %v2118 = vrot.slane %v688, 2
      %v2119 = vsel %vm1071, %v2117, %v2118
      %v2120 = vrot.slane %v689, 2
      %v2121 = vrot.slane %v690, 2
      %v2122 = vsel %vm1071, %v2120, %v2121
      %v2123 = vrot.slane %v691, 2
      %v2124 = vrot.slane %v692, 2
      %v2125 = vsel %vm1071, %v2123, %v2124
      %v2126 = vrot.slane %v693, 2
      %v2127 = vrot.slane %v694, 2
      %v2128 = vsel %vm1071, %v2126, %v2127
      %v2129 = vrot.slane %v695, 2
      %v2130 = vrot.slane %v696, 2
      %v2131 = vsel %vm1071, %v2129, %v2130
      %v2132 = vrot.slane %v697, 2
      %v2133 = vrot.slane %v698, 2
      %v2134 = vsel %vm1071, %v2132, %v2133
      %v2135 = vrot.slane %v699, 2
      %v2136 = vrot.slane %v700, 2
      %v2137 = vsel %vm1071, %v2135, %v2136
      %v2138 = vrot.slane %v701, 2
      %v2139 = vrot.slane %v702, 2
      %v2140 = vsel %vm1071, %v2138, %v2139
      %v2149 = vpack.c.bf16 %v2122, %v2119
      %v2150 = vpack.c.bf16 %v2128, %v2125
      %v2151 = vpack.c.bf16 %v2134, %v2131
      %v2152 = vpack.c.bf16 %v2140, %v2137
      %s2153 = scalar_lea.vmem %s3, 704
      %v2154 = vld [vmem:[%s2153] sm:$0xf]
      %v2155 = vld [vmem:[%s2153 + $0x4] sm:$0xf]
      %v2156 = vld [vmem:[%s2153 + $0x8] sm:$0xf]
      %v2157 = vld [vmem:[%s2153 + $0xc] sm:$0xf]
      %v2158 = vld [vmem:[%s2153 + $0x10] sm:$0xf]
      %v2159 = vld [vmem:[%s2153 + $0x14] sm:$0xf]
      %v2160 = vld [vmem:[%s2153 + $0x18] sm:$0xf]
      %v2161 = vld [vmem:[%s2153 + $0x1c] sm:$0xf]
      %v2162 = vld [vmem:[%s2153 + $0x20] sm:$0xf]
      %v2163 = vld [vmem:[%s2153 + $0x24] sm:$0xf]
      %v2164 = vld [vmem:[%s2153 + $0x28] sm:$0xf]
      %v2165 = vld [vmem:[%s2153 + $0x2c] sm:$0xf]
      %v2166 = vld [vmem:[%s2153 + $0x30] sm:$0xf]
      %v2167 = vld [vmem:[%s2153 + $0x34] sm:$0xf]
      %v2168 = vld [vmem:[%s2153 + $0x38] sm:$0xf]
      %v2169 = vld [vmem:[%s2153 + $0x3c] sm:$0xf]
      %v2186 = vunpack.c.l.b16 %v2154
      %v2187 = vunpack.c.l.b16 %v2155
      %v2188 = vunpack.c.l.b16 %v2156
      %v2189 = vunpack.c.l.b16 %v2157
      %v2190 = vunpack.c.l.b16 %v2158
      %v2191 = vunpack.c.l.b16 %v2159
      %v2192 = vunpack.c.l.b16 %v2160
      %v2193 = vunpack.c.l.b16 %v2161
      %v2194 = vunpack.c.l.b16 %v2162
      %v2195 = vunpack.c.l.b16 %v2163
      %v2196 = vunpack.c.l.b16 %v2164
      %v2197 = vunpack.c.l.b16 %v2165
      %v2198 = vunpack.c.l.b16 %v2166
      %v2199 = vunpack.c.l.b16 %v2167
      %v2200 = vunpack.c.l.b16 %v2168
      %v2201 = vunpack.c.l.b16 %v2169
      %v2202 = vpack.c.b16 %v2187, %v2186
      %v2203 = vpack.c.b16 %v2189, %v2188
      %v2204 = vpack.c.b16 %v2191, %v2190
      %v2205 = vpack.c.b16 %v2193, %v2192
      %v2206 = vpack.c.b16 %v2195, %v2194
      %v2207 = vpack.c.b16 %v2197, %v2196
      %v2208 = vpack.c.b16 %v2199, %v2198
      %v2209 = vpack.c.b16 %v2201, %v2200
      %2218 = vmatpush.bf16.msra.mxu0 %v2209
      %2219 = vmatpush.bf16.msra.mxu0 %v2208
      %2220 = vmatpush.bf16.msra.mxu0 %v2207
      %2221 = vmatpush.bf16.msra.mxu0 %v2206
      %2222 = vmatpush.bf16.msra.mxu0 %v2205
      %2223 = vmatpush.bf16.msra.mxu0 %v2204
      %2224 = vmatpush.bf16.msra.mxu0 %v2203
      %2225 = vmatpush.bf16.msra.mxu0 %v2202
      %2226 = vmatmul.bf16.gmra.mxu0 %v2149
      %v2227 = vpop.f32.mrf.mxu0
      %v2228 = vadd.f32 0.0, %v2227
      %v2229 = vpop.f32.mrf.mxu0
      %v2230 = vadd.f32 0.0, %v2229
      %2231 = vmatmul.bf16.gmra.mxu0 %v2150
      %v2232 = vpop.f32.mrf.mxu0
      %v2233 = vadd.f32 0.0, %v2232
      %v2234 = vpop.f32.mrf.mxu0
      %v2235 = vadd.f32 0.0, %v2234
      %2236 = vmatmul.bf16.gmra.mxu0 %v2151
      %v2237 = vpop.f32.mrf.mxu0
      %v2238 = vadd.f32 0.0, %v2237
      %v2239 = vpop.f32.mrf.mxu0
      %v2240 = vadd.f32 0.0, %v2239
      %2241 = vmatmul.bf16.gmra.mxu0 %v2152
      %v2242 = vpop.f32.mrf.mxu0
      %v2243 = vadd.f32 0.0, %v2242
      %v2244 = vpop.f32.mrf.mxu0
      %v2245 = vadd.f32 0.0, %v2244
      %2246 = vdwg.mxu0
      %v2247 = vadd.f32 %v2109, %v2228
      %v2248 = vadd.f32 %v2110, %v2230
      %v2249 = vadd.f32 %v2111, %v2233
      %v2250 = vadd.f32 %v2112, %v2235
      %v2251 = vadd.f32 %v2113, %v2238
      %v2252 = vadd.f32 %v2114, %v2240
      %v2253 = vadd.f32 %v2115, %v2243
      %v2254 = vadd.f32 %v2116, %v2245
      %v2255 = vpack.c.bf16 %v691, %v689
      %v2256 = vpack.c.bf16 %v695, %v693
      %v2257 = vpack.c.bf16 %v699, %v697
      %v2258 = vpack.c.bf16 %v703, %v701
      %s2259 = scalar_lea.vmem %s3, 768
      %v2260 = vld [vmem:[%s2259] sm:$0xf]
      %v2261 = vld [vmem:[%s2259 + $0x4] sm:$0xf]
      %v2262 = vld [vmem:[%s2259 + $0x8] sm:$0xf]
      %v2263 = vld [vmem:[%s2259 + $0xc] sm:$0xf]
      %v2264 = vld [vmem:[%s2259 + $0x10] sm:$0xf]
      %v2265 = vld [vmem:[%s2259 + $0x14] sm:$0xf]
      %v2266 = vld [vmem:[%s2259 + $0x18] sm:$0xf]
      %v2267 = vld [vmem:[%s2259 + $0x1c] sm:$0xf]
      %v2268 = vld [vmem:[%s2259 + $0x20] sm:$0xf]
      %v2269 = vld [vmem:[%s2259 + $0x24] sm:$0xf]
      %v2270 = vld [vmem:[%s2259 + $0x28] sm:$0xf]
      %v2271 = vld [vmem:[%s2259 + $0x2c] sm:$0xf]
      %v2272 = vld [vmem:[%s2259 + $0x30] sm:$0xf]
      %v2273 = vld [vmem:[%s2259 + $0x34] sm:$0xf]
      %v2274 = vld [vmem:[%s2259 + $0x38] sm:$0xf]
      %v2275 = vld [vmem:[%s2259 + $0x3c] sm:$0xf]
      %v2292 = vunpack.c.l.b16 %v2260
      %v2293 = vunpack.c.l.b16 %v2261
      %v2294 = vunpack.c.l.b16 %v2262
      %v2295 = vunpack.c.l.b16 %v2263
      %v2296 = vunpack.c.l.b16 %v2264
      %v2297 = vunpack.c.l.b16 %v2265
      %v2298 = vunpack.c.l.b16 %v2266
      %v2299 = vunpack.c.l.b16 %v2267
      %v2300 = vunpack.c.l.b16 %v2268
      %v2301 = vunpack.c.l.b16 %v2269
      %v2302 = vunpack.c.l.b16 %v2270
      %v2303 = vunpack.c.l.b16 %v2271
      %v2304 = vunpack.c.l.b16 %v2272
      %v2305 = vunpack.c.l.b16 %v2273
      %v2306 = vunpack.c.l.b16 %v2274
      %v2307 = vunpack.c.l.b16 %v2275
      %v2308 = vpack.c.b16 %v2293, %v2292
      %v2309 = vpack.c.b16 %v2295, %v2294
      %v2310 = vpack.c.b16 %v2297, %v2296
      %v2311 = vpack.c.b16 %v2299, %v2298
      %v2312 = vpack.c.b16 %v2301, %v2300
      %v2313 = vpack.c.b16 %v2303, %v2302
      %v2314 = vpack.c.b16 %v2305, %v2304
      %v2315 = vpack.c.b16 %v2307, %v2306
      %2324 = vmatpush.bf16.msra.mxu0 %v2315
      %2325 = vmatpush.bf16.msra.mxu0 %v2314
      %2326 = vmatpush.bf16.msra.mxu0 %v2313
      %2327 = vmatpush.bf16.msra.mxu0 %v2312
      %2328 = vmatpush.bf16.msra.mxu0 %v2311
      %2329 = vmatpush.bf16.msra.mxu0 %v2310
      %2330 = vmatpush.bf16.msra.mxu0 %v2309
      %2331 = vmatpush.bf16.msra.mxu0 %v2308
      %2332 = vmatmul.bf16.gmra.mxu0 %v2255
      %v2333 = vpop.f32.mrf.mxu0
      %v2334 = vadd.f32 0.0, %v2333
      %v2335 = vpop.f32.mrf.mxu0
      %v2336 = vadd.f32 0.0, %v2335
      %2337 = vmatmul.bf16.gmra.mxu0 %v2256
      %v2338 = vpop.f32.mrf.mxu0
      %v2339 = vadd.f32 0.0, %v2338
      %v2340 = vpop.f32.mrf.mxu0
      %v2341 = vadd.f32 0.0, %v2340
      %2342 = vmatmul.bf16.gmra.mxu0 %v2257
      %v2343 = vpop.f32.mrf.mxu0
      %v2344 = vadd.f32 0.0, %v2343
      %v2345 = vpop.f32.mrf.mxu0
      %v2346 = vadd.f32 0.0, %v2345
      %2347 = vmatmul.bf16.gmra.mxu0 %v2258
      %v2348 = vpop.f32.mrf.mxu0
      %v2349 = vadd.f32 0.0, %v2348
      %v2350 = vpop.f32.mrf.mxu0
      %v2351 = vadd.f32 0.0, %v2350
      %2352 = vdwg.mxu0
      %v2353 = vadd.f32 %v2247, %v2334
      %v2354 = vadd.f32 %v2248, %v2336
      %v2355 = vadd.f32 %v2249, %v2339
      %v2356 = vadd.f32 %v2250, %v2341
      %v2357 = vadd.f32 %v2251, %v2344
      %v2358 = vadd.f32 %v2252, %v2346
      %v2359 = vadd.f32 %v2253, %v2349
      %v2360 = vadd.f32 %v2254, %v2351
      %v2363 = vrot.slane %v703, 1
      %v2364 = vrot.slane %v704, 1
      %v2365 = vsel %vm863, %v2363, %v2364
      %v2367 = vpack.c.bf16 %v1987, %v1984
      %v2368 = vpack.c.bf16 %v1993, %v1990
      %v2369 = vpack.c.bf16 %v1999, %v1996
      %v2370 = vpack.c.bf16 %v2365, %v2002
      %s2371 = scalar_lea.vmem %s3, 832
      %v2372 = vld [vmem:[%s2371] sm:$0xf]
      %v2373 = vld [vmem:[%s2371 + $0x4] sm:$0xf]
      %v2374 = vld [vmem:[%s2371 + $0x8] sm:$0xf]
      %v2375 = vld [vmem:[%s2371 + $0xc] sm:$0xf]
      %v2376 = vld [vmem:[%s2371 + $0x10] sm:$0xf]
      %v2377 = vld [vmem:[%s2371 + $0x14] sm:$0xf]
      %v2378 = vld [vmem:[%s2371 + $0x18] sm:$0xf]
      %v2379 = vld [vmem:[%s2371 + $0x1c] sm:$0xf]
      %v2380 = vld [vmem:[%s2371 + $0x20] sm:$0xf]
      %v2381 = vld [vmem:[%s2371 + $0x24] sm:$0xf]
      %v2382 = vld [vmem:[%s2371 + $0x28] sm:$0xf]
      %v2383 = vld [vmem:[%s2371 + $0x2c] sm:$0xf]
      %v2384 = vld [vmem:[%s2371 + $0x30] sm:$0xf]
      %v2385 = vld [vmem:[%s2371 + $0x34] sm:$0xf]
      %v2386 = vld [vmem:[%s2371 + $0x38] sm:$0xf]
      %v2387 = vld [vmem:[%s2371 + $0x3c] sm:$0xf]
      %v2404 = vunpack.c.l.b16 %v2372
      %v2405 = vunpack.c.l.b16 %v2373
      %v2406 = vunpack.c.l.b16 %v2374
      %v2407 = vunpack.c.l.b16 %v2375
      %v2408 = vunpack.c.l.b16 %v2376
      %v2409 = vunpack.c.l.b16 %v2377
      %v2410 = vunpack.c.l.b16 %v2378
      %v2411 = vunpack.c.l.b16 %v2379
      %v2412 = vunpack.c.l.b16 %v2380
      %v2413 = vunpack.c.l.b16 %v2381
      %v2414 = vunpack.c.l.b16 %v2382
      %v2415 = vunpack.c.l.b16 %v2383
      %v2416 = vunpack.c.l.b16 %v2384
      %v2417 = vunpack.c.l.b16 %v2385
      %v2418 = vunpack.c.l.b16 %v2386
      %v2419 = vunpack.c.l.b16 %v2387
      %v2420 = vpack.c.b16 %v2405, %v2404
      %v2421 = vpack.c.b16 %v2407, %v2406
      %v2422 = vpack.c.b16 %v2409, %v2408
      %v2423 = vpack.c.b16 %v2411, %v2410
      %v2424 = vpack.c.b16 %v2413, %v2412
      %v2425 = vpack.c.b16 %v2415, %v2414
      %v2426 = vpack.c.b16 %v2417, %v2416
      %v2427 = vpack.c.b16 %v2419, %v2418
      %2436 = vmatpush.bf16.msra.mxu0 %v2427
      %2437 = vmatpush.bf16.msra.mxu0 %v2426
      %2438 = vmatpush.bf16.msra.mxu0 %v2425
      %2439 = vmatpush.bf16.msra.mxu0 %v2424
      %2440 = vmatpush.bf16.msra.mxu0 %v2423
      %2441 = vmatpush.bf16.msra.mxu0 %v2422
      %2442 = vmatpush.bf16.msra.mxu0 %v2421
      %2443 = vmatpush.bf16.msra.mxu0 %v2420
      %2444 = vmatmul.bf16.gmra.mxu0 %v2367
      %v2445 = vpop.f32.mrf.mxu0
      %v2446 = vadd.f32 0.0, %v2445
      %v2447 = vpop.f32.mrf.mxu0
      %v2448 = vadd.f32 0.0, %v2447
      %2449 = vmatmul.bf16.gmra.mxu0 %v2368
      %v2450 = vpop.f32.mrf.mxu0
      %v2451 = vadd.f32 0.0, %v2450
      %v2452 = vpop.f32.mrf.mxu0
      %v2453 = vadd.f32 0.0, %v2452
      %2454 = vmatmul.bf16.gmra.mxu0 %v2369
      %v2455 = vpop.f32.mrf.mxu0
      %v2456 = vadd.f32 0.0, %v2455
      %v2457 = vpop.f32.mrf.mxu0
      %v2458 = vadd.f32 0.0, %v2457
      %2459 = vmatmul.bf16.gmra.mxu0 %v2370
      %v2460 = vpop.f32.mrf.mxu0
      %v2461 = vadd.f32 0.0, %v2460
      %v2462 = vpop.f32.mrf.mxu0
      %v2463 = vadd.f32 0.0, %v2462
      %2464 = vdwg.mxu0
      %v2465 = vadd.f32 %v2353, %v2446
      %v2466 = vadd.f32 %v2354, %v2448
      %v2467 = vadd.f32 %v2355, %v2451
      %v2468 = vadd.f32 %v2356, %v2453
      %v2469 = vadd.f32 %v2357, %v2456
      %v2470 = vadd.f32 %v2358, %v2458
      %v2471 = vadd.f32 %v2359, %v2461
      %v2472 = vadd.f32 %v2360, %v2463
      %v2473 = vrot.slane %v703, 2
      %v2474 = vrot.slane %v704, 2
      %v2475 = vsel %vm1071, %v2473, %v2474
      %v2477 = vpack.c.bf16 %v2125, %v2122
      %v2478 = vpack.c.bf16 %v2131, %v2128
      %v2479 = vpack.c.bf16 %v2137, %v2134
      %v2480 = vpack.c.bf16 %v2475, %v2140
      %s2481 = scalar_lea.vmem %s3, 896
      %v2482 = vld [vmem:[%s2481] sm:$0xf]
      %v2483 = vld [vmem:[%s2481 + $0x4] sm:$0xf]
      %v2484 = vld [vmem:[%s2481 + $0x8] sm:$0xf]
      %v2485 = vld [vmem:[%s2481 + $0xc] sm:$0xf]
      %v2486 = vld [vmem:[%s2481 + $0x10] sm:$0xf]
      %v2487 = vld [vmem:[%s2481 + $0x14] sm:$0xf]
      %v2488 = vld [vmem:[%s2481 + $0x18] sm:$0xf]
      %v2489 = vld [vmem:[%s2481 + $0x1c] sm:$0xf]
      %v2490 = vld [vmem:[%s2481 + $0x20] sm:$0xf]
      %v2491 = vld [vmem:[%s2481 + $0x24] sm:$0xf]
      %v2492 = vld [vmem:[%s2481 + $0x28] sm:$0xf]
      %v2493 = vld [vmem:[%s2481 + $0x2c] sm:$0xf]
      %v2494 = vld [vmem:[%s2481 + $0x30] sm:$0xf]
      %v2495 = vld [vmem:[%s2481 + $0x34] sm:$0xf]
      %v2496 = vld [vmem:[%s2481 + $0x38] sm:$0xf]
      %v2497 = vld [vmem:[%s2481 + $0x3c] sm:$0xf]
      %v2514 = vunpack.c.l.b16 %v2482
      %v2515 = vunpack.c.l.b16 %v2483
      %v2516 = vunpack.c.l.b16 %v2484
      %v2517 = vunpack.c.l.b16 %v2485
      %v2518 = vunpack.c.l.b16 %v2486
      %v2519 = vunpack.c.l.b16 %v2487
      %v2520 = vunpack.c.l.b16 %v2488
      %v2521 = vunpack.c.l.b16 %v2489
      %v2522 = vunpack.c.l.b16 %v2490
      %v2523 = vunpack.c.l.b16 %v2491
      %v2524 = vunpack.c.l.b16 %v2492
      %v2525 = vunpack.c.l.b16 %v2493
      %v2526 = vunpack.c.l.b16 %v2494
      %v2527 = vunpack.c.l.b16 %v2495
      %v2528 = vunpack.c.l.b16 %v2496
      %v2529 = vunpack.c.l.b16 %v2497
      %v2530 = vpack.c.b16 %v2515, %v2514
      %v2531 = vpack.c.b16 %v2517, %v2516
      %v2532 = vpack.c.b16 %v2519, %v2518
      %v2533 = vpack.c.b16 %v2521, %v2520
      %v2534 = vpack.c.b16 %v2523, %v2522
      %v2535 = vpack.c.b16 %v2525, %v2524
      %v2536 = vpack.c.b16 %v2527, %v2526
      %v2537 = vpack.c.b16 %v2529, %v2528
      %2546 = vmatpush.bf16.msra.mxu0 %v2537
      %2547 = vmatpush.bf16.msra.mxu0 %v2536
      %2548 = vmatpush.bf16.msra.mxu0 %v2535
      %2549 = vmatpush.bf16.msra.mxu0 %v2534
      %2550 = vmatpush.bf16.msra.mxu0 %v2533
      %2551 = vmatpush.bf16.msra.mxu0 %v2532
      %2552 = vmatpush.bf16.msra.mxu0 %v2531
      %2553 = vmatpush.bf16.msra.mxu0 %v2530
      %2554 = vmatmul.bf16.gmra.mxu0 %v2477
      %v2555 = vpop.f32.mrf.mxu0
      %v2556 = vadd.f32 0.0, %v2555
      %v2557 = vpop.f32.mrf.mxu0
      %v2558 = vadd.f32 0.0, %v2557
      %2559 = vmatmul.bf16.gmra.mxu0 %v2478
      %v2560 = vpop.f32.mrf.mxu0
      %v2561 = vadd.f32 0.0, %v2560
      %v2562 = vpop.f32.mrf.mxu0
      %v2563 = vadd.f32 0.0, %v2562
      %2564 = vmatmul.bf16.gmra.mxu0 %v2479
      %v2565 = vpop.f32.mrf.mxu0
      %v2566 = vadd.f32 0.0, %v2565
      %v2567 = vpop.f32.mrf.mxu0
      %v2568 = vadd.f32 0.0, %v2567
      %2569 = vmatmul.bf16.gmra.mxu0 %v2480
      %v2570 = vpop.f32.mrf.mxu0
      %v2571 = vadd.f32 0.0, %v2570
      %v2572 = vpop.f32.mrf.mxu0
      %v2573 = vadd.f32 0.0, %v2572
      %2574 = vdwg.mxu0
      %v2575 = vadd.f32 %v2465, %v2556
      %v2576 = vadd.f32 %v2466, %v2558
      %v2577 = vadd.f32 %v2467, %v2561
      %v2578 = vadd.f32 %v2468, %v2563
      %v2579 = vadd.f32 %v2469, %v2566
      %v2580 = vadd.f32 %v2470, %v2568
      %v2581 = vadd.f32 %v2471, %v2571
      %v2582 = vadd.f32 %v2472, %v2573
      %v2583 = vpack.c.bf16 %v705, %v703
      %s2584 = scalar_lea.vmem %s3, 960
      %v2585 = vld [vmem:[%s2584] sm:$0xf]
      %v2586 = vld [vmem:[%s2584 + $0x4] sm:$0xf]
      %v2587 = vld [vmem:[%s2584 + $0x8] sm:$0xf]
      %v2588 = vld [vmem:[%s2584 + $0xc] sm:$0xf]
      %v2589 = vld [vmem:[%s2584 + $0x10] sm:$0xf]
      %v2590 = vld [vmem:[%s2584 + $0x14] sm:$0xf]
      %v2591 = vld [vmem:[%s2584 + $0x18] sm:$0xf]
      %v2592 = vld [vmem:[%s2584 + $0x1c] sm:$0xf]
      %v2593 = vld [vmem:[%s2584 + $0x20] sm:$0xf]
      %v2594 = vld [vmem:[%s2584 + $0x24] sm:$0xf]
      %v2595 = vld [vmem:[%s2584 + $0x28] sm:$0xf]
      %v2596 = vld [vmem:[%s2584 + $0x2c] sm:$0xf]
      %v2597 = vld [vmem:[%s2584 + $0x30] sm:$0xf]
      %v2598 = vld [vmem:[%s2584 + $0x34] sm:$0xf]
      %v2599 = vld [vmem:[%s2584 + $0x38] sm:$0xf]
      %v2600 = vld [vmem:[%s2584 + $0x3c] sm:$0xf]
      %v2617 = vunpack.c.l.b16 %v2585
      %v2618 = vunpack.c.l.b16 %v2586
      %v2619 = vunpack.c.l.b16 %v2587
      %v2620 = vunpack.c.l.b16 %v2588
      %v2621 = vunpack.c.l.b16 %v2589
      %v2622 = vunpack.c.l.b16 %v2590
      %v2623 = vunpack.c.l.b16 %v2591
      %v2624 = vunpack.c.l.b16 %v2592
      %v2625 = vunpack.c.l.b16 %v2593
      %v2626 = vunpack.c.l.b16 %v2594
      %v2627 = vunpack.c.l.b16 %v2595
      %v2628 = vunpack.c.l.b16 %v2596
      %v2629 = vunpack.c.l.b16 %v2597
      %v2630 = vunpack.c.l.b16 %v2598
      %v2631 = vunpack.c.l.b16 %v2599
      %v2632 = vunpack.c.l.b16 %v2600
      %v2633 = vpack.c.b16 %v2618, %v2617
      %v2634 = vpack.c.b16 %v2620, %v2619
      %v2635 = vpack.c.b16 %v2622, %v2621
      %v2636 = vpack.c.b16 %v2624, %v2623
      %v2637 = vpack.c.b16 %v2626, %v2625
      %v2638 = vpack.c.b16 %v2628, %v2627
      %v2639 = vpack.c.b16 %v2630, %v2629
      %v2640 = vpack.c.b16 %v2632, %v2631
      %2649 = vmatpush.bf16.msra.mxu0 %v2640
      %2650 = vmatpush.bf16.msra.mxu0 %v2639
      %2651 = vmatpush.bf16.msra.mxu0 %v2638
      %2652 = vmatpush.bf16.msra.mxu0 %v2637
      %2653 = vmatpush.bf16.msra.mxu0 %v2636
      %2654 = vmatpush.bf16.msra.mxu0 %v2635
      %2655 = vmatpush.bf16.msra.mxu0 %v2634
      %2656 = vmatpush.bf16.msra.mxu0 %v2633
      %2657 = vmatmul.bf16.gmra.mxu0 %v1858
      %v2658 = vpop.f32.mrf.mxu0
      %v2659 = vadd.f32 0.0, %v2658
      %v2660 = vpop.f32.mrf.mxu0
      %v2661 = vadd.f32 0.0, %v2660
      %2662 = vmatmul.bf16.gmra.mxu0 %v1859
      %v2663 = vpop.f32.mrf.mxu0
      %v2664 = vadd.f32 0.0, %v2663
      %v2665 = vpop.f32.mrf.mxu0
      %v2666 = vadd.f32 0.0, %v2665
      %2667 = vmatmul.bf16.gmra.mxu0 %v1860
      %v2668 = vpop.f32.mrf.mxu0
      %v2669 = vadd.f32 0.0, %v2668
      %v2670 = vpop.f32.mrf.mxu0
      %v2671 = vadd.f32 0.0, %v2670
      %2672 = vmatmul.bf16.gmra.mxu0 %v2583
      %v2673 = vpop.f32.mrf.mxu0
      %v2674 = vadd.f32 0.0, %v2673
      %v2675 = vpop.f32.mrf.mxu0
      %v2676 = vadd.f32 0.0, %v2675
      %2677 = vdwg.mxu0
      %v2678 = vadd.f32 %v2575, %v2659
      %v2679 = vadd.f32 %v2576, %v2661
      %v2680 = vadd.f32 %v2577, %v2664
      %v2681 = vadd.f32 %v2578, %v2666
      %v2682 = vadd.f32 %v2579, %v2669
      %v2683 = vadd.f32 %v2580, %v2671
      %v2684 = vadd.f32 %v2581, %v2674
      %v2685 = vadd.f32 %v2582, %v2676
      %v2688 = vrot.slane %v705, 1
      %v2689 = vrot.slane %v706, 1
      %v2690 = vsel %vm863, %v2688, %v2689
      %v2692 = vpack.c.bf16 %v2690, %v2365
      %s2693 = scalar_lea.vmem %s3, 1024
      %v2694 = vld [vmem:[%s2693] sm:$0xf]
      %v2695 = vld [vmem:[%s2693 + $0x4] sm:$0xf]
      %v2696 = vld [vmem:[%s2693 + $0x8] sm:$0xf]
      %v2697 = vld [vmem:[%s2693 + $0xc] sm:$0xf]
      %v2698 = vld [vmem:[%s2693 + $0x10] sm:$0xf]
      %v2699 = vld [vmem:[%s2693 + $0x14] sm:$0xf]
      %v2700 = vld [vmem:[%s2693 + $0x18] sm:$0xf]
      %v2701 = vld [vmem:[%s2693 + $0x1c] sm:$0xf]
      %v2702 = vld [vmem:[%s2693 + $0x20] sm:$0xf]
      %v2703 = vld [vmem:[%s2693 + $0x24] sm:$0xf]
      %v2704 = vld [vmem:[%s2693 + $0x28] sm:$0xf]
      %v2705 = vld [vmem:[%s2693 + $0x2c] sm:$0xf]
      %v2706 = vld [vmem:[%s2693 + $0x30] sm:$0xf]
      %v2707 = vld [vmem:[%s2693 + $0x34] sm:$0xf]
      %v2708 = vld [vmem:[%s2693 + $0x38] sm:$0xf]
      %v2709 = vld [vmem:[%s2693 + $0x3c] sm:$0xf]
      %v2726 = vunpack.c.l.b16 %v2694
      %v2727 = vunpack.c.l.b16 %v2695
      %v2728 = vunpack.c.l.b16 %v2696
      %v2729 = vunpack.c.l.b16 %v2697
      %v2730 = vunpack.c.l.b16 %v2698
      %v2731 = vunpack.c.l.b16 %v2699
      %v2732 = vunpack.c.l.b16 %v2700
      %v2733 = vunpack.c.l.b16 %v2701
      %v2734 = vunpack.c.l.b16 %v2702
      %v2735 = vunpack.c.l.b16 %v2703
      %v2736 = vunpack.c.l.b16 %v2704
      %v2737 = vunpack.c.l.b16 %v2705
      %v2738 = vunpack.c.l.b16 %v2706
      %v2739 = vunpack.c.l.b16 %v2707
      %v2740 = vunpack.c.l.b16 %v2708
      %v2741 = vunpack.c.l.b16 %v2709
      %v2742 = vpack.c.b16 %v2727, %v2726
      %v2743 = vpack.c.b16 %v2729, %v2728
      %v2744 = vpack.c.b16 %v2731, %v2730
      %v2745 = vpack.c.b16 %v2733, %v2732
      %v2746 = vpack.c.b16 %v2735, %v2734
      %v2747 = vpack.c.b16 %v2737, %v2736
      %v2748 = vpack.c.b16 %v2739, %v2738
      %v2749 = vpack.c.b16 %v2741, %v2740
      %2758 = vmatpush.bf16.msra.mxu0 %v2749
      %2759 = vmatpush.bf16.msra.mxu0 %v2748
      %2760 = vmatpush.bf16.msra.mxu0 %v2747
      %2761 = vmatpush.bf16.msra.mxu0 %v2746
      %2762 = vmatpush.bf16.msra.mxu0 %v2745
      %2763 = vmatpush.bf16.msra.mxu0 %v2744
      %2764 = vmatpush.bf16.msra.mxu0 %v2743
      %2765 = vmatpush.bf16.msra.mxu0 %v2742
      %2766 = vmatmul.bf16.gmra.mxu0 %v2012
      %v2767 = vpop.f32.mrf.mxu0
      %v2768 = vadd.f32 0.0, %v2767
      %v2769 = vpop.f32.mrf.mxu0
      %v2770 = vadd.f32 0.0, %v2769
      %2771 = vmatmul.bf16.gmra.mxu0 %v2013
      %v2772 = vpop.f32.mrf.mxu0
      %v2773 = vadd.f32 0.0, %v2772
      %v2774 = vpop.f32.mrf.mxu0
      %v2775 = vadd.f32 0.0, %v2774
      %2776 = vmatmul.bf16.gmra.mxu0 %v2014
      %v2777 = vpop.f32.mrf.mxu0
      %v2778 = vadd.f32 0.0, %v2777
      %v2779 = vpop.f32.mrf.mxu0
      %v2780 = vadd.f32 0.0, %v2779
      %2781 = vmatmul.bf16.gmra.mxu0 %v2692
      %v2782 = vpop.f32.mrf.mxu0
      %v2783 = vadd.f32 0.0, %v2782
      %v2784 = vpop.f32.mrf.mxu0
      %v2785 = vadd.f32 0.0, %v2784
      %2786 = vdwg.mxu0
      %v2787 = vadd.f32 %v2678, %v2768
      %v2788 = vadd.f32 %v2679, %v2770
      %v2789 = vadd.f32 %v2680, %v2773
      %v2790 = vadd.f32 %v2681, %v2775
      %v2791 = vadd.f32 %v2682, %v2778
      %v2792 = vadd.f32 %v2683, %v2780
      %v2793 = vadd.f32 %v2684, %v2783
      %v2794 = vadd.f32 %v2685, %v2785
      %v2795 = vrot.slane %v705, 2
      %v2796 = vrot.slane %v706, 2
      %v2797 = vsel %vm1071, %v2795, %v2796
      %v2799 = vpack.c.bf16 %v2797, %v2475
      %s2800 = scalar_lea.vmem %s3, 1088
      %v2801 = vld [vmem:[%s2800] sm:$0xf]
      %v2802 = vld [vmem:[%s2800 + $0x4] sm:$0xf]
      %v2803 = vld [vmem:[%s2800 + $0x8] sm:$0xf]
      %v2804 = vld [vmem:[%s2800 + $0xc] sm:$0xf]
      %v2805 = vld [vmem:[%s2800 + $0x10] sm:$0xf]
      %v2806 = vld [vmem:[%s2800 + $0x14] sm:$0xf]
      %v2807 = vld [vmem:[%s2800 + $0x18] sm:$0xf]
      %v2808 = vld [vmem:[%s2800 + $0x1c] sm:$0xf]
      %v2809 = vld [vmem:[%s2800 + $0x20] sm:$0xf]
      %v2810 = vld [vmem:[%s2800 + $0x24] sm:$0xf]
      %v2811 = vld [vmem:[%s2800 + $0x28] sm:$0xf]
      %v2812 = vld [vmem:[%s2800 + $0x2c] sm:$0xf]
      %v2813 = vld [vmem:[%s2800 + $0x30] sm:$0xf]
      %v2814 = vld [vmem:[%s2800 + $0x34] sm:$0xf]
      %v2815 = vld [vmem:[%s2800 + $0x38] sm:$0xf]
      %v2816 = vld [vmem:[%s2800 + $0x3c] sm:$0xf]
      %v2833 = vunpack.c.l.b16 %v2801
      %v2834 = vunpack.c.l.b16 %v2802
      %v2835 = vunpack.c.l.b16 %v2803
      %v2836 = vunpack.c.l.b16 %v2804
      %v2837 = vunpack.c.l.b16 %v2805
      %v2838 = vunpack.c.l.b16 %v2806
      %v2839 = vunpack.c.l.b16 %v2807
      %v2840 = vunpack.c.l.b16 %v2808
      %v2841 = vunpack.c.l.b16 %v2809
      %v2842 = vunpack.c.l.b16 %v2810
      %v2843 = vunpack.c.l.b16 %v2811
      %v2844 = vunpack.c.l.b16 %v2812
      %v2845 = vunpack.c.l.b16 %v2813
      %v2846 = vunpack.c.l.b16 %v2814
      %v2847 = vunpack.c.l.b16 %v2815
      %v2848 = vunpack.c.l.b16 %v2816
      %v2849 = vpack.c.b16 %v2834, %v2833
      %v2850 = vpack.c.b16 %v2836, %v2835
      %v2851 = vpack.c.b16 %v2838, %v2837
      %v2852 = vpack.c.b16 %v2840, %v2839
      %v2853 = vpack.c.b16 %v2842, %v2841
      %v2854 = vpack.c.b16 %v2844, %v2843
      %v2855 = vpack.c.b16 %v2846, %v2845
      %v2856 = vpack.c.b16 %v2848, %v2847
      %2865 = vmatpush.bf16.msra.mxu0 %v2856
      %2866 = vmatpush.bf16.msra.mxu0 %v2855
      %2867 = vmatpush.bf16.msra.mxu0 %v2854
      %2868 = vmatpush.bf16.msra.mxu0 %v2853
      %2869 = vmatpush.bf16.msra.mxu0 %v2852
      %2870 = vmatpush.bf16.msra.mxu0 %v2851
      %2871 = vmatpush.bf16.msra.mxu0 %v2850
      %2872 = vmatpush.bf16.msra.mxu0 %v2849
      %2873 = vmatmul.bf16.gmra.mxu0 %v2150
      %v2874 = vpop.f32.mrf.mxu0
      %v2875 = vadd.f32 0.0, %v2874
      %v2876 = vpop.f32.mrf.mxu0
      %v2877 = vadd.f32 0.0, %v2876
      %2878 = vmatmul.bf16.gmra.mxu0 %v2151
      %v2879 = vpop.f32.mrf.mxu0
      %v2880 = vadd.f32 0.0, %v2879
      %v2881 = vpop.f32.mrf.mxu0
      %v2882 = vadd.f32 0.0, %v2881
      %2883 = vmatmul.bf16.gmra.mxu0 %v2152
      %v2884 = vpop.f32.mrf.mxu0
      %v2885 = vadd.f32 0.0, %v2884
      %v2886 = vpop.f32.mrf.mxu0
      %v2887 = vadd.f32 0.0, %v2886
      %2888 = vmatmul.bf16.gmra.mxu0 %v2799
      %v2889 = vpop.f32.mrf.mxu0
      %v2890 = vadd.f32 0.0, %v2889
      %v2891 = vpop.f32.mrf.mxu0
      %v2892 = vadd.f32 0.0, %v2891
      %2893 = vdwg.mxu0
      %v2894 = vadd.f32 %v2787, %v2875
      %v2895 = vadd.f32 %v2788, %v2877
      %v2896 = vadd.f32 %v2789, %v2880
      %v2897 = vadd.f32 %v2790, %v2882
      %v2898 = vadd.f32 %v2791, %v2885
      %v2899 = vadd.f32 %v2792, %v2887
      %v2900 = vadd.f32 %v2793, %v2890
      %v2901 = vadd.f32 %v2794, %v2892
      %v2902 = vpack.c.bf16 %v809, %v807
      %v2903 = vpack.c.bf16 %v813, %v811
      %v2904 = vpack.c.bf16 %v817, %v815
      %v2905 = vpack.c.bf16 %v821, %v819
      %s2906 = scalar_lea.vmem %s3, 1152
      %v2907 = vld [vmem:[%s2906] sm:$0xf]
      %v2908 = vld [vmem:[%s2906 + $0x4] sm:$0xf]
      %v2909 = vld [vmem:[%s2906 + $0x8] sm:$0xf]
      %v2910 = vld [vmem:[%s2906 + $0xc] sm:$0xf]
      %v2911 = vld [vmem:[%s2906 + $0x10] sm:$0xf]
      %v2912 = vld [vmem:[%s2906 + $0x14] sm:$0xf]
      %v2913 = vld [vmem:[%s2906 + $0x18] sm:$0xf]
      %v2914 = vld [vmem:[%s2906 + $0x1c] sm:$0xf]
      %v2915 = vld [vmem:[%s2906 + $0x20] sm:$0xf]
      %v2916 = vld [vmem:[%s2906 + $0x24] sm:$0xf]
      %v2917 = vld [vmem:[%s2906 + $0x28] sm:$0xf]
      %v2918 = vld [vmem:[%s2906 + $0x2c] sm:$0xf]
      %v2919 = vld [vmem:[%s2906 + $0x30] sm:$0xf]
      %v2920 = vld [vmem:[%s2906 + $0x34] sm:$0xf]
      %v2921 = vld [vmem:[%s2906 + $0x38] sm:$0xf]
      %v2922 = vld [vmem:[%s2906 + $0x3c] sm:$0xf]
      %v2939 = vunpack.c.l.b16 %v2907
      %v2940 = vunpack.c.l.b16 %v2908
      %v2941 = vunpack.c.l.b16 %v2909
      %v2942 = vunpack.c.l.b16 %v2910
      %v2943 = vunpack.c.l.b16 %v2911
      %v2944 = vunpack.c.l.b16 %v2912
      %v2945 = vunpack.c.l.b16 %v2913
      %v2946 = vunpack.c.l.b16 %v2914
      %v2947 = vunpack.c.l.b16 %v2915
      %v2948 = vunpack.c.l.b16 %v2916
      %v2949 = vunpack.c.l.b16 %v2917
      %v2950 = vunpack.c.l.b16 %v2918
      %v2951 = vunpack.c.l.b16 %v2919
      %v2952 = vunpack.c.l.b16 %v2920
      %v2953 = vunpack.c.l.b16 %v2921
      %v2954 = vunpack.c.l.b16 %v2922
      %v2955 = vpack.c.b16 %v2940, %v2939
      %v2956 = vpack.c.b16 %v2942, %v2941
      %v2957 = vpack.c.b16 %v2944, %v2943
      %v2958 = vpack.c.b16 %v2946, %v2945
      %v2959 = vpack.c.b16 %v2948, %v2947
      %v2960 = vpack.c.b16 %v2950, %v2949
      %v2961 = vpack.c.b16 %v2952, %v2951
      %v2962 = vpack.c.b16 %v2954, %v2953
      %2971 = vmatpush.bf16.msra.mxu0 %v2962
      %2972 = vmatpush.bf16.msra.mxu0 %v2961
      %2973 = vmatpush.bf16.msra.mxu0 %v2960
      %2974 = vmatpush.bf16.msra.mxu0 %v2959
      %2975 = vmatpush.bf16.msra.mxu0 %v2958
      %2976 = vmatpush.bf16.msra.mxu0 %v2957
      %2977 = vmatpush.bf16.msra.mxu0 %v2956
      %2978 = vmatpush.bf16.msra.mxu0 %v2955
      %2979 = vmatmul.bf16.gmra.mxu0 %v2902
      %v2980 = vpop.f32.mrf.mxu0
      %v2981 = vadd.f32 0.0, %v2980
      %v2982 = vpop.f32.mrf.mxu0
      %v2983 = vadd.f32 0.0, %v2982
      %2984 = vmatmul.bf16.gmra.mxu0 %v2903
      %v2985 = vpop.f32.mrf.mxu0
      %v2986 = vadd.f32 0.0, %v2985
      %v2987 = vpop.f32.mrf.mxu0
      %v2988 = vadd.f32 0.0, %v2987
      %2989 = vmatmul.bf16.gmra.mxu0 %v2904
      %v2990 = vpop.f32.mrf.mxu0
      %v2991 = vadd.f32 0.0, %v2990
      %v2992 = vpop.f32.mrf.mxu0
      %v2993 = vadd.f32 0.0, %v2992
      %2994 = vmatmul.bf16.gmra.mxu0 %v2905
      %v2995 = vpop.f32.mrf.mxu0
      %v2996 = vadd.f32 0.0, %v2995
      %v2997 = vpop.f32.mrf.mxu0
      %v2998 = vadd.f32 0.0, %v2997
      %2999 = vdwg.mxu0
      %v3000 = vadd.f32 %v2894, %v2981
      %v3001 = vadd.f32 %v2895, %v2983
      %v3002 = vadd.f32 %v2896, %v2986
      %v3003 = vadd.f32 %v2897, %v2988
      %v3004 = vadd.f32 %v2898, %v2991
      %v3005 = vadd.f32 %v2899, %v2993
      %v3006 = vadd.f32 %v2900, %v2996
      %v3007 = vadd.f32 %v2901, %v2998
      %v3024 = vrot.slane %v807, 1
      %v3025 = vrot.slane %v808, 1
      %v3026 = vsel %vm863, %v3024, %v3025
      %v3027 = vrot.slane %v809, 1
      %v3028 = vrot.slane %v810, 1
      %v3029 = vsel %vm863, %v3027, %v3028
      %v3030 = vrot.slane %v811, 1
      %v3031 = vrot.slane %v812, 1
      %v3032 = vsel %vm863, %v3030, %v3031
      %v3033 = vrot.slane %v813, 1
      %v3034 = vrot.slane %v814, 1
      %v3035 = vsel %vm863, %v3033, %v3034
      %v3036 = vrot.slane %v815, 1
      %v3037 = vrot.slane %v816, 1
      %v3038 = vsel %vm863, %v3036, %v3037
      %v3039 = vrot.slane %v817, 1
      %v3040 = vrot.slane %v818, 1
      %v3041 = vsel %vm863, %v3039, %v3040
      %v3042 = vrot.slane %v819, 1
      %v3043 = vrot.slane %v820, 1
      %v3044 = vsel %vm863, %v3042, %v3043
      %v3045 = vrot.slane %v821, 1
      %v3046 = vrot.slane %v822, 1
      %v3047 = vsel %vm863, %v3045, %v3046
      %v3056 = vpack.c.bf16 %v3029, %v3026
      %v3057 = vpack.c.bf16 %v3035, %v3032
      %v3058 = vpack.c.bf16 %v3041, %v3038
      %v3059 = vpack.c.bf16 %v3047, %v3044
      %s3060 = scalar_lea.vmem %s3, 1216
      %v3061 = vld [vmem:[%s3060] sm:$0xf]
      %v3062 = vld [vmem:[%s3060 + $0x4] sm:$0xf]
      %v3063 = vld [vmem:[%s3060 + $0x8] sm:$0xf]
      %v3064 = vld [vmem:[%s3060 + $0xc] sm:$0xf]
      %v3065 = vld [vmem:[%s3060 + $0x10] sm:$0xf]
      %v3066 = vld [vmem:[%s3060 + $0x14] sm:$0xf]
      %v3067 = vld [vmem:[%s3060 + $0x18] sm:$0xf]
      %v3068 = vld [vmem:[%s3060 + $0x1c] sm:$0xf]
      %v3069 = vld [vmem:[%s3060 + $0x20] sm:$0xf]
      %v3070 = vld [vmem:[%s3060 + $0x24] sm:$0xf]
      %v3071 = vld [vmem:[%s3060 + $0x28] sm:$0xf]
      %v3072 = vld [vmem:[%s3060 + $0x2c] sm:$0xf]
      %v3073 = vld [vmem:[%s3060 + $0x30] sm:$0xf]
      %v3074 = vld [vmem:[%s3060 + $0x34] sm:$0xf]
      %v3075 = vld [vmem:[%s3060 + $0x38] sm:$0xf]
      %v3076 = vld [vmem:[%s3060 + $0x3c] sm:$0xf]
      %v3093 = vunpack.c.l.b16 %v3061
      %v3094 = vunpack.c.l.b16 %v3062
      %v3095 = vunpack.c.l.b16 %v3063
      %v3096 = vunpack.c.l.b16 %v3064
      %v3097 = vunpack.c.l.b16 %v3065
      %v3098 = vunpack.c.l.b16 %v3066
      %v3099 = vunpack.c.l.b16 %v3067
      %v3100 = vunpack.c.l.b16 %v3068
      %v3101 = vunpack.c.l.b16 %v3069
      %v3102 = vunpack.c.l.b16 %v3070
      %v3103 = vunpack.c.l.b16 %v3071
      %v3104 = vunpack.c.l.b16 %v3072
      %v3105 = vunpack.c.l.b16 %v3073
      %v3106 = vunpack.c.l.b16 %v3074
      %v3107 = vunpack.c.l.b16 %v3075
      %v3108 = vunpack.c.l.b16 %v3076
      %v3109 = vpack.c.b16 %v3094, %v3093
      %v3110 = vpack.c.b16 %v3096, %v3095
      %v3111 = vpack.c.b16 %v3098, %v3097
      %v3112 = vpack.c.b16 %v3100, %v3099
      %v3113 = vpack.c.b16 %v3102, %v3101
      %v3114 = vpack.c.b16 %v3104, %v3103
      %v3115 = vpack.c.b16 %v3106, %v3105
      %v3116 = vpack.c.b16 %v3108, %v3107
      %3125 = vmatpush.bf16.msra.mxu0 %v3116
      %3126 = vmatpush.bf16.msra.mxu0 %v3115
      %3127 = vmatpush.bf16.msra.mxu0 %v3114
      %3128 = vmatpush.bf16.msra.mxu0 %v3113
      %3129 = vmatpush.bf16.msra.mxu0 %v3112
      %3130 = vmatpush.bf16.msra.mxu0 %v3111
      %3131 = vmatpush.bf16.msra.mxu0 %v3110
      %3132 = vmatpush.bf16.msra.mxu0 %v3109
      %3133 = vmatmul.bf16.gmra.mxu0 %v3056
      %v3134 = vpop.f32.mrf.mxu0
      %v3135 = vadd.f32 0.0, %v3134
      %v3136 = vpop.f32.mrf.mxu0
      %v3137 = vadd.f32 0.0, %v3136
      %3138 = vmatmul.bf16.gmra.mxu0 %v3057
      %v3139 = vpop.f32.mrf.mxu0
      %v3140 = vadd.f32 0.0, %v3139
      %v3141 = vpop.f32.mrf.mxu0
      %v3142 = vadd.f32 0.0, %v3141
      %3143 = vmatmul.bf16.gmra.mxu0 %v3058
      %v3144 = vpop.f32.mrf.mxu0
      %v3145 = vadd.f32 0.0, %v3144
      %v3146 = vpop.f32.mrf.mxu0
      %v3147 = vadd.f32 0.0, %v3146
      %3148 = vmatmul.bf16.gmra.mxu0 %v3059
      %v3149 = vpop.f32.mrf.mxu0
      %v3150 = vadd.f32 0.0, %v3149
      %v3151 = vpop.f32.mrf.mxu0
      %v3152 = vadd.f32 0.0, %v3151
      %3153 = vdwg.mxu0
      %v3154 = vadd.f32 %v3000, %v3135
      %v3155 = vadd.f32 %v3001, %v3137
      %v3156 = vadd.f32 %v3002, %v3140
      %v3157 = vadd.f32 %v3003, %v3142
      %v3158 = vadd.f32 %v3004, %v3145
      %v3159 = vadd.f32 %v3005, %v3147
      %v3160 = vadd.f32 %v3006, %v3150
      %v3161 = vadd.f32 %v3007, %v3152
      %v3162 = vrot.slane %v807, 2
      %v3163 = vrot.slane %v808, 2
      %v3164 = vsel %vm1071, %v3162, %v3163
      %v3165 = vrot.slane %v809, 2
      %v3166 = vrot.slane %v810, 2
      %v3167 = vsel %vm1071, %v3165, %v3166
      %v3168 = vrot.slane %v811, 2
      %v3169 = vrot.slane %v812, 2
      %v3170 = vsel %vm1071, %v3168, %v3169
      %v3171 = vrot.slane %v813, 2
      %v3172 = vrot.slane %v814, 2
      %v3173 = vsel %vm1071, %v3171, %v3172
      %v3174 = vrot.slane %v815, 2
      %v3175 = vrot.slane %v816, 2
      %v3176 = vsel %vm1071, %v3174, %v3175
      %v3177 = vrot.slane %v817, 2
      %v3178 = vrot.slane %v818, 2
      %v3179 = vsel %vm1071, %v3177, %v3178
      %v3180 = vrot.slane %v819, 2
      %v3181 = vrot.slane %v820, 2
      %v3182 = vsel %vm1071, %v3180, %v3181
      %v3183 = vrot.slane %v821, 2
      %v3184 = vrot.slane %v822, 2
      %v3185 = vsel %vm1071, %v3183, %v3184
      %v3194 = vpack.c.bf16 %v3167, %v3164
      %v3195 = vpack.c.bf16 %v3173, %v3170
      %v3196 = vpack.c.bf16 %v3179, %v3176
      %v3197 = vpack.c.bf16 %v3185, %v3182
      %s3198 = scalar_lea.vmem %s3, 1280
      %v3199 = vld [vmem:[%s3198] sm:$0xf]
      %v3200 = vld [vmem:[%s3198 + $0x4] sm:$0xf]
      %v3201 = vld [vmem:[%s3198 + $0x8] sm:$0xf]
      %v3202 = vld [vmem:[%s3198 + $0xc] sm:$0xf]
      %v3203 = vld [vmem:[%s3198 + $0x10] sm:$0xf]
      %v3204 = vld [vmem:[%s3198 + $0x14] sm:$0xf]
      %v3205 = vld [vmem:[%s3198 + $0x18] sm:$0xf]
      %v3206 = vld [vmem:[%s3198 + $0x1c] sm:$0xf]
      %v3207 = vld [vmem:[%s3198 + $0x20] sm:$0xf]
      %v3208 = vld [vmem:[%s3198 + $0x24] sm:$0xf]
      %v3209 = vld [vmem:[%s3198 + $0x28] sm:$0xf]
      %v3210 = vld [vmem:[%s3198 + $0x2c] sm:$0xf]
      %v3211 = vld [vmem:[%s3198 + $0x30] sm:$0xf]
      %v3212 = vld [vmem:[%s3198 + $0x34] sm:$0xf]
      %v3213 = vld [vmem:[%s3198 + $0x38] sm:$0xf]
      %v3214 = vld [vmem:[%s3198 + $0x3c] sm:$0xf]
      %v3231 = vunpack.c.l.b16 %v3199
      %v3232 = vunpack.c.l.b16 %v3200
      %v3233 = vunpack.c.l.b16 %v3201
      %v3234 = vunpack.c.l.b16 %v3202
      %v3235 = vunpack.c.l.b16 %v3203
      %v3236 = vunpack.c.l.b16 %v3204
      %v3237 = vunpack.c.l.b16 %v3205
      %v3238 = vunpack.c.l.b16 %v3206
      %v3239 = vunpack.c.l.b16 %v3207
      %v3240 = vunpack.c.l.b16 %v3208
      %v3241 = vunpack.c.l.b16 %v3209
      %v3242 = vunpack.c.l.b16 %v3210
      %v3243 = vunpack.c.l.b16 %v3211
      %v3244 = vunpack.c.l.b16 %v3212
      %v3245 = vunpack.c.l.b16 %v3213
      %v3246 = vunpack.c.l.b16 %v3214
      %v3247 = vpack.c.b16 %v3232, %v3231
      %v3248 = vpack.c.b16 %v3234, %v3233
      %v3249 = vpack.c.b16 %v3236, %v3235
      %v3250 = vpack.c.b16 %v3238, %v3237
      %v3251 = vpack.c.b16 %v3240, %v3239
      %v3252 = vpack.c.b16 %v3242, %v3241
      %v3253 = vpack.c.b16 %v3244, %v3243
      %v3254 = vpack.c.b16 %v3246, %v3245
      %3263 = vmatpush.bf16.msra.mxu0 %v3254
      %3264 = vmatpush.bf16.msra.mxu0 %v3253
      %3265 = vmatpush.bf16.msra.mxu0 %v3252
      %3266 = vmatpush.bf16.msra.mxu0 %v3251
      %3267 = vmatpush.bf16.msra.mxu0 %v3250
      %3268 = vmatpush.bf16.msra.mxu0 %v3249
      %3269 = vmatpush.bf16.msra.mxu0 %v3248
      %3270 = vmatpush.bf16.msra.mxu0 %v3247
      %3271 = vmatmul.bf16.gmra.mxu0 %v3194
      %v3272 = vpop.f32.mrf.mxu0
      %v3273 = vadd.f32 0.0, %v3272
      %v3274 = vpop.f32.mrf.mxu0
      %v3275 = vadd.f32 0.0, %v3274
      %3276 = vmatmul.bf16.gmra.mxu0 %v3195
      %v3277 = vpop.f32.mrf.mxu0
      %v3278 = vadd.f32 0.0, %v3277
      %v3279 = vpop.f32.mrf.mxu0
      %v3280 = vadd.f32 0.0, %v3279
      %3281 = vmatmul.bf16.gmra.mxu0 %v3196
      %v3282 = vpop.f32.mrf.mxu0
      %v3283 = vadd.f32 0.0, %v3282
      %v3284 = vpop.f32.mrf.mxu0
      %v3285 = vadd.f32 0.0, %v3284
      %3286 = vmatmul.bf16.gmra.mxu0 %v3197
      %v3287 = vpop.f32.mrf.mxu0
      %v3288 = vadd.f32 0.0, %v3287
      %v3289 = vpop.f32.mrf.mxu0
      %v3290 = vadd.f32 0.0, %v3289
      %3291 = vdwg.mxu0
      %v3292 = vadd.f32 %v3154, %v3273
      %v3293 = vadd.f32 %v3155, %v3275
      %v3294 = vadd.f32 %v3156, %v3278
      %v3295 = vadd.f32 %v3157, %v3280
      %v3296 = vadd.f32 %v3158, %v3283
      %v3297 = vadd.f32 %v3159, %v3285
      %v3298 = vadd.f32 %v3160, %v3288
      %v3299 = vadd.f32 %v3161, %v3290
      %v3300 = vpack.c.bf16 %v811, %v809
      %v3301 = vpack.c.bf16 %v815, %v813
      %v3302 = vpack.c.bf16 %v819, %v817
      %v3303 = vpack.c.bf16 %v823, %v821
      %s3304 = scalar_lea.vmem %s3, 1344
      %v3305 = vld [vmem:[%s3304] sm:$0xf]
      %v3306 = vld [vmem:[%s3304 + $0x4] sm:$0xf]
      %v3307 = vld [vmem:[%s3304 + $0x8] sm:$0xf]
      %v3308 = vld [vmem:[%s3304 + $0xc] sm:$0xf]
      %v3309 = vld [vmem:[%s3304 + $0x10] sm:$0xf]
      %v3310 = vld [vmem:[%s3304 + $0x14] sm:$0xf]
      %v3311 = vld [vmem:[%s3304 + $0x18] sm:$0xf]
      %v3312 = vld [vmem:[%s3304 + $0x1c] sm:$0xf]
      %v3313 = vld [vmem:[%s3304 + $0x20] sm:$0xf]
      %v3314 = vld [vmem:[%s3304 + $0x24] sm:$0xf]
      %v3315 = vld [vmem:[%s3304 + $0x28] sm:$0xf]
      %v3316 = vld [vmem:[%s3304 + $0x2c] sm:$0xf]
      %v3317 = vld [vmem:[%s3304 + $0x30] sm:$0xf]
      %v3318 = vld [vmem:[%s3304 + $0x34] sm:$0xf]
      %v3319 = vld [vmem:[%s3304 + $0x38] sm:$0xf]
      %v3320 = vld [vmem:[%s3304 + $0x3c] sm:$0xf]
      %v3337 = vunpack.c.l.b16 %v3305
      %v3338 = vunpack.c.l.b16 %v3306
      %v3339 = vunpack.c.l.b16 %v3307
      %v3340 = vunpack.c.l.b16 %v3308
      %v3341 = vunpack.c.l.b16 %v3309
      %v3342 = vunpack.c.l.b16 %v3310
      %v3343 = vunpack.c.l.b16 %v3311
      %v3344 = vunpack.c.l.b16 %v3312
      %v3345 = vunpack.c.l.b16 %v3313
      %v3346 = vunpack.c.l.b16 %v3314
      %v3347 = vunpack.c.l.b16 %v3315
      %v3348 = vunpack.c.l.b16 %v3316
      %v3349 = vunpack.c.l.b16 %v3317
      %v3350 = vunpack.c.l.b16 %v3318
      %v3351 = vunpack.c.l.b16 %v3319
      %v3352 = vunpack.c.l.b16 %v3320
      %v3353 = vpack.c.b16 %v3338, %v3337
      %v3354 = vpack.c.b16 %v3340, %v3339
      %v3355 = vpack.c.b16 %v3342, %v3341
      %v3356 = vpack.c.b16 %v3344, %v3343
      %v3357 = vpack.c.b16 %v3346, %v3345
      %v3358 = vpack.c.b16 %v3348, %v3347
      %v3359 = vpack.c.b16 %v3350, %v3349
      %v3360 = vpack.c.b16 %v3352, %v3351
      %3369 = vmatpush.bf16.msra.mxu0 %v3360
      %3370 = vmatpush.bf16.msra.mxu0 %v3359
      %3371 = vmatpush.bf16.msra.mxu0 %v3358
      %3372 = vmatpush.bf16.msra.mxu0 %v3357
      %3373 = vmatpush.bf16.msra.mxu0 %v3356
      %3374 = vmatpush.bf16.msra.mxu0 %v3355
      %3375 = vmatpush.bf16.msra.mxu0 %v3354
      %3376 = vmatpush.bf16.msra.mxu0 %v3353
      %3377 = vmatmul.bf16.gmra.mxu0 %v3300
      %v3378 = vpop.f32.mrf.mxu0
      %v3379 = vadd.f32 0.0, %v3378
      %v3380 = vpop.f32.mrf.mxu0
      %v3381 = vadd.f32 0.0, %v3380
      %3382 = vmatmul.bf16.gmra.mxu0 %v3301
      %v3383 = vpop.f32.mrf.mxu0
      %v3384 = vadd.f32 0.0, %v3383
      %v3385 = vpop.f32.mrf.mxu0
      %v3386 = vadd.f32 0.0, %v3385
      %3387 = vmatmul.bf16.gmra.mxu0 %v3302
      %v3388 = vpop.f32.mrf.mxu0
      %v3389 = vadd.f32 0.0, %v3388
      %v3390 = vpop.f32.mrf.mxu0
      %v3391 = vadd.f32 0.0, %v3390
      %3392 = vmatmul.bf16.gmra.mxu0 %v3303
      %v3393 = vpop.f32.mrf.mxu0
      %v3394 = vadd.f32 0.0, %v3393
      %v3395 = vpop.f32.mrf.mxu0
      %v3396 = vadd.f32 0.0, %v3395
      %3397 = vdwg.mxu0
      %v3398 = vadd.f32 %v3292, %v3379
      %v3399 = vadd.f32 %v3293, %v3381
      %v3400 = vadd.f32 %v3294, %v3384
      %v3401 = vadd.f32 %v3295, %v3386
      %v3402 = vadd.f32 %v3296, %v3389
      %v3403 = vadd.f32 %v3297, %v3391
      %v3404 = vadd.f32 %v3298, %v3394
      %v3405 = vadd.f32 %v3299, %v3396
      %v3408 = vrot.slane %v823, 1
      %v3409 = vrot.slane %v824, 1
      %v3410 = vsel %vm863, %v3408, %v3409
      %v3412 = vpack.c.bf16 %v3032, %v3029
      %v3413 = vpack.c.bf16 %v3038, %v3035
      %v3414 = vpack.c.bf16 %v3044, %v3041
      %v3415 = vpack.c.bf16 %v3410, %v3047
      %s3416 = scalar_lea.vmem %s3, 1408
      %v3417 = vld [vmem:[%s3416] sm:$0xf]
      %v3418 = vld [vmem:[%s3416 + $0x4] sm:$0xf]
      %v3419 = vld [vmem:[%s3416 + $0x8] sm:$0xf]
      %v3420 = vld [vmem:[%s3416 + $0xc] sm:$0xf]
      %v3421 = vld [vmem:[%s3416 + $0x10] sm:$0xf]
      %v3422 = vld [vmem:[%s3416 + $0x14] sm:$0xf]
      %v3423 = vld [vmem:[%s3416 + $0x18] sm:$0xf]
      %v3424 = vld [vmem:[%s3416 + $0x1c] sm:$0xf]
      %v3425 = vld [vmem:[%s3416 + $0x20] sm:$0xf]
      %v3426 = vld [vmem:[%s3416 + $0x24] sm:$0xf]
      %v3427 = vld [vmem:[%s3416 + $0x28] sm:$0xf]
      %v3428 = vld [vmem:[%s3416 + $0x2c] sm:$0xf]
      %v3429 = vld [vmem:[%s3416 + $0x30] sm:$0xf]
      %v3430 = vld [vmem:[%s3416 + $0x34] sm:$0xf]
      %v3431 = vld [vmem:[%s3416 + $0x38] sm:$0xf]
      %v3432 = vld [vmem:[%s3416 + $0x3c] sm:$0xf]
      %v3449 = vunpack.c.l.b16 %v3417
      %v3450 = vunpack.c.l.b16 %v3418
      %v3451 = vunpack.c.l.b16 %v3419
      %v3452 = vunpack.c.l.b16 %v3420
      %v3453 = vunpack.c.l.b16 %v3421
      %v3454 = vunpack.c.l.b16 %v3422
      %v3455 = vunpack.c.l.b16 %v3423
      %v3456 = vunpack.c.l.b16 %v3424
      %v3457 = vunpack.c.l.b16 %v3425
      %v3458 = vunpack.c.l.b16 %v3426
      %v3459 = vunpack.c.l.b16 %v3427
      %v3460 = vunpack.c.l.b16 %v3428
      %v3461 = vunpack.c.l.b16 %v3429
      %v3462 = vunpack.c.l.b16 %v3430
      %v3463 = vunpack.c.l.b16 %v3431
      %v3464 = vunpack.c.l.b16 %v3432
      %v3465 = vpack.c.b16 %v3450, %v3449
      %v3466 = vpack.c.b16 %v3452, %v3451
      %v3467 = vpack.c.b16 %v3454, %v3453
      %v3468 = vpack.c.b16 %v3456, %v3455
      %v3469 = vpack.c.b16 %v3458, %v3457
      %v3470 = vpack.c.b16 %v3460, %v3459
      %v3471 = vpack.c.b16 %v3462, %v3461
      %v3472 = vpack.c.b16 %v3464, %v3463
      %3481 = vmatpush.bf16.msra.mxu0 %v3472
      %3482 = vmatpush.bf16.msra.mxu0 %v3471
      %3483 = vmatpush.bf16.msra.mxu0 %v3470
      %3484 = vmatpush.bf16.msra.mxu0 %v3469
      %3485 = vmatpush.bf16.msra.mxu0 %v3468
      %3486 = vmatpush.bf16.msra.mxu0 %v3467
      %3487 = vmatpush.bf16.msra.mxu0 %v3466
      %3488 = vmatpush.bf16.msra.mxu0 %v3465
      %3489 = vmatmul.bf16.gmra.mxu0 %v3412
      %v3490 = vpop.f32.mrf.mxu0
      %v3491 = vadd.f32 0.0, %v3490
      %v3492 = vpop.f32.mrf.mxu0
      %v3493 = vadd.f32 0.0, %v3492
      %3494 = vmatmul.bf16.gmra.mxu0 %v3413
      %v3495 = vpop.f32.mrf.mxu0
      %v3496 = vadd.f32 0.0, %v3495
      %v3497 = vpop.f32.mrf.mxu0
      %v3498 = vadd.f32 0.0, %v3497
      %3499 = vmatmul.bf16.gmra.mxu0 %v3414
      %v3500 = vpop.f32.mrf.mxu0
      %v3501 = vadd.f32 0.0, %v3500
      %v3502 = vpop.f32.mrf.mxu0
      %v3503 = vadd.f32 0.0, %v3502
      %3504 = vmatmul.bf16.gmra.mxu0 %v3415
      %v3505 = vpop.f32.mrf.mxu0
      %v3506 = vadd.f32 0.0, %v3505
      %v3507 = vpop.f32.mrf.mxu0
      %v3508 = vadd.f32 0.0, %v3507
      %3509 = vdwg.mxu0
      %v3510 = vadd.f32 %v3398, %v3491
      %v3511 = vadd.f32 %v3399, %v3493
      %v3512 = vadd.f32 %v3400, %v3496
      %v3513 = vadd.f32 %v3401, %v3498
      %v3514 = vadd.f32 %v3402, %v3501
      %v3515 = vadd.f32 %v3403, %v3503
      %v3516 = vadd.f32 %v3404, %v3506
      %v3517 = vadd.f32 %v3405, %v3508
      %v3518 = vrot.slane %v823, 2
      %v3519 = vrot.slane %v824, 2
      %v3520 = vsel %vm1071, %v3518, %v3519
      %v3522 = vpack.c.bf16 %v3170, %v3167
      %v3523 = vpack.c.bf16 %v3176, %v3173
      %v3524 = vpack.c.bf16 %v3182, %v3179
      %v3525 = vpack.c.bf16 %v3520, %v3185
      %s3526 = scalar_lea.vmem %s3, 1472
      %v3527 = vld [vmem:[%s3526] sm:$0xf]
      %v3528 = vld [vmem:[%s3526 + $0x4] sm:$0xf]
      %v3529 = vld [vmem:[%s3526 + $0x8] sm:$0xf]
      %v3530 = vld [vmem:[%s3526 + $0xc] sm:$0xf]
      %v3531 = vld [vmem:[%s3526 + $0x10] sm:$0xf]
      %v3532 = vld [vmem:[%s3526 + $0x14] sm:$0xf]
      %v3533 = vld [vmem:[%s3526 + $0x18] sm:$0xf]
      %v3534 = vld [vmem:[%s3526 + $0x1c] sm:$0xf]
      %v3535 = vld [vmem:[%s3526 + $0x20] sm:$0xf]
      %v3536 = vld [vmem:[%s3526 + $0x24] sm:$0xf]
      %v3537 = vld [vmem:[%s3526 + $0x28] sm:$0xf]
      %v3538 = vld [vmem:[%s3526 + $0x2c] sm:$0xf]
      %v3539 = vld [vmem:[%s3526 + $0x30] sm:$0xf]
      %v3540 = vld [vmem:[%s3526 + $0x34] sm:$0xf]
      %v3541 = vld [vmem:[%s3526 + $0x38] sm:$0xf]
      %v3542 = vld [vmem:[%s3526 + $0x3c] sm:$0xf]
      %v3559 = vunpack.c.l.b16 %v3527
      %v3560 = vunpack.c.l.b16 %v3528
      %v3561 = vunpack.c.l.b16 %v3529
      %v3562 = vunpack.c.l.b16 %v3530
      %v3563 = vunpack.c.l.b16 %v3531
      %v3564 = vunpack.c.l.b16 %v3532
      %v3565 = vunpack.c.l.b16 %v3533
      %v3566 = vunpack.c.l.b16 %v3534
      %v3567 = vunpack.c.l.b16 %v3535
      %v3568 = vunpack.c.l.b16 %v3536
      %v3569 = vunpack.c.l.b16 %v3537
      %v3570 = vunpack.c.l.b16 %v3538
      %v3571 = vunpack.c.l.b16 %v3539
      %v3572 = vunpack.c.l.b16 %v3540
      %v3573 = vunpack.c.l.b16 %v3541
      %v3574 = vunpack.c.l.b16 %v3542
      %v3575 = vpack.c.b16 %v3560, %v3559
      %v3576 = vpack.c.b16 %v3562, %v3561
      %v3577 = vpack.c.b16 %v3564, %v3563
      %v3578 = vpack.c.b16 %v3566, %v3565
      %v3579 = vpack.c.b16 %v3568, %v3567
      %v3580 = vpack.c.b16 %v3570, %v3569
      %v3581 = vpack.c.b16 %v3572, %v3571
      %v3582 = vpack.c.b16 %v3574, %v3573
      %3591 = vmatpush.bf16.msra.mxu0 %v3582
      %3592 = vmatpush.bf16.msra.mxu0 %v3581
      %3593 = vmatpush.bf16.msra.mxu0 %v3580
      %3594 = vmatpush.bf16.msra.mxu0 %v3579
      %3595 = vmatpush.bf16.msra.mxu0 %v3578
      %3596 = vmatpush.bf16.msra.mxu0 %v3577
      %3597 = vmatpush.bf16.msra.mxu0 %v3576
      %3598 = vmatpush.bf16.msra.mxu0 %v3575
      %3599 = vmatmul.bf16.gmra.mxu0 %v3522
      %v3600 = vpop.f32.mrf.mxu0
      %v3601 = vadd.f32 0.0, %v3600
      %v3602 = vpop.f32.mrf.mxu0
      %v3603 = vadd.f32 0.0, %v3602
      %3604 = vmatmul.bf16.gmra.mxu0 %v3523
      %v3605 = vpop.f32.mrf.mxu0
      %v3606 = vadd.f32 0.0, %v3605
      %v3607 = vpop.f32.mrf.mxu0
      %v3608 = vadd.f32 0.0, %v3607
      %3609 = vmatmul.bf16.gmra.mxu0 %v3524
      %v3610 = vpop.f32.mrf.mxu0
      %v3611 = vadd.f32 0.0, %v3610
      %v3612 = vpop.f32.mrf.mxu0
      %v3613 = vadd.f32 0.0, %v3612
      %3614 = vmatmul.bf16.gmra.mxu0 %v3525
      %v3615 = vpop.f32.mrf.mxu0
      %v3616 = vadd.f32 0.0, %v3615
      %v3617 = vpop.f32.mrf.mxu0
      %v3618 = vadd.f32 0.0, %v3617
      %3619 = vdwg.mxu0
      %v3620 = vadd.f32 %v3510, %v3601
      %v3621 = vadd.f32 %v3511, %v3603
      %v3622 = vadd.f32 %v3512, %v3606
      %v3623 = vadd.f32 %v3513, %v3608
      %v3624 = vadd.f32 %v3514, %v3611
      %v3625 = vadd.f32 %v3515, %v3613
      %v3626 = vadd.f32 %v3516, %v3616
      %v3627 = vadd.f32 %v3517, %v3618
      %v3628 = vpack.c.bf16 %v825, %v823
      %s3629 = scalar_lea.vmem %s3, 1536
      %v3630 = vld [vmem:[%s3629] sm:$0xf]
      %v3631 = vld [vmem:[%s3629 + $0x4] sm:$0xf]
      %v3632 = vld [vmem:[%s3629 + $0x8] sm:$0xf]
      %v3633 = vld [vmem:[%s3629 + $0xc] sm:$0xf]
      %v3634 = vld [vmem:[%s3629 + $0x10] sm:$0xf]
      %v3635 = vld [vmem:[%s3629 + $0x14] sm:$0xf]
      %v3636 = vld [vmem:[%s3629 + $0x18] sm:$0xf]
      %v3637 = vld [vmem:[%s3629 + $0x1c] sm:$0xf]
      %v3638 = vld [vmem:[%s3629 + $0x20] sm:$0xf]
      %v3639 = vld [vmem:[%s3629 + $0x24] sm:$0xf]
      %v3640 = vld [vmem:[%s3629 + $0x28] sm:$0xf]
      %v3641 = vld [vmem:[%s3629 + $0x2c] sm:$0xf]
      %v3642 = vld [vmem:[%s3629 + $0x30] sm:$0xf]
      %v3643 = vld [vmem:[%s3629 + $0x34] sm:$0xf]
      %v3644 = vld [vmem:[%s3629 + $0x38] sm:$0xf]
      %v3645 = vld [vmem:[%s3629 + $0x3c] sm:$0xf]
      %v3662 = vunpack.c.l.b16 %v3630
      %v3663 = vunpack.c.l.b16 %v3631
      %v3664 = vunpack.c.l.b16 %v3632
      %v3665 = vunpack.c.l.b16 %v3633
      %v3666 = vunpack.c.l.b16 %v3634
      %v3667 = vunpack.c.l.b16 %v3635
      %v3668 = vunpack.c.l.b16 %v3636
      %v3669 = vunpack.c.l.b16 %v3637
      %v3670 = vunpack.c.l.b16 %v3638
      %v3671 = vunpack.c.l.b16 %v3639
      %v3672 = vunpack.c.l.b16 %v3640
      %v3673 = vunpack.c.l.b16 %v3641
      %v3674 = vunpack.c.l.b16 %v3642
      %v3675 = vunpack.c.l.b16 %v3643
      %v3676 = vunpack.c.l.b16 %v3644
      %v3677 = vunpack.c.l.b16 %v3645
      %v3678 = vpack.c.b16 %v3663, %v3662
      %v3679 = vpack.c.b16 %v3665, %v3664
      %v3680 = vpack.c.b16 %v3667, %v3666
      %v3681 = vpack.c.b16 %v3669, %v3668
      %v3682 = vpack.c.b16 %v3671, %v3670
      %v3683 = vpack.c.b16 %v3673, %v3672
      %v3684 = vpack.c.b16 %v3675, %v3674
      %v3685 = vpack.c.b16 %v3677, %v3676
      %3694 = vmatpush.bf16.msra.mxu0 %v3685
      %3695 = vmatpush.bf16.msra.mxu0 %v3684
      %3696 = vmatpush.bf16.msra.mxu0 %v3683
      %3697 = vmatpush.bf16.msra.mxu0 %v3682
      %3698 = vmatpush.bf16.msra.mxu0 %v3681
      %3699 = vmatpush.bf16.msra.mxu0 %v3680
      %3700 = vmatpush.bf16.msra.mxu0 %v3679
      %3701 = vmatpush.bf16.msra.mxu0 %v3678
      %3702 = vmatmul.bf16.gmra.mxu0 %v2903
      %v3703 = vpop.f32.mrf.mxu0
      %v3704 = vadd.f32 0.0, %v3703
      %v3705 = vpop.f32.mrf.mxu0
      %v3706 = vadd.f32 0.0, %v3705
      %3707 = vmatmul.bf16.gmra.mxu0 %v2904
      %v3708 = vpop.f32.mrf.mxu0
      %v3709 = vadd.f32 0.0, %v3708
      %v3710 = vpop.f32.mrf.mxu0
      %v3711 = vadd.f32 0.0, %v3710
      %3712 = vmatmul.bf16.gmra.mxu0 %v2905
      %v3713 = vpop.f32.mrf.mxu0
      %v3714 = vadd.f32 0.0, %v3713
      %v3715 = vpop.f32.mrf.mxu0
      %v3716 = vadd.f32 0.0, %v3715
      %3717 = vmatmul.bf16.gmra.mxu0 %v3628
      %v3718 = vpop.f32.mrf.mxu0
      %v3719 = vadd.f32 0.0, %v3718
      %v3720 = vpop.f32.mrf.mxu0
      %v3721 = vadd.f32 0.0, %v3720
      %3722 = vdwg.mxu0
      %v3723 = vadd.f32 %v3620, %v3704
      %v3724 = vadd.f32 %v3621, %v3706
      %v3725 = vadd.f32 %v3622, %v3709
      %v3726 = vadd.f32 %v3623, %v3711
      %v3727 = vadd.f32 %v3624, %v3714
      %v3728 = vadd.f32 %v3625, %v3716
      %v3729 = vadd.f32 %v3626, %v3719
      %v3730 = vadd.f32 %v3627, %v3721
      %v3733 = vrot.slane %v825, 1
      %v3734 = vrot.slane %v826, 1
      %v3735 = vsel %vm863, %v3733, %v3734
      %v3737 = vpack.c.bf16 %v3735, %v3410
      %s3738 = scalar_lea.vmem %s3, 1600
      %v3739 = vld [vmem:[%s3738] sm:$0xf]
      %v3740 = vld [vmem:[%s3738 + $0x4] sm:$0xf]
      %v3741 = vld [vmem:[%s3738 + $0x8] sm:$0xf]
      %v3742 = vld [vmem:[%s3738 + $0xc] sm:$0xf]
      %v3743 = vld [vmem:[%s3738 + $0x10] sm:$0xf]
      %v3744 = vld [vmem:[%s3738 + $0x14] sm:$0xf]
      %v3745 = vld [vmem:[%s3738 + $0x18] sm:$0xf]
      %v3746 = vld [vmem:[%s3738 + $0x1c] sm:$0xf]
      %v3747 = vld [vmem:[%s3738 + $0x20] sm:$0xf]
      %v3748 = vld [vmem:[%s3738 + $0x24] sm:$0xf]
      %v3749 = vld [vmem:[%s3738 + $0x28] sm:$0xf]
      %v3750 = vld [vmem:[%s3738 + $0x2c] sm:$0xf]
      %v3751 = vld [vmem:[%s3738 + $0x30] sm:$0xf]
      %v3752 = vld [vmem:[%s3738 + $0x34] sm:$0xf]
      %v3753 = vld [vmem:[%s3738 + $0x38] sm:$0xf]
      %v3754 = vld [vmem:[%s3738 + $0x3c] sm:$0xf]
      %v3771 = vunpack.c.l.b16 %v3739
      %v3772 = vunpack.c.l.b16 %v3740
      %v3773 = vunpack.c.l.b16 %v3741
      %v3774 = vunpack.c.l.b16 %v3742
      %v3775 = vunpack.c.l.b16 %v3743
      %v3776 = vunpack.c.l.b16 %v3744
      %v3777 = vunpack.c.l.b16 %v3745
      %v3778 = vunpack.c.l.b16 %v3746
      %v3779 = vunpack.c.l.b16 %v3747
      %v3780 = vunpack.c.l.b16 %v3748
      %v3781 = vunpack.c.l.b16 %v3749
      %v3782 = vunpack.c.l.b16 %v3750
      %v3783 = vunpack.c.l.b16 %v3751
      %v3784 = vunpack.c.l.b16 %v3752
      %v3785 = vunpack.c.l.b16 %v3753
      %v3786 = vunpack.c.l.b16 %v3754
      %v3787 = vpack.c.b16 %v3772, %v3771
      %v3788 = vpack.c.b16 %v3774, %v3773
      %v3789 = vpack.c.b16 %v3776, %v3775
      %v3790 = vpack.c.b16 %v3778, %v3777
      %v3791 = vpack.c.b16 %v3780, %v3779
      %v3792 = vpack.c.b16 %v3782, %v3781
      %v3793 = vpack.c.b16 %v3784, %v3783
      %v3794 = vpack.c.b16 %v3786, %v3785
      %3803 = vmatpush.bf16.msra.mxu0 %v3794
      %3804 = vmatpush.bf16.msra.mxu0 %v3793
      %3805 = vmatpush.bf16.msra.mxu0 %v3792
      %3806 = vmatpush.bf16.msra.mxu0 %v3791
      %3807 = vmatpush.bf16.msra.mxu0 %v3790
      %3808 = vmatpush.bf16.msra.mxu0 %v3789
      %3809 = vmatpush.bf16.msra.mxu0 %v3788
      %3810 = vmatpush.bf16.msra.mxu0 %v3787
      %3811 = vmatmul.bf16.gmra.mxu0 %v3057
      %v3812 = vpop.f32.mrf.mxu0
      %v3813 = vadd.f32 0.0, %v3812
      %v3814 = vpop.f32.mrf.mxu0
      %v3815 = vadd.f32 0.0, %v3814
      %3816 = vmatmul.bf16.gmra.mxu0 %v3058
      %v3817 = vpop.f32.mrf.mxu0
      %v3818 = vadd.f32 0.0, %v3817
      %v3819 = vpop.f32.mrf.mxu0
      %v3820 = vadd.f32 0.0, %v3819
      %3821 = vmatmul.bf16.gmra.mxu0 %v3059
      %v3822 = vpop.f32.mrf.mxu0
      %v3823 = vadd.f32 0.0, %v3822
      %v3824 = vpop.f32.mrf.mxu0
      %v3825 = vadd.f32 0.0, %v3824
      %3826 = vmatmul.bf16.gmra.mxu0 %v3737
      %v3827 = vpop.f32.mrf.mxu0
      %v3828 = vadd.f32 0.0, %v3827
      %v3829 = vpop.f32.mrf.mxu0
      %v3830 = vadd.f32 0.0, %v3829
      %3831 = vdwg.mxu0
      %v3832 = vadd.f32 %v3723, %v3813
      %v3833 = vadd.f32 %v3724, %v3815
      %v3834 = vadd.f32 %v3725, %v3818
      %v3835 = vadd.f32 %v3726, %v3820
      %v3836 = vadd.f32 %v3727, %v3823
      %v3837 = vadd.f32 %v3728, %v3825
      %v3838 = vadd.f32 %v3729, %v3828
      %v3839 = vadd.f32 %v3730, %v3830
      %v3840 = vrot.slane %v825, 2
      %v3841 = vrot.slane %v826, 2
      %v3842 = vsel %vm1071, %v3840, %v3841
      %v3844 = vpack.c.bf16 %v3842, %v3520
      %s3845 = scalar_lea.vmem %s3, 1664
      %v3846 = vld [vmem:[%s3845] sm:$0xf]
      %v3847 = vld [vmem:[%s3845 + $0x4] sm:$0xf]
      %v3848 = vld [vmem:[%s3845 + $0x8] sm:$0xf]
      %v3849 = vld [vmem:[%s3845 + $0xc] sm:$0xf]
      %v3850 = vld [vmem:[%s3845 + $0x10] sm:$0xf]
      %v3851 = vld [vmem:[%s3845 + $0x14] sm:$0xf]
      %v3852 = vld [vmem:[%s3845 + $0x18] sm:$0xf]
      %v3853 = vld [vmem:[%s3845 + $0x1c] sm:$0xf]
      %v3854 = vld [vmem:[%s3845 + $0x20] sm:$0xf]
      %v3855 = vld [vmem:[%s3845 + $0x24] sm:$0xf]
      %v3856 = vld [vmem:[%s3845 + $0x28] sm:$0xf]
      %v3857 = vld [vmem:[%s3845 + $0x2c] sm:$0xf]
      %v3858 = vld [vmem:[%s3845 + $0x30] sm:$0xf]
      %v3859 = vld [vmem:[%s3845 + $0x34] sm:$0xf]
      %v3860 = vld [vmem:[%s3845 + $0x38] sm:$0xf]
      %v3861 = vld [vmem:[%s3845 + $0x3c] sm:$0xf]
      %v3878 = vunpack.c.l.b16 %v3846
      %v3879 = vunpack.c.l.b16 %v3847
      %v3880 = vunpack.c.l.b16 %v3848
      %v3881 = vunpack.c.l.b16 %v3849
      %v3882 = vunpack.c.l.b16 %v3850
      %v3883 = vunpack.c.l.b16 %v3851
      %v3884 = vunpack.c.l.b16 %v3852
      %v3885 = vunpack.c.l.b16 %v3853
      %v3886 = vunpack.c.l.b16 %v3854
      %v3887 = vunpack.c.l.b16 %v3855
      %v3888 = vunpack.c.l.b16 %v3856
      %v3889 = vunpack.c.l.b16 %v3857
      %v3890 = vunpack.c.l.b16 %v3858
      %v3891 = vunpack.c.l.b16 %v3859
      %v3892 = vunpack.c.l.b16 %v3860
      %v3893 = vunpack.c.l.b16 %v3861
      %v3894 = vpack.c.b16 %v3879, %v3878
      %v3895 = vpack.c.b16 %v3881, %v3880
      %v3896 = vpack.c.b16 %v3883, %v3882
      %v3897 = vpack.c.b16 %v3885, %v3884
      %v3898 = vpack.c.b16 %v3887, %v3886
      %v3899 = vpack.c.b16 %v3889, %v3888
      %v3900 = vpack.c.b16 %v3891, %v3890
      %v3901 = vpack.c.b16 %v3893, %v3892
      %3910 = vmatpush.bf16.msra.mxu0 %v3901
      %3911 = vmatpush.bf16.msra.mxu0 %v3900
      %3912 = vmatpush.bf16.msra.mxu0 %v3899
      %3913 = vmatpush.bf16.msra.mxu0 %v3898
      %3914 = vmatpush.bf16.msra.mxu0 %v3897
      %3915 = vmatpush.bf16.msra.mxu0 %v3896
      %3916 = vmatpush.bf16.msra.mxu0 %v3895
      %3917 = vmatpush.bf16.msra.mxu0 %v3894
      %3918 = vmatmul.bf16.gmra.mxu0 %v3195
      %v3919 = vpop.f32.mrf.mxu0
      %v3920 = vadd.f32 0.0, %v3919
      %v3921 = vpop.f32.mrf.mxu0
      %v3922 = vadd.f32 0.0, %v3921
      %3923 = vmatmul.bf16.gmra.mxu0 %v3196
      %v3924 = vpop.f32.mrf.mxu0
      %v3925 = vadd.f32 0.0, %v3924
      %v3926 = vpop.f32.mrf.mxu0
      %v3927 = vadd.f32 0.0, %v3926
      %3928 = vmatmul.bf16.gmra.mxu0 %v3197
      %v3929 = vpop.f32.mrf.mxu0
      %v3930 = vadd.f32 0.0, %v3929
      %v3931 = vpop.f32.mrf.mxu0
      %v3932 = vadd.f32 0.0, %v3931
      %3933 = vmatmul.bf16.gmra.mxu0 %v3844
      %v3934 = vpop.f32.mrf.mxu0
      %v3935 = vadd.f32 0.0, %v3934
      %v3936 = vpop.f32.mrf.mxu0
      %v3937 = vadd.f32 0.0, %v3936
      %3938 = vdwg.mxu0
      %v3939 = vadd.f32 %v3832, %v3920
      %v3940 = vadd.f32 %v3833, %v3922
      %v3941 = vadd.f32 %v3834, %v3925
      %v3942 = vadd.f32 %v3835, %v3927
      %v3943 = vadd.f32 %v3836, %v3930
      %v3944 = vadd.f32 %v3837, %v3932
      %v3945 = vadd.f32 %v3838, %v3935
      %v3946 = vadd.f32 %v3839, %v3937
      %v3947 = vld [vmem:[%s4] sm:$0x1]
      %v3949 = vperm.slane %v3947, 0
      %v3951 = vadd.f32 %v3939, %v3949
      %v3952 = vadd.f32 %v3940, %v3949
      %v3953 = vadd.f32 %v3941, %v3949
      %v3954 = vadd.f32 %v3942, %v3949
      %v3955 = vadd.f32 %v3943, %v3949
      %v3956 = vadd.f32 %v3944, %v3949
      %v3957 = vadd.f32 %v3945, %v3949
      %v3958 = vadd.f32 %v3946, %v3949
      %v3959 = vmax.f32 %v3951, 0.0
      %v3960 = vmax.f32 %v3952, 0.0
      %v3961 = vmax.f32 %v3953, 0.0
      %v3962 = vmax.f32 %v3954, 0.0
      %v3963 = vmax.f32 %v3955, 0.0
      %v3964 = vmax.f32 %v3956, 0.0
      %v3965 = vmax.f32 %v3957, 0.0
      %v3966 = vmax.f32 %v3958, 0.0
      %v3967 = vpack.c.bf16 %v3959, %v3959
      %v3968 = vpack.c.bf16 %v3960, %v3960
      %v3969 = vpack.c.bf16 %v3961, %v3961
      %v3970 = vpack.c.bf16 %v3962, %v3962
      %v3971 = vpack.c.bf16 %v3963, %v3963
      %v3972 = vpack.c.bf16 %v3964, %v3964
      %v3973 = vpack.c.bf16 %v3965, %v3965
      %v3974 = vpack.c.bf16 %v3966, %v3966
      %3975 = vst [vmem:[%s436] sm:$0xf] %v3967
      %3976 = vst [vmem:[%s436 + $0x4] sm:$0xf] %v3968
      %3977 = vst [vmem:[%s436 + $0x8] sm:$0xf] %v3969
      %3978 = vst [vmem:[%s436 + $0xc] sm:$0xf] %v3970
      %3979 = vst [vmem:[%s436 + $0x10] sm:$0xf] %v3971
      %3980 = vst [vmem:[%s436 + $0x14] sm:$0xf] %v3972
      %3981 = vst [vmem:[%s436 + $0x18] sm:$0xf] %v3973
      %3982 = vst [vmem:[%s436 + $0x1c] sm:$0xf] %v3974
      %v3983 = vadd.f32 %v3959, %v3960
      %v3984 = vadd.f32 %v3983, %v3961
      %v3985 = vadd.f32 %v3984, %v3962
      %v3986 = vadd.f32 %v3985, %v3963
      %v3987 = vadd.f32 %v3986, %v3964
      %v3988 = vadd.f32 %v3987, %v3965
      %v3989 = vadd.f32 %v3988, %v3966
      %v3990 = vrot.slane %v3989, 4
      %v3991 = vadd.f32 %v3989, %v3990
      %v3992 = vrot.slane %v3991, 2
      %v3993 = vadd.f32 %v3991, %v3992
      %v3994 = vrot.slane %v3993, 1
      %v3995 = vadd.f32 %v3993, %v3994
      %v3996 = vmul.f32 %v3959, %v3959
      %v3997 = vmul.f32 %v3960, %v3960
      %v3998 = vmul.f32 %v3961, %v3961
      %v3999 = vmul.f32 %v3962, %v3962
      %v4000 = vmul.f32 %v3963, %v3963
      %v4001 = vmul.f32 %v3964, %v3964
      %v4002 = vmul.f32 %v3965, %v3965
      %v4003 = vmul.f32 %v3966, %v3966
      %v4004 = vadd.f32 %v3996, %v3997
      %v4005 = vadd.f32 %v4004, %v3998
      %v4006 = vadd.f32 %v4005, %v3999
      %v4007 = vadd.f32 %v4006, %v4000
      %v4008 = vadd.f32 %v4007, %v4001
      %v4009 = vadd.f32 %v4008, %v4002
      %v4010 = vadd.f32 %v4009, %v4003
      %v4011 = vrot.slane %v4010, 4
      %v4012 = vadd.f32 %v4010, %v4011
      %v4013 = vrot.slane %v4012, 2
      %v4014 = vadd.f32 %v4012, %v4013
      %v4015 = vrot.slane %v4014, 1
      %v4016 = vadd.f32 %v4014, %v4015
      %vm4017 = vcmask 1040384
      %v4018 = vsel %vm4017, %v3995, %v4016
      %4019 = vst [vmem:[%s444] sm:$0x3] %v4018
      %p4020 = scmp.lt.s32.totalorder %s24, 1
      %s4021 = scalar_select %p4020, %s24, 1
      %p4022 = scmp.lt.s32.totalorder %s25, 7
      %s4023 = scalar_select %p4022, %s25, 7
      %s4024 = smul.addr %s4023, 8
      %s4025 = smul.addr %s4021, 64
      %s4026 = sadd.s32 %s4024, %s4025
      %s4027 = smul.addr %s4026, 4
      %s4028 = scalar_lea.vmem %s7, %s4027
      %p4029 = scmp.lt.s32.totalorder %s24, 1
      %s4030 = scalar_select %p4029, %s24, 1
      %p4031 = scmp.lt.s32.totalorder %s25, 7
      %s4032 = scalar_select %p4031, %s25, 7
      %s4033 = smul.addr %s4030, 8
      %s4034 = sadd.s32 %s4032, %s4033
      %s4035 = smul.addr %s4034, 2
      %s4036 = scalar_lea.vmem %s8, %s4035
      // Predicated region
      $region49: #{residual_block_forward.4} parent=47 // pred_check
        %p4037 = pneg %p224
      $region50: #{residual_block_forward.4} parent=47 // pred_check_branch
        %4039 = sbr.rel (%p4037) target = $region52
      $region51: #{residual_block_forward.4} parent=47 // pred_region
        _
      $region52: #{residual_block_forward.4} parent=47 // pred_fallthru
        _
      // Predicated region
      $region53: #{residual_block_forward.4} parent=47 // pred_check
        %p4040 = pneg %p252
      $region54: #{residual_block_forward.4} parent=47 // pred_check_branch
        %4042 = sbr.rel (%p4040) target = $region56
      $region55: #{residual_block_forward.4} parent=47 // pred_region
        _
      $region56: #{residual_block_forward.4} parent=47 // pred_fallthru
        _
    $region48: #{residual_block_forward.4} parent=5 // pred_fallthru
      _
    %p4043 = scmp.le.s32.totalorder 2, %s15
    // Predicated region
    $region57: #{residual_block_forward.4} parent=5 // pred_check
      %p4044 = pneg %p4043
    $region58: #{residual_block_forward.4} parent=5 // pred_check_branch
      %4046 = sbr.rel (%p4044) target = $region60
    $region59: #{residual_block_forward.4} parent=5 // pred_region
      %s4047 = ssub.s32 %s15, 2
      // Predicated region
      $region61: #{residual_block_forward.4} parent=59 // pred_check
        %p4048 = pneg %p230
      $region62: #{residual_block_forward.4} parent=59 // pred_check_branch
        %4050 = sbr.rel (%p4048) target = $region64
      $region63: #{residual_block_forward.4} parent=59 // pred_region
        %p4051 = scmp.lt.s32.totalorder %s26, 1
        %s4052 = scalar_select %p4051, %s26, 1
        %p4053 = scmp.lt.s32.totalorder %s27, 7
        %s4054 = scalar_select %p4053, %s27, 7
        %s4055 = smul.addr %s4054, 8
        %s4056 = smul.addr %s4052, 64
        %s4057 = sadd.s32 %s4055, %s4056
        %s4058 = smul.addr %s4057, 4
        %s4059 = scalar_lea.vmem %s7, %s4058
      $region64: #{residual_block_forward.4} parent=59 // pred_fallthru
        _
      // Predicated region
      $region65: #{residual_block_forward.4} parent=59 // pred_check
        %p4060 = pneg %p258
      $region66: #{residual_block_forward.4} parent=59 // pred_check_branch
        %4062 = sbr.rel (%p4060) target = $region68
      $region67: #{residual_block_forward.4} parent=59 // pred_region
        %p4063 = scmp.lt.s32.totalorder %s26, 1
        %s4064 = scalar_select %p4063, %s26, 1
        %p4065 = scmp.lt.s32.totalorder %s27, 7
        %s4066 = scalar_select %p4065, %s27, 7
        %s4067 = smul.addr %s4064, 8
        %s4068 = sadd.s32 %s4066, %s4067
        %s4069 = smul.addr %s4068, 2
        %s4070 = scalar_lea.vmem %s8, %s4069
      $region68: #{residual_block_forward.4} parent=59 // pred_fallthru
        _
    $region60: #{residual_block_forward.4} parent=5 // pred_fallthru
      _
  $region6: #{residual_block_forward.4} parent=0 // loop_footer
    %s19 = sadd.s32 1, %s15
  $region7: #{residual_block_forward.4} parent=0 // loop_footer_branch
    %14 = sbr.rel target = $region3
  $region8: #{residual_block_forward.4} parent=0 // loop_exit
    _

</llo_original>
